<compile_context>
chip_gen: v6e
topology: v6e:2x2x1
jax: 0.10.0
libtpu: 0.0.40
codegen_flags: <defaults>
</compile_context>

<pallas_src>
import jax
import jax.numpy as jnp
from jax.experimental import pallas as pl
from jax.experimental.pallas import tpu as pltpu

IN_FEATS = 28 * 28 * 1           # 784
IN_FEATS_PAD = 896               # 7 * 128  (lane-aligned contraction dim)
HIDDEN = 1024
N_BRANCH = 4
HIDDEN_ALL = N_BRANCH * HIDDEN   # 4096
OUT_FEATS = 10
OUT_PAD = 128                    # lane-dense output slab
HIDDEN_TILE = 1024               # weight-stream tile along the 4096 axis


def _round_up(x, m):
    return (x + m - 1) // m * m


def net_kernel(x_ref, w_all_ref, b_all_ref, w_neck_ref, b_neck_ref,
               o_ref, acc_ref):
    """One (batch_tile, hidden_tile) grid step.

    h_t  = relu(x @ w_all[:, t] + b_all[t])      # (BT, HT)   fp32
    acc += h_t @ w_neck[t, :]                    # (BT, 128)  fp32
    """
    k = pl.program_id(1)

    @pl.when(k == 0)
    def _():
        acc_ref[...] = jnp.zeros_like(acc_ref)

    h = jnp.dot(x_ref[...], w_all_ref[...],
                preferred_element_type=jnp.float32) + b_all_ref[...]
    h = jnp.maximum(h, 0.0)                      # ReLU
    # TODO(synk): Dropout(p=0.5) is identity at inference; no train-mode RNG.
    acc_ref[...] += jnp.dot(h.astype(jnp.bfloat16), w_neck_ref[...],
                            preferred_element_type=jnp.float32)

    @pl.when(k == pl.num_programs(1) - 1)
    def _():
        o_ref[...] = (acc_ref[...] + b_neck_ref[...]).astype(o_ref.dtype)


def net_forward(x, w_all, b_all, w_neck, b_neck):
    """x: (B, 28, 28, W) float32 -> (B, 10) float32.

    w_all:  (896, 4096)  bf16 (4 branch weights stacked, zero-padded K)
    b_all:  (1, 4096)    f32
    w_neck: (4096, 128)  bf16 (zero-padded N: 10 -> 128)
    b_neck: (1, 128)     f32
    """
    B = x.shape[0]
    x_flat = x[:, :, :, 0].reshape(B, IN_FEATS).astype(jnp.bfloat16)

    # Zero-pad K (784 -> 896) and batch up to a whole number of batch tiles.
    bt = min(256, _round_up(B, 16))
    b_pad = _round_up(B, bt)
    x_flat = jnp.pad(x_flat, ((0, b_pad - B), (0, IN_FEATS_PAD - IN_FEATS)))

    grid = (b_pad // bt, HIDDEN_ALL // HIDDEN_TILE)

    out = pl.pallas_call(
        net_kernel,
        out_shape=jax.ShapeDtypeStruct((b_pad, OUT_PAD), jnp.float32),
        grid_spec=pltpu.PrefetchScalarGridSpec(
            num_scalar_prefetch=0,
            grid=grid,
            in_specs=[
                pl.BlockSpec((bt, IN_FEATS_PAD), lambda b, k: (b, 0)),
                pl.BlockSpec((IN_FEATS_PAD, HIDDEN_TILE), lambda b, k: (0, k)),
                pl.BlockSpec((1, HIDDEN_TILE), lambda b, k: (0, k)),
                pl.BlockSpec((HIDDEN_TILE, OUT_PAD), lambda b, k: (k, 0)),
                pl.BlockSpec((1, OUT_PAD), lambda b, k: (0, 0)),
            ],
            out_specs=pl.BlockSpec((bt, OUT_PAD), lambda b, k: (b, 0)),
            scratch_shapes=[pltpu.VMEM((bt, OUT_PAD), jnp.float32)],
        ),
        compiler_params=pltpu.CompilerParams(
            dimension_semantics=("parallel", "arbitrary")),
    )(x_flat, w_all, b_all, w_neck, b_neck)

    return out[:B, :OUT_FEATS]


def init_params(key):
    """PyTorch-like uniform(-1/sqrt(fan_in), 1/sqrt(fan_in)) init, then
    stacked / padded / bf16-cast into the kernel's streaming layout."""
    keys = jax.random.split(key, 2 * N_BRANCH + 2)
    ws, bs = [], []
    bound1 = 1.0 / jnp.sqrt(jnp.float32(IN_FEATS))
    for i in range(N_BRANCH):
        w = jax.random.uniform(keys[2 * i], (IN_FEATS, HIDDEN),
                               jnp.float32, -bound1, bound1)
        b = jax.random.uniform(keys[2 * i + 1], (HIDDEN,),
                               jnp.float32, -bound1, bound1)
        ws.append(w)
        bs.append(b)
    # Stack the 4 branches along the output-feature axis (== torch.cat of the
    # four branch activations along dim=1), pad K 784 -> 896, cast to bf16.
    w_all = jnp.concatenate(ws, axis=1)                               # (784, 4096)
    w_all = jnp.pad(w_all, ((0, IN_FEATS_PAD - IN_FEATS), (0, 0)))    # (896, 4096)
    w_all = w_all.astype(jnp.bfloat16)
    b_all = jnp.concatenate(bs, axis=0).reshape(1, HIDDEN_ALL)        # f32

    bound2 = 1.0 / jnp.sqrt(jnp.float32(HIDDEN_ALL))
    w_neck = jax.random.uniform(keys[-2], (HIDDEN_ALL, OUT_FEATS),
                                jnp.float32, -bound2, bound2)
    w_neck = jnp.pad(w_neck, ((0, 0), (0, OUT_PAD - OUT_FEATS)))      # (4096, 128)
    w_neck = w_neck.astype(jnp.bfloat16)
    b_neck = jax.random.uniform(keys[-1], (OUT_FEATS,),
                                jnp.float32, -bound2, bound2)
    b_neck = jnp.pad(b_neck, (0, OUT_PAD - OUT_FEATS)).reshape(1, OUT_PAD)
    return w_all, b_all, w_neck, b_neck


if __name__ == "__main__":
    key = jax.random.PRNGKey(0)
    k_x, k_p = jax.random.split(key)

    B, W_LAST = 2, 2
    x = jax.random.normal(k_x, (B, 28, 28, W_LAST), jnp.float32)
    params = init_params(k_p)

    out = net_forward(x, *params)
    jax.block_until_ready(out)
    assert out.shape == (B, OUT_FEATS) and out.dtype == jnp.float32

    # Pure-JAX reference of the same bf16-input / fp32-accumulate math.
    w_all, b_all, w_neck, b_neck = params
    x_flat = x[:, :, :, 0].reshape(B, IN_FEATS).astype(jnp.bfloat16)
    h = jnp.maximum(
        jnp.dot(x_flat, w_all[:IN_FEATS],
                preferred_element_type=jnp.float32) + b_all, 0.0)
    ref = (jnp.dot(h.astype(jnp.bfloat16), w_neck,
                   preferred_element_type=jnp.float32) + b_neck)[:, :OUT_FEATS]
    assert jnp.allclose(out, ref, atol=2e-3, rtol=2e-3)

    print("KERNEL_OK")
</pallas_src>

<mosaic_0001>
module attributes {stable_mosaic.version = 11 : i64} {
  func.func @net_kernel(%arg0: i32, %arg1: i32, %arg2: memref<16x896xbf16, #tpu.memory_space<vmem>>, %arg3: memref<896x1024xbf16, #tpu.memory_space<vmem>>, %arg4: memref<1x1024xf32, #tpu.memory_space<vmem>>, %arg5: memref<1024x128xbf16, #tpu.memory_space<vmem>>, %arg6: memref<1x128xf32, #tpu.memory_space<vmem>>, %arg7: memref<16x128xf32, #tpu.memory_space<vmem>>, %arg8: memref<16x128xf32, #tpu.memory_space<vmem>>) attributes {dimension_semantics = [#tpu.dimension_semantics<parallel>, #tpu.dimension_semantics<arbitrary>], iteration_bounds = array<i64: 1, 4>, scalar_prefetch = 0 : i64, scratch_operands = 1 : i64, tpu.core_type = #tpu.core_type<tc>, window_params = [{transform_indices = @transform_0, window_bounds = array<i64: 16, 896>}, {transform_indices = @transform_1, window_bounds = array<i64: 896, 1024>}, {transform_indices = @transform_2, window_bounds = array<i64: 1, 1024>}, {transform_indices = @transform_3, window_bounds = array<i64: 1024, 128>}, {pipeline_mode = #tpu.pipeline_mode<synchronous>, transform_indices = @transform_4, window_bounds = array<i64: 1, 128>}, {transform_indices = @transform_5, window_bounds = array<i64: 16, 128>}]} {
    %c0_i32 = arith.constant 0 : i32
    %0 = arith.cmpi eq, %arg1, %c0_i32 : i32
    %1 = arith.extui %0 : i1 to i32
    %c0_i32_0 = arith.constant 0 : i32
    %2 = arith.cmpi ne, %1, %c0_i32_0 : i32
    scf.if %2 {
      %cst_15 = arith.constant 0.000000e+00 : f32
      %20 = vector.broadcast %cst_15 : f32 to vector<16x128xf32>
      %c0_16 = arith.constant 0 : index
      %c0_17 = arith.constant 0 : index
      %21 = vector.load %arg8[%c0_16, %c0_17] : memref<16x128xf32, #tpu.memory_space<vmem>>, vector<16x128xf32>
      tpu.vector_store %arg8[%c0_16, %c0_17], %20 {strides = array<i32>} : memref<16x128xf32, #tpu.memory_space<vmem>>, vector<16x128xf32>,
    } else {
    }
    %c0 = arith.constant 0 : index
    %c0_1 = arith.constant 0 : index
    %3 = vector.load %arg2[%c0, %c0_1] : memref<16x896xbf16, #tpu.memory_space<vmem>>, vector<16x896xbf16>
    %c0_2 = arith.constant 0 : index
    %c0_3 = arith.constant 0 : index
    %4 = vector.load %arg3[%c0_2, %c0_3] : memref<896x1024xbf16, #tpu.memory_space<vmem>>, vector<896x1024xbf16>
    %cst = arith.constant dense<0.000000e+00> : vector<16x1024xf32>
    %5 = tpu.matmul %3, %4, %cst {dimension_numbers = #tpu.dot_dimension_numbers<[1], [0], [0], [1], [0, 0, 1, 1], [], []>} : vector<16x896xbf16>, vector<896x1024xbf16>, vector<16x1024xf32> -> vector<16x1024xf32>
    %c0_4 = arith.constant 0 : index
    %c0_5 = arith.constant 0 : index
    %6 = vector.load %arg4[%c0_4, %c0_5] : memref<1x1024xf32, #tpu.memory_space<vmem>>, vector<1x1024xf32>
    %7 = vector.broadcast %6 : vector<1x1024xf32> to vector<16x1024xf32>
    %8 = arith.addf %5, %7 : vector<16x1024xf32>
    %cst_6 = arith.constant 0.000000e+00 : f32
    %9 = vector.broadcast %cst_6 : f32 to vector<16x1024xf32>
    %10 = arith.maximumf %8, %9 : vector<16x1024xf32>
    %c0_7 = arith.constant 0 : index
    %c0_8 = arith.constant 0 : index
    %11 = vector.load %arg8[%c0_7, %c0_8] : memref<16x128xf32, #tpu.memory_space<vmem>>, vector<16x128xf32>
    %12 = arith.truncf %10 : vector<16x1024xf32> to vector<16x1024xbf16>
    %c0_9 = arith.constant 0 : index
    %c0_10 = arith.constant 0 : index
    %13 = vector.load %arg5[%c0_9, %c0_10] : memref<1024x128xbf16, #tpu.memory_space<vmem>>, vector<1024x128xbf16>
    %cst_11 = arith.constant dense<0.000000e+00> : vector<16x128xf32>
    %14 = tpu.matmul %12, %13, %cst_11 {dimension_numbers = #tpu.dot_dimension_numbers<[1], [0], [0], [1], [0, 0, 1, 1], [], []>} : vector<16x1024xbf16>, vector<1024x128xbf16>, vector<16x128xf32> -> vector<16x128xf32>
    %15 = arith.addf %11, %14 : vector<16x128xf32>
    %c0_12 = arith.constant 0 : index
    %c0_13 = arith.constant 0 : index
    %16 = vector.load %arg8[%c0_12, %c0_13] : memref<16x128xf32, #tpu.memory_space<vmem>>, vector<16x128xf32>
    tpu.vector_store %arg8[%c0_12, %c0_13], %15 {strides = array<i32>} : memref<16x128xf32, #tpu.memory_space<vmem>>, vector<16x128xf32>,
    %c3_i32 = arith.constant 3 : i32
    %17 = arith.cmpi eq, %arg1, %c3_i32 : i32
    %18 = arith.extui %17 : i1 to i32
    %c0_i32_14 = arith.constant 0 : i32
    %19 = arith.cmpi ne, %18, %c0_i32_14 : i32
    scf.if %19 {
      %c0_15 = arith.constant 0 : index
      %c0_16 = arith.constant 0 : index
      %20 = vector.load %arg8[%c0_15, %c0_16] : memref<16x128xf32, #tpu.memory_space<vmem>>, vector<16x128xf32>
      %c0_17 = arith.constant 0 : index
      %c0_18 = arith.constant 0 : index
      %21 = vector.load %arg6[%c0_17, %c0_18] : memref<1x128xf32, #tpu.memory_space<vmem>>, vector<1x128xf32>
      %22 = vector.broadcast %21 : vector<1x128xf32> to vector<16x128xf32>
      %23 = arith.addf %20, %22 : vector<16x128xf32>
      %c0_19 = arith.constant 0 : index
      %c0_20 = arith.constant 0 : index
      %24 = vector.load %arg7[%c0_19, %c0_20] : memref<16x128xf32, #tpu.memory_space<vmem>>, vector<16x128xf32>
      tpu.vector_store %arg7[%c0_19, %c0_20], %23 {strides = array<i32>} : memref<16x128xf32, #tpu.memory_space<vmem>>, vector<16x128xf32>,
    } else {
    }
    return
  }
  func.func @transform_0(%arg0: i32, %arg1: i32) -> (i32, i32) {
    %c0_i32 = arith.constant 0 : i32
    %c0_i32_0 = arith.constant 0 : i32
    return %arg0, %c0_i32 : i32, i32
  }
  func.func @transform_1(%arg0: i32, %arg1: i32) -> (i32, i32) {
    %c0_i32 = arith.constant 0 : i32
    %c0_i32_0 = arith.constant 0 : i32
    return %c0_i32, %arg1 : i32, i32
  }
  func.func @transform_2(%arg0: i32, %arg1: i32) -> (i32, i32) {
    %c0_i32 = arith.constant 0 : i32
    %c0_i32_0 = arith.constant 0 : i32
    return %c0_i32, %arg1 : i32, i32
  }
  func.func @transform_3(%arg0: i32, %arg1: i32) -> (i32, i32) {
    %c0_i32 = arith.constant 0 : i32
    %c0_i32_0 = arith.constant 0 : i32
    return %arg1, %c0_i32 : i32, i32
  }
  func.func @transform_4(%arg0: i32, %arg1: i32) -> (i32, i32) {
    %c0_i32 = arith.constant 0 : i32
    %c0_i32_0 = arith.constant 0 : i32
    %c0_i32_1 = arith.constant 0 : i32
    return %c0_i32, %c0_i32_0 : i32, i32
  }
  func.func @transform_5(%arg0: i32, %arg1: i32) -> (i32, i32) {
    %c0_i32 = arith.constant 0 : i32
    %c0_i32_0 = arith.constant 0 : i32
    return %arg0, %c0_i32 : i32, i32
  }
}

</mosaic_0001>

<llo_original>
// kernel: tpu_custom_call.1
$region0: #{tpu_custom_call.1}
  #allocation0 [shape = 'u32[]', space=smem, size = 0x4, offset = 0x4, fixed_abs, tag = 'smem constant byte address 0x4 - core index']
  #allocation1 [shape = 'u32[144,128]{1,0:T(1,128)}', space=vmem, size = 0x12000, scoped, tag = 'internal scratch']
  #allocation2 [shape = 'f32[16,128]{1,0:T(8,128)}', space=vmem, size = 0x2000, scoped, tag = 'scratch operand']
  %s0 = inlined_call_operand.hbm [shape: bf16[16,896], index: 0, kind: input, shape index: {}]
  %s1 = inlined_call_operand.hbm [shape: bf16[896,4096], index: 1, kind: input, shape index: {}]
  %s2 = inlined_call_operand.hbm [shape: f32[1,4096], index: 2, kind: input, shape index: {}]
  %s3 = inlined_call_operand.hbm [shape: bf16[4096,128], index: 3, kind: input, shape index: {}]
  %s4 = inlined_call_operand.hbm [shape: f32[1,128], index: 4, kind: input, shape index: {}]
  %s5 = inlined_call_operand.hbm [shape: f32[16,128], index: 5, kind: output, shape index: {}]
  %s6 = sld [smem:[#allocation0]]
  $region81: #{tpu_custom_call.1} parent=0
    _
  %s8 = ssub.s32 1, %s6
  %s9 = scalar_select 0, %s8, %s6
  $region1: #{tpu_custom_call.1} parent=0
    #allocation3 [shape = 'u8[28672]{0}', space=vmem, size = 0x7000, scoped, tag = 'input window, operand 0, single buffered']
    #allocation4 [shape = 's32[2]{0}', space=sflag, size = 0x8, scoped, tag = 'scoped memory for tpu_custom_call.1']
    #allocation5 [shape = 's32[2]{0}', space=sflag, size = 0x8, scoped, tag = 'scoped memory for tpu_custom_call.1']
    #allocation6 [shape = 'u8[3670016]{0}', space=vmem, size = 0x380000, scoped, tag = 'input window, operand 1']
    #allocation7 [shape = 's32[2]{0}', space=sflag, size = 0x8, scoped, tag = 'scoped memory for tpu_custom_call.1']
    #allocation8 [shape = 'u8[8192]{0}', space=vmem, size = 0x2000, scoped, tag = 'input window, operand 2']
    #allocation9 [shape = 'u8[524288]{0}', space=vmem, size = 0x80000, scoped, tag = 'input window, operand 3']
    #allocation10 [shape = 's32[2]{0}', space=sflag, size = 0x8, scoped, tag = 'scoped memory for tpu_custom_call.1']
    #allocation11 [shape = 'u8[512]{0}', space=vmem, size = 0x400, scoped, tag = 'input window, operand 4, single buffered']
    #allocation12 [shape = 'u8[8192]{0}', space=vmem, size = 0x2000, scoped, tag = 'output window, operand 0, single buffered']
    %10 = vsyncpa [#allocation4], 0
    %11 = vsyncpa [#allocation7], 0
    %s12 = scalar_lea.sflag [#allocation7], 1
    %13 = vsyncpa %s12, 0
    %14 = vsyncpa [#allocation10], 0
    %s15 = scalar_lea.sflag [#allocation10], 1
    %16 = vsyncpa %s15, 0
    %17 = vsyncpa [#allocation5], 0
    loop: start=0, step=1, limit=6
    $region2: #{tpu_custom_call.1} parent=1 // loop_pre_header
      _
    $region3: #{tpu_custom_call.1} parent=1 // loop_header
      %s19 = sphi 0, %s23
      %p20 = scmp.ge.s32.totalorder %s19, 6
      %s26 = sphi 0, %s38
      %s27 = sphi 0, %s34
      %s28 = sphi 0, %s26
      %s29 = sphi 0, %s27
      %s30 = sphi 0, %s28
      %s31 = sphi 0, %s29
      %s41 = sphi 0, %s43
      %s44 = sphi 0, %s41
      %s45 = sphi 0, %s44
      %s61 = sphi 0, %s45
      %s67 = sphi 0, %s69
      %s70 = sphi 0, %s67
      %s71 = sphi 0, %s70
      %s87 = sphi 0, %s71
      %s93 = sphi 0, %s95
      %s96 = sphi 0, %s93
      %s97 = sphi 0, %s96
      %s113 = sphi 0, %s97
      %s119 = sphi 0, %s121
      %s122 = sphi 0, %s119
      %s123 = sphi 0, %s122
      %s139 = sphi 0, %s123
      %s143 = sphi 0, %s143
      %s145 = sphi 0, %s143
      %s146 = sphi 0, %s145
      %s160 = sphi 0, %s146
      %s166 = sphi 0, %s168
      %s169 = sphi 0, %s166
      %s170 = sphi 0, %s169
      %s186 = sphi 0, %s170
    $region4: #{tpu_custom_call.1} parent=1 // loop_header_branch
      %22 = sbr.rel (%p20) target = $region8
    $region5: #{tpu_custom_call.1} parent=1 // loop_body
      %s24 = ssub.s32 %s19, 1
      %s25 = ssub.s32 %s19, 2
      %s32 = sadd.s32 1, %s27
      %p33 = scmp.ge.s32.totalorder %s32, 4
      %s34 = scalar_select %p33, 0, %s32
      %s35 = sadd.s32 1, %s26
      %s36 = scalar_select %p33, %s35, %s26
      %p37 = scmp.ge.s32.totalorder %s36, 1
      %s38 = scalar_select %p37, 0, %s36
      %s39 = ssub.s32 %s26, %s38
      %p40 = scmp.eq.s32.totalorder %s39, 0
      %s42 = sadd.s32 %s41, 1
      %s43 = scalar_select %p40, %s41, %s42
      %p46 = pneg %p40
      %p47 = scmp.eq.s32.totalorder %s19, 3
      %p48 = por %p46, %p47
      %p49 = scmp.ne.s32.totalorder %s41, %s44
      %p50 = scmp.eq.s32.totalorder %s19, 0
      %p51 = por %p49, %p50
      %p52 = scmp.ne.s32.totalorder %s41, %s44
      %p53 = scmp.eq.s32.totalorder %s24, 3
      %p54 = por %p52, %p53
      %p55 = scmp.ne.s32.totalorder %s44, %s45
      %p56 = scmp.eq.s32.totalorder %s24, 0
      %p57 = por %p55, %p56
      %p58 = scmp.ne.s32.totalorder %s44, %s45
      %p59 = scmp.eq.s32.totalorder %s25, 3
      %p60 = por %p58, %p59
      %p62 = scmp.ne.s32.totalorder %s45, %s61
      %p63 = scmp.eq.s32.totalorder %s25, 0
      %p64 = por %p62, %p63
      %s65 = ssub.s32 %s27, %s34
      %p66 = scmp.eq.s32.totalorder %s65, 0
      %s68 = sadd.s32 %s67, 1
      %s69 = scalar_select %p66, %s67, %s68
      %p72 = pneg %p66
      %p73 = scmp.eq.s32.totalorder %s19, 3
      %p74 = por %p72, %p73
      %p75 = scmp.ne.s32.totalorder %s67, %s70
      %p76 = scmp.eq.s32.totalorder %s19, 0
      %p77 = por %p75, %p76
      %p78 = scmp.ne.s32.totalorder %s67, %s70
      %p79 = scmp.eq.s32.totalorder %s24, 3
      %p80 = por %p78, %p79
      %p81 = scmp.ne.s32.totalorder %s70, %s71
      %p82 = scmp.eq.s32.totalorder %s24, 0
      %p83 = por %p81, %p82
      %p84 = scmp.ne.s32.totalorder %s70, %s71
      %p85 = scmp.eq.s32.totalorder %s25, 3
      %p86 = por %p84, %p85
      %p88 = scmp.ne.s32.totalorder %s71, %s87
      %p89 = scmp.eq.s32.totalorder %s25, 0
      %p90 = por %p88, %p89
      %s91 = ssub.s32 %s27, %s34
      %p92 = scmp.eq.s32.totalorder %s91, 0
      %s94 = sadd.s32 %s93, 1
      %s95 = scalar_select %p92, %s93, %s94
      %p98 = pneg %p92
      %p99 = scmp.eq.s32.totalorder %s19, 3
      %p100 = por %p98, %p99
      %p101 = scmp.ne.s32.totalorder %s93, %s96
      %p102 = scmp.eq.s32.totalorder %s19, 0
      %p103 = por %p101, %p102
      %p104 = scmp.ne.s32.totalorder %s93, %s96
      %p105 = scmp.eq.s32.totalorder %s24, 3
      %p106 = por %p104, %p105
      %p107 = scmp.ne.s32.totalorder %s96, %s97
      %p108 = scmp.eq.s32.totalorder %s24, 0
      %p109 = por %p107, %p108
      %p110 = scmp.ne.s32.totalorder %s96, %s97
      %p111 = scmp.eq.s32.totalorder %s25, 3
      %p112 = por %p110, %p111
      %p114 = scmp.ne.s32.totalorder %s97, %s113
      %p115 = scmp.eq.s32.totalorder %s25, 0
      %p116 = por %p114, %p115
      %s117 = ssub.s32 %s27, %s34
      %p118 = scmp.eq.s32.totalorder %s117, 0
      %s120 = sadd.s32 %s119, 1
      %s121 = scalar_select %p118, %s119, %s120
      %p124 = pneg %p118
      %p125 = scmp.eq.s32.totalorder %s19, 3
      %p126 = por %p124, %p125
      %p127 = scmp.ne.s32.totalorder %s119, %s122
      %p128 = scmp.eq.s32.totalorder %s19, 0
      %p129 = por %p127, %p128
      %p130 = scmp.ne.s32.totalorder %s119, %s122
      %p131 = scmp.eq.s32.totalorder %s24, 3
      %p132 = por %p130, %p131
      %p133 = scmp.ne.s32.totalorder %s122, %s123
      %p134 = scmp.eq.s32.totalorder %s24, 0
      %p135 = por %p133, %p134
      %p136 = scmp.ne.s32.totalorder %s122, %s123
      %p137 = scmp.eq.s32.totalorder %s25, 3
      %p138 = por %p136, %p137
      %p140 = scmp.ne.s32.totalorder %s123, %s139
      %p141 = scmp.eq.s32.totalorder %s25, 0
      %p142 = por %p140, %p141
      %s144 = sadd.s32 %s143, 1
      %p147 = scmp.eq.s32.totalorder %s19, 3
      %p148 = scmp.ne.s32.totalorder %s143, %s145
      %p149 = scmp.eq.s32.totalorder %s19, 0
      %p150 = por %p148, %p149
      %p151 = scmp.ne.s32.totalorder %s143, %s145
      %p152 = scmp.eq.s32.totalorder %s24, 3
      %p153 = por %p151, %p152
      %p154 = scmp.ne.s32.totalorder %s145, %s146
      %p155 = scmp.eq.s32.totalorder %s24, 0
      %p156 = por %p154, %p155
      %p157 = scmp.ne.s32.totalorder %s145, %s146
      %p158 = scmp.eq.s32.totalorder %s25, 3
      %p159 = por %p157, %p158
      %p161 = scmp.ne.s32.totalorder %s146, %s160
      %p162 = scmp.eq.s32.totalorder %s25, 0
      %p163 = por %p161, %p162
      %s164 = ssub.s32 %s26, %s38
      %p165 = scmp.eq.s32.totalorder %s164, 0
      %s167 = sadd.s32 %s166, 1
      %s168 = scalar_select %p165, %s166, %s167
      %p171 = pneg %p165
      %p172 = scmp.eq.s32.totalorder %s19, 3
      %p173 = por %p171, %p172
      %p174 = scmp.ne.s32.totalorder %s166, %s169
      %p175 = scmp.eq.s32.totalorder %s19, 0
      %p176 = por %p174, %p175
      %p177 = scmp.ne.s32.totalorder %s166, %s169
      %p178 = scmp.eq.s32.totalorder %s24, 3
      %p179 = por %p177, %p178
      %p180 = scmp.ne.s32.totalorder %s169, %s170
      %p181 = scmp.eq.s32.totalorder %s24, 0
      %p182 = por %p180, %p181
      %p183 = scmp.ne.s32.totalorder %s169, %s170
      %p184 = scmp.eq.s32.totalorder %s25, 3
      %p185 = por %p183, %p184
      %p187 = scmp.ne.s32.totalorder %s170, %s186
      %p188 = scmp.eq.s32.totalorder %s25, 0
      %p189 = por %p187, %p188
      %p190 = scmp.le.s32.totalorder 1, %s19
      %p191 = scmp.lt.s32.totalorder %s19, 5
      %p192 = pnand %p190, %p191
      %p193 = pneg %p192
      // Predicated region
      $region9: #{tpu_custom_call.1} parent=5 // pred_check
        _
      $region10: #{tpu_custom_call.1} parent=5 // pred_check_branch
        %195 = sbr.rel (%p192) target = $region12
      $region11: #{tpu_custom_call.1} parent=5 // pred_region
        %s196 = ssub.s32 %s19, 1
        // Predicated region
        $region13: #{tpu_custom_call.1} parent=11 // pred_check
          %p197 = pneg %p57
        $region14: #{tpu_custom_call.1} parent=11 // pred_check_branch
          %199 = sbr.rel (%p197) target = $region16
        $region15: #{tpu_custom_call.1} parent=11 // pred_region
          %s200 = smul.u32 2, %s28
          %s202 = ssub.s32 896, 896
          %203 = vsyncadd [#allocation4], %s202
          %s204 = smul.addr %s200, 7
          %s205 = smul.addr %s204, 64
          %s206 = scalar_lea.hbm %s0, %s205
          %s207 = sshll.u32 [#allocation3], 4
          %s208 = int_to_ptr.vmem [resolvable:$true] %s207
          %213 = dma.hbm_to_vmem [thread:$0]  %s206, 896, %s208, [#allocation4], 448, 448, 28
        $region16: #{tpu_custom_call.1} parent=11 // pred_fallthru
          _
        // Predicated region
        $region17: #{tpu_custom_call.1} parent=11 // pred_check
          %p214 = pneg %p156
        $region18: #{tpu_custom_call.1} parent=11 // pred_check_branch
          %216 = sbr.rel (%p214) target = $region20
        $region19: #{tpu_custom_call.1} parent=11 // pred_region
          %s218 = ssub.s32 16, 16
          %219 = vsyncadd [#allocation10], %s218
          %s221 = sshll.u32 [#allocation11], 4
          %s222 = int_to_ptr.vmem [resolvable:$true] %s221
          %224 = dma.hbm_to_vmem [thread:$0]  %s4, 16, %s222, [#allocation10]
        $region20: #{tpu_custom_call.1} parent=11 // pred_fallthru
          _
      $region12: #{tpu_custom_call.1} parent=5 // pred_fallthru
        _
      %p225 = scmp.lt.s32.totalorder %s19, 4
      // Predicated region
      $region21: #{tpu_custom_call.1} parent=5 // pred_check
        %p226 = pneg %p225
      $region22: #{tpu_custom_call.1} parent=5 // pred_check_branch
        %228 = sbr.rel (%p226) target = $region24
      $region23: #{tpu_custom_call.1} parent=5 // pred_region
        // Predicated region
        $region25: #{tpu_custom_call.1} parent=23 // pred_check
          %p229 = pneg %p77
        $region26: #{tpu_custom_call.1} parent=23 // pred_check_branch
          %231 = sbr.rel (%p229) target = $region28
        $region27: #{tpu_custom_call.1} parent=23 // pred_region
          %s232 = sand.u32 %s19, 1
          %s233 = scalar_lea.sflag [#allocation7], %s232
          %s234 = sand.u32 %s67, 1
          %s235 = smul.addr %s234, 3584
          %s236 = scalar_lea.vmem [#allocation6], %s235
          %s237 = smul.u32 8, %s27
          %s239 = ssub.s32 57344, 57344
          %240 = vsyncadd %s233, %s239
          %s241 = smul.addr %s237, 64
          %s242 = scalar_lea.hbm %s1, %s241
          %s243 = sshll.u32 %s236, 4
          %s244 = int_to_ptr.vmem [resolvable:$true] %s243
          %249 = dma.hbm_to_vmem [thread:$0]  %s242, 57344, %s244, %s233, 2048, 512, 32
        $region28: #{tpu_custom_call.1} parent=23 // pred_fallthru
          _
        // Predicated region
        $region29: #{tpu_custom_call.1} parent=23 // pred_check
          %p250 = pneg %p103
        $region30: #{tpu_custom_call.1} parent=23 // pred_check_branch
          %252 = sbr.rel (%p250) target = $region32
        $region31: #{tpu_custom_call.1} parent=23 // pred_region
          %s253 = sand.u32 %s19, 1
          %s254 = scalar_lea.sflag [#allocation7], %s253
          %s255 = sand.u32 %s93, 1
          %s256 = smul.addr %s255, 8
          %s257 = scalar_lea.vmem [#allocation8], %s256
          %s258 = smul.u32 8, %s27
          %s260 = ssub.s32 128, 128
          %261 = vsyncadd %s254, %s260
          %s262 = smul.addr %s258, 16
          %s263 = scalar_lea.hbm %s2, %s262
          %s265 = sshll.u32 %s257, 4
          %s266 = int_to_ptr.vmem [resolvable:$true] %s265
          %268 = dma.hbm_to_vmem [thread:$0]  %s263, 128, %s266, %s254
        $region32: #{tpu_custom_call.1} parent=23 // pred_fallthru
          _
        // Predicated region
        $region33: #{tpu_custom_call.1} parent=23 // pred_check
          %p269 = pneg %p129
        $region34: #{tpu_custom_call.1} parent=23 // pred_check_branch
          %271 = sbr.rel (%p269) target = $region36
        $region35: #{tpu_custom_call.1} parent=23 // pred_region
          %s272 = sand.u32 %s19, 1
          %s273 = scalar_lea.sflag [#allocation10], %s272
          %s274 = sand.u32 %s119, 1
          %s275 = smul.addr %s274, 512
          %s276 = scalar_lea.vmem [#allocation9], %s275
          %s277 = smul.u32 128, %s27
          %s279 = ssub.s32 8192, 8192
          %280 = vsyncadd %s273, %s279
          %s281 = smul.addr %s277, 64
          %s282 = scalar_lea.hbm %s3, %s281
          %s283 = sshll.u32 %s276, 4
          %s284 = int_to_ptr.vmem [resolvable:$true] %s283
          %289 = dma.hbm_to_vmem [thread:$0]  %s282, 8192, %s284, %s273, 64, 64, 4
        $region36: #{tpu_custom_call.1} parent=23 // pred_fallthru
          _
      $region24: #{tpu_custom_call.1} parent=5 // pred_fallthru
        _
      %p290 = scmp.le.s32.totalorder 1, %s19
      %p291 = scmp.lt.s32.totalorder %s19, 5
      %p292 = pnand %p290, %p291
      %p293 = pneg %p292
      // Predicated region
      $region37: #{tpu_custom_call.1} parent=5 // pred_check
        _
      $region38: #{tpu_custom_call.1} parent=5 // pred_check_branch
        %295 = sbr.rel (%p292) target = $region40
      $region39: #{tpu_custom_call.1} parent=5 // pred_region
        %s296 = ssub.s32 %s19, 1
        // Predicated region
        $region41: #{tpu_custom_call.1} parent=39 // pred_check
          %p297 = pneg %p57
        $region42: #{tpu_custom_call.1} parent=39 // pred_check_branch
          %299 = sbr.rel (%p297) target = $region44
        $region43: #{tpu_custom_call.1} parent=39 // pred_region
          %300 = dma.done [#allocation4], 896
        $region44: #{tpu_custom_call.1} parent=39 // pred_fallthru
          _
        %s301 = sand.u32 %s24, 1
        %s302 = scalar_lea.sflag [#allocation7], %s301
        %s303 = sand.u32 %s70, 1
        %s304 = smul.addr %s303, 3584
        %s305 = scalar_lea.vmem [#allocation6], %s304
        // Predicated region
        $region45: #{tpu_custom_call.1} parent=39 // pred_check
          %p306 = pneg %p83
        $region46: #{tpu_custom_call.1} parent=39 // pred_check_branch
          %308 = sbr.rel (%p306) target = $region48
        $region47: #{tpu_custom_call.1} parent=39 // pred_region
          %309 = dma.done %s302, 57344
        $region48: #{tpu_custom_call.1} parent=39 // pred_fallthru
          _
        %s310 = sand.u32 %s24, 1
        %s311 = scalar_lea.sflag [#allocation7], %s310
        %s312 = sand.u32 %s96, 1
        %s313 = smul.addr %s312, 8
        %s314 = scalar_lea.vmem [#allocation8], %s313
        // Predicated region
        $region49: #{tpu_custom_call.1} parent=39 // pred_check
          %p315 = pneg %p109
        $region50: #{tpu_custom_call.1} parent=39 // pred_check_branch
          %317 = sbr.rel (%p315) target = $region52
        $region51: #{tpu_custom_call.1} parent=39 // pred_region
          %318 = dma.done %s311, 128
        $region52: #{tpu_custom_call.1} parent=39 // pred_fallthru
          _
        %s319 = sand.u32 %s24, 1
        %s320 = scalar_lea.sflag [#allocation10], %s319
        %s321 = sand.u32 %s122, 1
        %s322 = smul.addr %s321, 512
        %s323 = scalar_lea.vmem [#allocation9], %s322
        // Predicated region
        $region53: #{tpu_custom_call.1} parent=39 // pred_check
          %p324 = pneg %p135
        $region54: #{tpu_custom_call.1} parent=39 // pred_check_branch
          %326 = sbr.rel (%p324) target = $region56
        $region55: #{tpu_custom_call.1} parent=39 // pred_region
          %327 = dma.done %s320, 8192
        $region56: #{tpu_custom_call.1} parent=39 // pred_fallthru
          _
        // Predicated region
        $region57: #{tpu_custom_call.1} parent=39 // pred_check
          %p328 = pneg %p156
        $region58: #{tpu_custom_call.1} parent=39 // pred_check_branch
          %330 = sbr.rel (%p328) target = $region60
        $region59: #{tpu_custom_call.1} parent=39 // pred_region
          %331 = dma.done [#allocation10], 16
        $region60: #{tpu_custom_call.1} parent=39 // pred_fallthru
          _
        %p332 = pneg %p57
        %p333 = pneg %p54
        %s334 = sand.u32 %s24, 1
        %s335 = scalar_lea.sflag [#allocation7], %s334
        %s336 = sand.u32 %s70, 1
        %s337 = smul.addr %s336, 3584
        %s338 = scalar_lea.vmem [#allocation6], %s337
        %p339 = pneg %p83
        %p340 = pneg %p80
        %s341 = sand.u32 %s24, 1
        %s342 = scalar_lea.sflag [#allocation7], %s341
        %s343 = sand.u32 %s96, 1
        %s344 = smul.addr %s343, 8
        %s345 = scalar_lea.vmem [#allocation8], %s344
        %p346 = pneg %p109
        %p347 = pneg %p106
        %s348 = sand.u32 %s24, 1
        %s349 = scalar_lea.sflag [#allocation10], %s348
        %s350 = sand.u32 %s122, 1
        %s351 = smul.addr %s350, 512
        %s352 = scalar_lea.vmem [#allocation9], %s351
        %p353 = pneg %p135
        %p354 = pneg %p132
        %p355 = pneg %p156
        %p356 = pneg %p153
        %p357 = pneg %p182
        %p358 = pneg %p179
        %s359 = smul.u32 2, %s28
        %s360 = smul.u32 8, %s29
        %s361 = smul.u32 8, %s29
        %s362 = smul.u32 128, %s29
        %s363 = smul.u32 2, %s28
        %p365 = scmp.eq.s32.totalorder %s29, 0
        // Predicated region
        $region61: #{tpu_custom_call.1} parent=39 // pred_check
          %p366 = pneg %p365
        $region62: #{tpu_custom_call.1} parent=39 // pred_check_branch
          %368 = sbr.rel (%p366) target = $region64
        $region63: #{tpu_custom_call.1} parent=39 // pred_region
          %369 = vst [vmem:[#allocation2] sm:$0xff] 0.0
          %370 = vst [vmem:[#allocation2 + $0x8] sm:$0xff] 0.0
        $region64: #{tpu_custom_call.1} parent=39 // pred_fallthru
          _
        %v371 = vld [vmem:[#allocation3] sm:$0xff]
        %v372 = vld [vmem:[#allocation3 + $0x8] sm:$0xff]
        %v373 = vld [vmem:[#allocation3 + $0x10] sm:$0xff]
        %v374 = vld [vmem:[#allocation3 + $0x18] sm:$0xf]
        %v375 = vld [vmem:[#allocation3 + $0x1c] sm:$0xff]
        %v376 = vld [vmem:[#allocation3 + $0x24] sm:$0xff]
        %v377 = vld [vmem:[#allocation3 + $0x2c] sm:$0xff]
        %v378 = vld [vmem:[#allocation3 + $0x34] sm:$0xf]
        %v379 = vld [vmem:[%s305] sm:$0xff]
        %v380 = vld [vmem:[%s305 + $0x8] sm:$0xff]
        %v381 = vld [vmem:[%s305 + $0x10] sm:$0xff]
        %v382 = vld [vmem:[%s305 + $0x18] sm:$0xff]
        %v383 = vld [vmem:[%s305 + $0x20] sm:$0xff]
        %v384 = vld [vmem:[%s305 + $0x28] sm:$0xff]
        %v385 = vld [vmem:[%s305 + $0x30] sm:$0xff]
        %v386 = vld [vmem:[%s305 + $0x38] sm:$0xff]
        %v387 = vld [vmem:[%s305 + $0x40] sm:$0xff]
        %v388 = vld [vmem:[%s305 + $0x48] sm:$0xff]
        %v389 = vld [vmem:[%s305 + $0x50] sm:$0xff]
        %v390 = vld [vmem:[%s305 + $0x58] sm:$0xff]
        %v391 = vld [vmem:[%s305 + $0x60] sm:$0xff]
        %v392 = vld [vmem:[%s305 + $0x68] sm:$0xff]
        %v393 = vld [vmem:[%s305 + $0x70] sm:$0xff]
        %v394 = vld [vmem:[%s305 + $0x78] sm:$0xff]
        %v395 = vld [vmem:[%s305 + $0x80] sm:$0xff]
        %v396 = vld [vmem:[%s305 + $0x88] sm:$0xff]
        %v397 = vld [vmem:[%s305 + $0x90] sm:$0xff]
        %v398 = vld [vmem:[%s305 + $0x98] sm:$0xff]
        %v399 = vld [vmem:[%s305 + $0xa0] sm:$0xff]
        %v400 = vld [vmem:[%s305 + $0xa8] sm:$0xff]
        %v401 = vld [vmem:[%s305 + $0xb0] sm:$0xff]
        %v402 = vld [vmem:[%s305 + $0xb8] sm:$0xff]
        %v403 = vld [vmem:[%s305 + $0xc0] sm:$0xff]
        %v404 = vld [vmem:[%s305 + $0xc8] sm:$0xff]
        %v405 = vld [vmem:[%s305 + $0xd0] sm:$0xff]
        %v406 = vld [vmem:[%s305 + $0xd8] sm:$0xff]
        %v407 = vld [vmem:[%s305 + $0xe0] sm:$0xff]
        %v408 = vld [vmem:[%s305 + $0xe8] sm:$0xff]
        %v409 = vld [vmem:[%s305 + $0xf0] sm:$0xff]
        %v410 = vld [vmem:[%s305 + $0xf8] sm:$0xff]
        %v411 = vld [vmem:[%s305 + $0x100] sm:$0xff]
        %v412 = vld [vmem:[%s305 + $0x108] sm:$0xff]
        %v413 = vld [vmem:[%s305 + $0x110] sm:$0xff]
        %v414 = vld [vmem:[%s305 + $0x118] sm:$0xff]
        %v415 = vld [vmem:[%s305 + $0x120] sm:$0xff]
        %v416 = vld [vmem:[%s305 + $0x128] sm:$0xff]
        %v417 = vld [vmem:[%s305 + $0x130] sm:$0xff]
        %v418 = vld [vmem:[%s305 + $0x138] sm:$0xff]
        %v419 = vld [vmem:[%s305 + $0x140] sm:$0xff]
        %v420 = vld [vmem:[%s305 + $0x148] sm:$0xff]
        %v421 = vld [vmem:[%s305 + $0x150] sm:$0xff]
        %v422 = vld [vmem:[%s305 + $0x158] sm:$0xff]
        %v423 = vld [vmem:[%s305 + $0x160] sm:$0xff]
        %v424 = vld [vmem:[%s305 + $0x168] sm:$0xff]
        %v425 = vld [vmem:[%s305 + $0x170] sm:$0xff]
        %v426 = vld [vmem:[%s305 + $0x178] sm:$0xff]
        %v427 = vld [vmem:[%s305 + $0x180] sm:$0xff]
        %v428 = vld [vmem:[%s305 + $0x188] sm:$0xff]
        %v429 = vld [vmem:[%s305 + $0x190] sm:$0xff]
        %v430 = vld [vmem:[%s305 + $0x198] sm:$0xff]
        %v431 = vld [vmem:[%s305 + $0x1a0] sm:$0xff]
        %v432 = vld [vmem:[%s305 + $0x1a8] sm:$0xff]
        %v433 = vld [vmem:[%s305 + $0x1b0] sm:$0xff]
        %v434 = vld [vmem:[%s305 + $0x1b8] sm:$0xff]
        %v435 = vld [vmem:[%s305 + $0x1c0] sm:$0xff]
        %v436 = vld [vmem:[%s305 + $0x1c8] sm:$0xff]
        %v437 = vld [vmem:[%s305 + $0x1d0] sm:$0xff]
        %v438 = vld [vmem:[%s305 + $0x1d8] sm:$0xff]
        %v439 = vld [vmem:[%s305 + $0x1e0] sm:$0xff]
        %v440 = vld [vmem:[%s305 + $0x1e8] sm:$0xff]
        %v441 = vld [vmem:[%s305 + $0x1f0] sm:$0xff]
        %v442 = vld [vmem:[%s305 + $0x1f8] sm:$0xff]
        %v443 = vld [vmem:[%s305 + $0x200] sm:$0xff]
        %v444 = vld [vmem:[%s305 + $0x208] sm:$0xff]
        %v445 = vld [vmem:[%s305 + $0x210] sm:$0xff]
        %v446 = vld [vmem:[%s305 + $0x218] sm:$0xff]
        %v447 = vld [vmem:[%s305 + $0x220] sm:$0xff]
        %v448 = vld [vmem:[%s305 + $0x228] sm:$0xff]
        %v449 = vld [vmem:[%s305 + $0x230] sm:$0xff]
        %v450 = vld [vmem:[%s305 + $0x238] sm:$0xff]
        %v451 = vld [vmem:[%s305 + $0x240] sm:$0xff]
        %v452 = vld [vmem:[%s305 + $0x248] sm:$0xff]
        %v453 = vld [vmem:[%s305 + $0x250] sm:$0xff]
        %v454 = vld [vmem:[%s305 + $0x258] sm:$0xff]
        %v455 = vld [vmem:[%s305 + $0x260] sm:$0xff]
        %v456 = vld [vmem:[%s305 + $0x268] sm:$0xff]
        %v457 = vld [vmem:[%s305 + $0x270] sm:$0xff]
        %v458 = vld [vmem:[%s305 + $0x278] sm:$0xff]
        %v459 = vld [vmem:[%s305 + $0x280] sm:$0xff]
        %v460 = vld [vmem:[%s305 + $0x288] sm:$0xff]
        %v461 = vld [vmem:[%s305 + $0x290] sm:$0xff]
        %v462 = vld [vmem:[%s305 + $0x298] sm:$0xff]
        %v463 = vld [vmem:[%s305 + $0x2a0] sm:$0xff]
        %v464 = vld [vmem:[%s305 + $0x2a8] sm:$0xff]
        %v465 = vld [vmem:[%s305 + $0x2b0] sm:$0xff]
        %v466 = vld [vmem:[%s305 + $0x2b8] sm:$0xff]
        %v467 = vld [vmem:[%s305 + $0x2c0] sm:$0xff]
        %v468 = vld [vmem:[%s305 + $0x2c8] sm:$0xff]
        %v469 = vld [vmem:[%s305 + $0x2d0] sm:$0xff]
        %v470 = vld [vmem:[%s305 + $0x2d8] sm:$0xff]
        %v471 = vld [vmem:[%s305 + $0x2e0] sm:$0xff]
        %v472 = vld [vmem:[%s305 + $0x2e8] sm:$0xff]
        %v473 = vld [vmem:[%s305 + $0x2f0] sm:$0xff]
        %v474 = vld [vmem:[%s305 + $0x2f8] sm:$0xff]
        %v475 = vld [vmem:[%s305 + $0x300] sm:$0xff]
        %v476 = vld [vmem:[%s305 + $0x308] sm:$0xff]
        %v477 = vld [vmem:[%s305 + $0x310] sm:$0xff]
        %v478 = vld [vmem:[%s305 + $0x318] sm:$0xff]
        %v479 = vld [vmem:[%s305 + $0x320] sm:$0xff]
        %v480 = vld [vmem:[%s305 + $0x328] sm:$0xff]
        %v481 = vld [vmem:[%s305 + $0x330] sm:$0xff]
        %v482 = vld [vmem:[%s305 + $0x338] sm:$0xff]
        %v483 = vld [vmem:[%s305 + $0x340] sm:$0xff]
        %v484 = vld [vmem:[%s305 + $0x348] sm:$0xff]
        %v485 = vld [vmem:[%s305 + $0x350] sm:$0xff]
        %v486 = vld [vmem:[%s305 + $0x358] sm:$0xff]
        %v487 = vld [vmem:[%s305 + $0x360] sm:$0xff]
        %v488 = vld [vmem:[%s305 + $0x368] sm:$0xff]
        %v489 = vld [vmem:[%s305 + $0x370] sm:$0xff]
        %v490 = vld [vmem:[%s305 + $0x378] sm:$0xff]
        %v491 = vld [vmem:[%s305 + $0x380] sm:$0xff]
        %v492 = vld [vmem:[%s305 + $0x388] sm:$0xff]
        %v493 = vld [vmem:[%s305 + $0x390] sm:$0xff]
        %v494 = vld [vmem:[%s305 + $0x398] sm:$0xff]
        %v495 = vld [vmem:[%s305 + $0x3a0] sm:$0xff]
        %v496 = vld [vmem:[%s305 + $0x3a8] sm:$0xff]
        %v497 = vld [vmem:[%s305 + $0x3b0] sm:$0xff]
        %v498 = vld [vmem:[%s305 + $0x3b8] sm:$0xff]
        %v499 = vld [vmem:[%s305 + $0x3c0] sm:$0xff]
        %v500 = vld [vmem:[%s305 + $0x3c8] sm:$0xff]
        %v501 = vld [vmem:[%s305 + $0x3d0] sm:$0xff]
        %v502 = vld [vmem:[%s305 + $0x3d8] sm:$0xff]
        %v503 = vld [vmem:[%s305 + $0x3e0] sm:$0xff]
        %v504 = vld [vmem:[%s305 + $0x3e8] sm:$0xff]
        %v505 = vld [vmem:[%s305 + $0x3f0] sm:$0xff]
        %v506 = vld [vmem:[%s305 + $0x3f8] sm:$0xff]
        %v507 = vld [vmem:[%s305 + $0x400] sm:$0xff]
        %v508 = vld [vmem:[%s305 + $0x408] sm:$0xff]
        %v509 = vld [vmem:[%s305 + $0x410] sm:$0xff]
        %v510 = vld [vmem:[%s305 + $0x418] sm:$0xff]
        %v511 = vld [vmem:[%s305 + $0x420] sm:$0xff]
        %v512 = vld [vmem:[%s305 + $0x428] sm:$0xff]
        %v513 = vld [vmem:[%s305 + $0x430] sm:$0xff]
        %v514 = vld [vmem:[%s305 + $0x438] sm:$0xff]
        %v515 = vld [vmem:[%s305 + $0x440] sm:$0xff]
        %v516 = vld [vmem:[%s305 + $0x448] sm:$0xff]
        %v517 = vld [vmem:[%s305 + $0x450] sm:$0xff]
        %v518 = vld [vmem:[%s305 + $0x458] sm:$0xff]
        %v519 = vld [vmem:[%s305 + $0x460] sm:$0xff]
        %v520 = vld [vmem:[%s305 + $0x468] sm:$0xff]
        %v521 = vld [vmem:[%s305 + $0x470] sm:$0xff]
        %v522 = vld [vmem:[%s305 + $0x478] sm:$0xff]
        %v523 = vld [vmem:[%s305 + $0x480] sm:$0xff]
        %v524 = vld [vmem:[%s305 + $0x488] sm:$0xff]
        %v525 = vld [vmem:[%s305 + $0x490] sm:$0xff]
        %v526 = vld [vmem:[%s305 + $0x498] sm:$0xff]
        %v527 = vld [vmem:[%s305 + $0x4a0] sm:$0xff]
        %v528 = vld [vmem:[%s305 + $0x4a8] sm:$0xff]
        %v529 = vld [vmem:[%s305 + $0x4b0] sm:$0xff]
        %v530 = vld [vmem:[%s305 + $0x4b8] sm:$0xff]
        %v531 = vld [vmem:[%s305 + $0x4c0] sm:$0xff]
        %v532 = vld [vmem:[%s305 + $0x4c8] sm:$0xff]
        %v533 = vld [vmem:[%s305 + $0x4d0] sm:$0xff]
        %v534 = vld [vmem:[%s305 + $0x4d8] sm:$0xff]
        %v535 = vld [vmem:[%s305 + $0x4e0] sm:$0xff]
        %v536 = vld [vmem:[%s305 + $0x4e8] sm:$0xff]
        %v537 = vld [vmem:[%s305 + $0x4f0] sm:$0xff]
        %v538 = vld [vmem:[%s305 + $0x4f8] sm:$0xff]
        %v539 = vld [vmem:[%s305 + $0x500] sm:$0xff]
        %v540 = vld [vmem:[%s305 + $0x508] sm:$0xff]
        %v541 = vld [vmem:[%s305 + $0x510] sm:$0xff]
        %v542 = vld [vmem:[%s305 + $0x518] sm:$0xff]
        %v543 = vld [vmem:[%s305 + $0x520] sm:$0xff]
        %v544 = vld [vmem:[%s305 + $0x528] sm:$0xff]
        %v545 = vld [vmem:[%s305 + $0x530] sm:$0xff]
        %v546 = vld [vmem:[%s305 + $0x538] sm:$0xff]
        %v547 = vld [vmem:[%s305 + $0x540] sm:$0xff]
        %v548 = vld [vmem:[%s305 + $0x548] sm:$0xff]
        %v549 = vld [vmem:[%s305 + $0x550] sm:$0xff]
        %v550 = vld [vmem:[%s305 + $0x558] sm:$0xff]
        %v551 = vld [vmem:[%s305 + $0x560] sm:$0xff]
        %v552 = vld [vmem:[%s305 + $0x568] sm:$0xff]
        %v553 = vld [vmem:[%s305 + $0x570] sm:$0xff]
        %v554 = vld [vmem:[%s305 + $0x578] sm:$0xff]
        %v555 = vld [vmem:[%s305 + $0x580] sm:$0xff]
        %v556 = vld [vmem:[%s305 + $0x588] sm:$0xff]
        %v557 = vld [vmem:[%s305 + $0x590] sm:$0xff]
        %v558 = vld [vmem:[%s305 + $0x598] sm:$0xff]
        %v559 = vld [vmem:[%s305 + $0x5a0] sm:$0xff]
        %v560 = vld [vmem:[%s305 + $0x5a8] sm:$0xff]
        %v561 = vld [vmem:[%s305 + $0x5b0] sm:$0xff]
        %v562 = vld [vmem:[%s305 + $0x5b8] sm:$0xff]
        %v563 = vld [vmem:[%s305 + $0x5c0] sm:$0xff]
        %v564 = vld [vmem:[%s305 + $0x5c8] sm:$0xff]
        %v565 = vld [vmem:[%s305 + $0x5d0] sm:$0xff]
        %v566 = vld [vmem:[%s305 + $0x5d8] sm:$0xff]
        %v567 = vld [vmem:[%s305 + $0x5e0] sm:$0xff]
        %v568 = vld [vmem:[%s305 + $0x5e8] sm:$0xff]
        %v569 = vld [vmem:[%s305 + $0x5f0] sm:$0xff]
        %v570 = vld [vmem:[%s305 + $0x5f8] sm:$0xff]
        %v571 = vld [vmem:[%s305 + $0x600] sm:$0xff]
        %v572 = vld [vmem:[%s305 + $0x608] sm:$0xff]
        %v573 = vld [vmem:[%s305 + $0x610] sm:$0xff]
        %v574 = vld [vmem:[%s305 + $0x618] sm:$0xff]
        %v575 = vld [vmem:[%s305 + $0x620] sm:$0xff]
        %v576 = vld [vmem:[%s305 + $0x628] sm:$0xff]
        %v577 = vld [vmem:[%s305 + $0x630] sm:$0xff]
        %v578 = vld [vmem:[%s305 + $0x638] sm:$0xff]
        %v579 = vld [vmem:[%s305 + $0x640] sm:$0xff]
        %v580 = vld [vmem:[%s305 + $0x648] sm:$0xff]
        %v581 = vld [vmem:[%s305 + $0x650] sm:$0xff]
        %v582 = vld [vmem:[%s305 + $0x658] sm:$0xff]
        %v583 = vld [vmem:[%s305 + $0x660] sm:$0xff]
        %v584 = vld [vmem:[%s305 + $0x668] sm:$0xff]
        %v585 = vld [vmem:[%s305 + $0x670] sm:$0xff]
        %v586 = vld [vmem:[%s305 + $0x678] sm:$0xff]
        %v587 = vld [vmem:[%s305 + $0x680] sm:$0xff]
        %v588 = vld [vmem:[%s305 + $0x688] sm:$0xff]
        %v589 = vld [vmem:[%s305 + $0x690] sm:$0xff]
        %v590 = vld [vmem:[%s305 + $0x698] sm:$0xff]
        %v591 = vld [vmem:[%s305 + $0x6a0] sm:$0xff]
        %v592 = vld [vmem:[%s305 + $0x6a8] sm:$0xff]
        %v593 = vld [vmem:[%s305 + $0x6b0] sm:$0xff]
        %v594 = vld [vmem:[%s305 + $0x6b8] sm:$0xff]
        %v595 = vld [vmem:[%s305 + $0x6c0] sm:$0xff]
        %v596 = vld [vmem:[%s305 + $0x6c8] sm:$0xff]
        %v597 = vld [vmem:[%s305 + $0x6d0] sm:$0xff]
        %v598 = vld [vmem:[%s305 + $0x6d8] sm:$0xff]
        %v599 = vld [vmem:[%s305 + $0x6e0] sm:$0xff]
        %v600 = vld [vmem:[%s305 + $0x6e8] sm:$0xff]
        %v601 = vld [vmem:[%s305 + $0x6f0] sm:$0xff]
        %v602 = vld [vmem:[%s305 + $0x6f8] sm:$0xff]
        %v603 = vld [vmem:[%s305 + $0x700] sm:$0xff]
        %v604 = vld [vmem:[%s305 + $0x708] sm:$0xff]
        %v605 = vld [vmem:[%s305 + $0x710] sm:$0xff]
        %v606 = vld [vmem:[%s305 + $0x718] sm:$0xff]
        %v607 = vld [vmem:[%s305 + $0x720] sm:$0xff]
        %v608 = vld [vmem:[%s305 + $0x728] sm:$0xff]
        %v609 = vld [vmem:[%s305 + $0x730] sm:$0xff]
        %v610 = vld [vmem:[%s305 + $0x738] sm:$0xff]
        %v611 = vld [vmem:[%s305 + $0x740] sm:$0xff]
        %v612 = vld [vmem:[%s305 + $0x748] sm:$0xff]
        %v613 = vld [vmem:[%s305 + $0x750] sm:$0xff]
        %v614 = vld [vmem:[%s305 + $0x758] sm:$0xff]
        %v615 = vld [vmem:[%s305 + $0x760] sm:$0xff]
        %v616 = vld [vmem:[%s305 + $0x768] sm:$0xff]
        %v617 = vld [vmem:[%s305 + $0x770] sm:$0xff]
        %v618 = vld [vmem:[%s305 + $0x778] sm:$0xff]
        %v619 = vld [vmem:[%s305 + $0x780] sm:$0xff]
        %v620 = vld [vmem:[%s305 + $0x788] sm:$0xff]
        %v621 = vld [vmem:[%s305 + $0x790] sm:$0xff]
        %v622 = vld [vmem:[%s305 + $0x798] sm:$0xff]
        %v623 = vld [vmem:[%s305 + $0x7a0] sm:$0xff]
        %v624 = vld [vmem:[%s305 + $0x7a8] sm:$0xff]
        %v625 = vld [vmem:[%s305 + $0x7b0] sm:$0xff]
        %v626 = vld [vmem:[%s305 + $0x7b8] sm:$0xff]
        %v627 = vld [vmem:[%s305 + $0x7c0] sm:$0xff]
        %v628 = vld [vmem:[%s305 + $0x7c8] sm:$0xff]
        %v629 = vld [vmem:[%s305 + $0x7d0] sm:$0xff]
        %v630 = vld [vmem:[%s305 + $0x7d8] sm:$0xff]
        %v631 = vld [vmem:[%s305 + $0x7e0] sm:$0xff]
        %v632 = vld [vmem:[%s305 + $0x7e8] sm:$0xff]
        %v633 = vld [vmem:[%s305 + $0x7f0] sm:$0xff]
        %v634 = vld [vmem:[%s305 + $0x7f8] sm:$0xff]
        %v635 = vld [vmem:[%s305 + $0x800] sm:$0xff]
        %v636 = vld [vmem:[%s305 + $0x808] sm:$0xff]
        %v637 = vld [vmem:[%s305 + $0x810] sm:$0xff]
        %v638 = vld [vmem:[%s305 + $0x818] sm:$0xff]
        %v639 = vld [vmem:[%s305 + $0x820] sm:$0xff]
        %v640 = vld [vmem:[%s305 + $0x828] sm:$0xff]
        %v641 = vld [vmem:[%s305 + $0x830] sm:$0xff]
        %v642 = vld [vmem:[%s305 + $0x838] sm:$0xff]
        %v643 = vld [vmem:[%s305 + $0x840] sm:$0xff]
        %v644 = vld [vmem:[%s305 + $0x848] sm:$0xff]
        %v645 = vld [vmem:[%s305 + $0x850] sm:$0xff]
        %v646 = vld [vmem:[%s305 + $0x858] sm:$0xff]
        %v647 = vld [vmem:[%s305 + $0x860] sm:$0xff]
        %v648 = vld [vmem:[%s305 + $0x868] sm:$0xff]
        %v649 = vld [vmem:[%s305 + $0x870] sm:$0xff]
        %v650 = vld [vmem:[%s305 + $0x878] sm:$0xff]
        %v651 = vld [vmem:[%s305 + $0x880] sm:$0xff]
        %v652 = vld [vmem:[%s305 + $0x888] sm:$0xff]
        %v653 = vld [vmem:[%s305 + $0x890] sm:$0xff]
        %v654 = vld [vmem:[%s305 + $0x898] sm:$0xff]
        %v655 = vld [vmem:[%s305 + $0x8a0] sm:$0xff]
        %v656 = vld [vmem:[%s305 + $0x8a8] sm:$0xff]
        %v657 = vld [vmem:[%s305 + $0x8b0] sm:$0xff]
        %v658 = vld [vmem:[%s305 + $0x8b8] sm:$0xff]
        %v659 = vld [vmem:[%s305 + $0x8c0] sm:$0xff]
        %v660 = vld [vmem:[%s305 + $0x8c8] sm:$0xff]
        %v661 = vld [vmem:[%s305 + $0x8d0] sm:$0xff]
        %v662 = vld [vmem:[%s305 + $0x8d8] sm:$0xff]
        %v663 = vld [vmem:[%s305 + $0x8e0] sm:$0xff]
        %v664 = vld [vmem:[%s305 + $0x8e8] sm:$0xff]
        %v665 = vld [vmem:[%s305 + $0x8f0] sm:$0xff]
        %v666 = vld [vmem:[%s305 + $0x8f8] sm:$0xff]
        %v667 = vld [vmem:[%s305 + $0x900] sm:$0xff]
        %v668 = vld [vmem:[%s305 + $0x908] sm:$0xff]
        %v669 = vld [vmem:[%s305 + $0x910] sm:$0xff]
        %v670 = vld [vmem:[%s305 + $0x918] sm:$0xff]
        %v671 = vld [vmem:[%s305 + $0x920] sm:$0xff]
        %v672 = vld [vmem:[%s305 + $0x928] sm:$0xff]
        %v673 = vld [vmem:[%s305 + $0x930] sm:$0xff]
        %v674 = vld [vmem:[%s305 + $0x938] sm:$0xff]
        %v675 = vld [vmem:[%s305 + $0x940] sm:$0xff]
        %v676 = vld [vmem:[%s305 + $0x948] sm:$0xff]
        %v677 = vld [vmem:[%s305 + $0x950] sm:$0xff]
        %v678 = vld [vmem:[%s305 + $0x958] sm:$0xff]
        %v679 = vld [vmem:[%s305 + $0x960] sm:$0xff]
        %v680 = vld [vmem:[%s305 + $0x968] sm:$0xff]
        %v681 = vld [vmem:[%s305 + $0x970] sm:$0xff]
        %v682 = vld [vmem:[%s305 + $0x978] sm:$0xff]
        %v683 = vld [vmem:[%s305 + $0x980] sm:$0xff]
        %v684 = vld [vmem:[%s305 + $0x988] sm:$0xff]
        %v685 = vld [vmem:[%s305 + $0x990] sm:$0xff]
        %v686 = vld [vmem:[%s305 + $0x998] sm:$0xff]
        %v687 = vld [vmem:[%s305 + $0x9a0] sm:$0xff]
        %v688 = vld [vmem:[%s305 + $0x9a8] sm:$0xff]
        %v689 = vld [vmem:[%s305 + $0x9b0] sm:$0xff]
        %v690 = vld [vmem:[%s305 + $0x9b8] sm:$0xff]
        %v691 = vld [vmem:[%s305 + $0x9c0] sm:$0xff]
        %v692 = vld [vmem:[%s305 + $0x9c8] sm:$0xff]
        %v693 = vld [vmem:[%s305 + $0x9d0] sm:$0xff]
        %v694 = vld [vmem:[%s305 + $0x9d8] sm:$0xff]
        %v695 = vld [vmem:[%s305 + $0x9e0] sm:$0xff]
        %v696 = vld [vmem:[%s305 + $0x9e8] sm:$0xff]
        %v697 = vld [vmem:[%s305 + $0x9f0] sm:$0xff]
        %v698 = vld [vmem:[%s305 + $0x9f8] sm:$0xff]
        %v699 = vld [vmem:[%s305 + $0xa00] sm:$0xff]
        %v700 = vld [vmem:[%s305 + $0xa08] sm:$0xff]
        %v701 = vld [vmem:[%s305 + $0xa10] sm:$0xff]
        %v702 = vld [vmem:[%s305 + $0xa18] sm:$0xff]
        %v703 = vld [vmem:[%s305 + $0xa20] sm:$0xff]
        %v704 = vld [vmem:[%s305 + $0xa28] sm:$0xff]
        %v705 = vld [vmem:[%s305 + $0xa30] sm:$0xff]
        %v706 = vld [vmem:[%s305 + $0xa38] sm:$0xff]
        %v707 = vld [vmem:[%s305 + $0xa40] sm:$0xff]
        %v708 = vld [vmem:[%s305 + $0xa48] sm:$0xff]
        %v709 = vld [vmem:[%s305 + $0xa50] sm:$0xff]
        %v710 = vld [vmem:[%s305 + $0xa58] sm:$0xff]
        %v711 = vld [vmem:[%s305 + $0xa60] sm:$0xff]
        %v712 = vld [vmem:[%s305 + $0xa68] sm:$0xff]
        %v713 = vld [vmem:[%s305 + $0xa70] sm:$0xff]
        %v714 = vld [vmem:[%s305 + $0xa78] sm:$0xff]
        %v715 = vld [vmem:[%s305 + $0xa80] sm:$0xff]
        %v716 = vld [vmem:[%s305 + $0xa88] sm:$0xff]
        %v717 = vld [vmem:[%s305 + $0xa90] sm:$0xff]
        %v718 = vld [vmem:[%s305 + $0xa98] sm:$0xff]
        %v719 = vld [vmem:[%s305 + $0xaa0] sm:$0xff]
        %v720 = vld [vmem:[%s305 + $0xaa8] sm:$0xff]
        %v721 = vld [vmem:[%s305 + $0xab0] sm:$0xff]
        %v722 = vld [vmem:[%s305 + $0xab8] sm:$0xff]
        %v723 = vld [vmem:[%s305 + $0xac0] sm:$0xff]
        %v724 = vld [vmem:[%s305 + $0xac8] sm:$0xff]
        %v725 = vld [vmem:[%s305 + $0xad0] sm:$0xff]
        %v726 = vld [vmem:[%s305 + $0xad8] sm:$0xff]
        %v727 = vld [vmem:[%s305 + $0xae0] sm:$0xff]
        %v728 = vld [vmem:[%s305 + $0xae8] sm:$0xff]
        %v729 = vld [vmem:[%s305 + $0xaf0] sm:$0xff]
        %v730 = vld [vmem:[%s305 + $0xaf8] sm:$0xff]
        %v731 = vld [vmem:[%s305 + $0xb00] sm:$0xff]
        %v732 = vld [vmem:[%s305 + $0xb08] sm:$0xff]
        %v733 = vld [vmem:[%s305 + $0xb10] sm:$0xff]
        %v734 = vld [vmem:[%s305 + $0xb18] sm:$0xff]
        %v735 = vld [vmem:[%s305 + $0xb20] sm:$0xff]
        %v736 = vld [vmem:[%s305 + $0xb28] sm:$0xff]
        %v737 = vld [vmem:[%s305 + $0xb30] sm:$0xff]
        %v738 = vld [vmem:[%s305 + $0xb38] sm:$0xff]
        %v739 = vld [vmem:[%s305 + $0xb40] sm:$0xff]
        %v740 = vld [vmem:[%s305 + $0xb48] sm:$0xff]
        %v741 = vld [vmem:[%s305 + $0xb50] sm:$0xff]
        %v742 = vld [vmem:[%s305 + $0xb58] sm:$0xff]
        %v743 = vld [vmem:[%s305 + $0xb60] sm:$0xff]
        %v744 = vld [vmem:[%s305 + $0xb68] sm:$0xff]
        %v745 = vld [vmem:[%s305 + $0xb70] sm:$0xff]
        %v746 = vld [vmem:[%s305 + $0xb78] sm:$0xff]
        %v747 = vld [vmem:[%s305 + $0xb80] sm:$0xff]
        %v748 = vld [vmem:[%s305 + $0xb88] sm:$0xff]
        %v749 = vld [vmem:[%s305 + $0xb90] sm:$0xff]
        %v750 = vld [vmem:[%s305 + $0xb98] sm:$0xff]
        %v751 = vld [vmem:[%s305 + $0xba0] sm:$0xff]
        %v752 = vld [vmem:[%s305 + $0xba8] sm:$0xff]
        %v753 = vld [vmem:[%s305 + $0xbb0] sm:$0xff]
        %v754 = vld [vmem:[%s305 + $0xbb8] sm:$0xff]
        %v755 = vld [vmem:[%s305 + $0xbc0] sm:$0xff]
        %v756 = vld [vmem:[%s305 + $0xbc8] sm:$0xff]
        %v757 = vld [vmem:[%s305 + $0xbd0] sm:$0xff]
        %v758 = vld [vmem:[%s305 + $0xbd8] sm:$0xff]
        %v759 = vld [vmem:[%s305 + $0xbe0] sm:$0xff]
        %v760 = vld [vmem:[%s305 + $0xbe8] sm:$0xff]
        %v761 = vld [vmem:[%s305 + $0xbf0] sm:$0xff]
        %v762 = vld [vmem:[%s305 + $0xbf8] sm:$0xff]
        %v763 = vld [vmem:[%s305 + $0xc00] sm:$0xff]
        %v764 = vld [vmem:[%s305 + $0xc08] sm:$0xff]
        %v765 = vld [vmem:[%s305 + $0xc10] sm:$0xff]
        %v766 = vld [vmem:[%s305 + $0xc18] sm:$0xff]
        %v767 = vld [vmem:[%s305 + $0xc20] sm:$0xff]
        %v768 = vld [vmem:[%s305 + $0xc28] sm:$0xff]
        %v769 = vld [vmem:[%s305 + $0xc30] sm:$0xff]
        %v770 = vld [vmem:[%s305 + $0xc38] sm:$0xff]
        %v771 = vld [vmem:[%s305 + $0xc40] sm:$0xff]
        %v772 = vld [vmem:[%s305 + $0xc48] sm:$0xff]
        %v773 = vld [vmem:[%s305 + $0xc50] sm:$0xff]
        %v774 = vld [vmem:[%s305 + $0xc58] sm:$0xff]
        %v775 = vld [vmem:[%s305 + $0xc60] sm:$0xff]
        %v776 = vld [vmem:[%s305 + $0xc68] sm:$0xff]
        %v777 = vld [vmem:[%s305 + $0xc70] sm:$0xff]
        %v778 = vld [vmem:[%s305 + $0xc78] sm:$0xff]
        %v779 = vld [vmem:[%s305 + $0xc80] sm:$0xff]
        %v780 = vld [vmem:[%s305 + $0xc88] sm:$0xff]
        %v781 = vld [vmem:[%s305 + $0xc90] sm:$0xff]
        %v782 = vld [vmem:[%s305 + $0xc98] sm:$0xff]
        %v783 = vld [vmem:[%s305 + $0xca0] sm:$0xff]
        %v784 = vld [vmem:[%s305 + $0xca8] sm:$0xff]
        %v785 = vld [vmem:[%s305 + $0xcb0] sm:$0xff]
        %v786 = vld [vmem:[%s305 + $0xcb8] sm:$0xff]
        %v787 = vld [vmem:[%s305 + $0xcc0] sm:$0xff]
        %v788 = vld [vmem:[%s305 + $0xcc8] sm:$0xff]
        %v789 = vld [vmem:[%s305 + $0xcd0] sm:$0xff]
        %v790 = vld [vmem:[%s305 + $0xcd8] sm:$0xff]
        %v791 = vld [vmem:[%s305 + $0xce0] sm:$0xff]
        %v792 = vld [vmem:[%s305 + $0xce8] sm:$0xff]
        %v793 = vld [vmem:[%s305 + $0xcf0] sm:$0xff]
        %v794 = vld [vmem:[%s305 + $0xcf8] sm:$0xff]
        %v795 = vld [vmem:[%s305 + $0xd00] sm:$0xff]
        %v796 = vld [vmem:[%s305 + $0xd08] sm:$0xff]
        %v797 = vld [vmem:[%s305 + $0xd10] sm:$0xff]
        %v798 = vld [vmem:[%s305 + $0xd18] sm:$0xff]
        %v799 = vld [vmem:[%s305 + $0xd20] sm:$0xff]
        %v800 = vld [vmem:[%s305 + $0xd28] sm:$0xff]
        %v801 = vld [vmem:[%s305 + $0xd30] sm:$0xff]
        %v802 = vld [vmem:[%s305 + $0xd38] sm:$0xff]
        %v803 = vld [vmem:[%s305 + $0xd40] sm:$0xff]
        %v804 = vld [vmem:[%s305 + $0xd48] sm:$0xff]
        %v805 = vld [vmem:[%s305 + $0xd50] sm:$0xff]
        %v806 = vld [vmem:[%s305 + $0xd58] sm:$0xff]
        %v807 = vld [vmem:[%s305 + $0xd60] sm:$0xff]
        %v808 = vld [vmem:[%s305 + $0xd68] sm:$0xff]
        %v809 = vld [vmem:[%s305 + $0xd70] sm:$0xff]
        %v810 = vld [vmem:[%s305 + $0xd78] sm:$0xff]
        %v811 = vld [vmem:[%s305 + $0xd80] sm:$0xff]
        %v812 = vld [vmem:[%s305 + $0xd88] sm:$0xff]
        %v813 = vld [vmem:[%s305 + $0xd90] sm:$0xff]
        %v814 = vld [vmem:[%s305 + $0xd98] sm:$0xff]
        %v815 = vld [vmem:[%s305 + $0xda0] sm:$0xff]
        %v816 = vld [vmem:[%s305 + $0xda8] sm:$0xff]
        %v817 = vld [vmem:[%s305 + $0xdb0] sm:$0xff]
        %v818 = vld [vmem:[%s305 + $0xdb8] sm:$0xff]
        %v819 = vld [vmem:[%s305 + $0xdc0] sm:$0xff]
        %v820 = vld [vmem:[%s305 + $0xdc8] sm:$0xff]
        %v821 = vld [vmem:[%s305 + $0xdd0] sm:$0xff]
        %v822 = vld [vmem:[%s305 + $0xdd8] sm:$0xff]
        %v823 = vld [vmem:[%s305 + $0xde0] sm:$0xff]
        %v824 = vld [vmem:[%s305 + $0xde8] sm:$0xff]
        %v825 = vld [vmem:[%s305 + $0xdf0] sm:$0xff]
        %v826 = vld [vmem:[%s305 + $0xdf8] sm:$0xff]
        %v827 = vld [vmem:[%s314] sm:$0xff]
        %v829 = vlaneseq
        %v830 = vshrl.u32 %v829, 7
        %v831 = vsub.s32 0, %v830
        %v832 = vrot.slane %v827, %v831
        %v833 = vlaneseq
        %v834 = vshrl.u32 %v833, 7
        %v835 = vsub.s32 1, %v834
        %v836 = vrot.slane %v827, %v835
        %v837 = vlaneseq
        %v838 = vshrl.u32 %v837, 7
        %v839 = vsub.s32 2, %v838
        %v840 = vrot.slane %v827, %v839
        %v841 = vlaneseq
        %v842 = vshrl.u32 %v841, 7
        %v843 = vsub.s32 3, %v842
        %v844 = vrot.slane %v827, %v843
        %v845 = vlaneseq
        %v846 = vshrl.u32 %v845, 7
        %v847 = vsub.s32 4, %v846
        %v848 = vrot.slane %v827, %v847
        %v849 = vlaneseq
        %v850 = vshrl.u32 %v849, 7
        %v851 = vsub.s32 5, %v850
        %v852 = vrot.slane %v827, %v851
        %v853 = vlaneseq
        %v854 = vshrl.u32 %v853, 7
        %v855 = vsub.s32 6, %v854
        %v856 = vrot.slane %v827, %v855
        %v857 = vlaneseq
        %v858 = vshrl.u32 %v857, 7
        %v859 = vsub.s32 7, %v858
        %v860 = vrot.slane %v827, %v859
        %v877 = vunpack.c.l.b16 %v371
        %v878 = vunpack.c.h.b16 %v371
        %v879 = vunpack.c.l.b16 %v372
        %v880 = vunpack.c.h.b16 %v372
        %v881 = vunpack.c.l.b16 %v373
        %v882 = vunpack.c.h.b16 %v373
        %v883 = vunpack.c.l.b16 %v374
        %v884 = vunpack.c.l.b16 %v375
        %v885 = vunpack.c.h.b16 %v375
        %v886 = vunpack.c.l.b16 %v376
        %v887 = vunpack.c.h.b16 %v376
        %v888 = vunpack.c.l.b16 %v377
        %v889 = vunpack.c.h.b16 %v377
        %v890 = vunpack.c.l.b16 %v378
        %v891 = vpack.c.b16 %v884, %v877
        %v892 = vpack.c.b16 %v885, %v878
        %v893 = vpack.c.b16 %v886, %v879
        %v894 = vpack.c.b16 %v887, %v880
        %v895 = vpack.c.b16 %v888, %v881
        %v896 = vpack.c.b16 %v889, %v882
        %v897 = vpack.c.b16 %v890, %v883
        %v1353 = vunpack.c.l.b16 %v379
        %v1354 = vunpack.c.h.b16 %v379
        %v1355 = vunpack.c.l.b16 %v380
        %v1356 = vunpack.c.h.b16 %v380
        %v1357 = vunpack.c.l.b16 %v381
        %v1358 = vunpack.c.h.b16 %v381
        %v1359 = vunpack.c.l.b16 %v382
        %v1360 = vunpack.c.h.b16 %v382
        %v1361 = vunpack.c.l.b16 %v383
        %v1362 = vunpack.c.h.b16 %v383
        %v1363 = vunpack.c.l.b16 %v384
        %v1364 = vunpack.c.h.b16 %v384
        %v1365 = vunpack.c.l.b16 %v385
        %v1366 = vunpack.c.h.b16 %v385
        %v1367 = vunpack.c.l.b16 %v386
        %v1368 = vunpack.c.h.b16 %v386
        %v1369 = vunpack.c.l.b16 %v387
        %v1370 = vunpack.c.h.b16 %v387
        %v1371 = vunpack.c.l.b16 %v388
        %v1372 = vunpack.c.h.b16 %v388
        %v1373 = vunpack.c.l.b16 %v389
        %v1374 = vunpack.c.h.b16 %v389
        %v1375 = vunpack.c.l.b16 %v390
        %v1376 = vunpack.c.h.b16 %v390
        %v1377 = vunpack.c.l.b16 %v391
        %v1378 = vunpack.c.h.b16 %v391
        %v1379 = vunpack.c.l.b16 %v392
        %v1380 = vunpack.c.h.b16 %v392
        %v1381 = vunpack.c.l.b16 %v393
        %v1382 = vunpack.c.h.b16 %v393
        %v1383 = vunpack.c.l.b16 %v394
        %v1384 = vunpack.c.h.b16 %v394
        %v1385 = vunpack.c.l.b16 %v395
        %v1386 = vunpack.c.h.b16 %v395
        %v1387 = vunpack.c.l.b16 %v396
        %v1388 = vunpack.c.h.b16 %v396
        %v1389 = vunpack.c.l.b16 %v397
        %v1390 = vunpack.c.h.b16 %v397
        %v1391 = vunpack.c.l.b16 %v398
        %v1392 = vunpack.c.h.b16 %v398
        %v1393 = vunpack.c.l.b16 %v399
        %v1394 = vunpack.c.h.b16 %v399
        %v1395 = vunpack.c.l.b16 %v400
        %v1396 = vunpack.c.h.b16 %v400
        %v1397 = vunpack.c.l.b16 %v401
        %v1398 = vunpack.c.h.b16 %v401
        %v1399 = vunpack.c.l.b16 %v402
        %v1400 = vunpack.c.h.b16 %v402
        %v1401 = vunpack.c.l.b16 %v403
        %v1402 = vunpack.c.h.b16 %v403
        %v1403 = vunpack.c.l.b16 %v404
        %v1404 = vunpack.c.h.b16 %v404
        %v1405 = vunpack.c.l.b16 %v405
        %v1406 = vunpack.c.h.b16 %v405
        %v1407 = vunpack.c.l.b16 %v406
        %v1408 = vunpack.c.h.b16 %v406
        %v1409 = vunpack.c.l.b16 %v407
        %v1410 = vunpack.c.h.b16 %v407
        %v1411 = vunpack.c.l.b16 %v408
        %v1412 = vunpack.c.h.b16 %v408
        %v1413 = vunpack.c.l.b16 %v409
        %v1414 = vunpack.c.h.b16 %v409
        %v1415 = vunpack.c.l.b16 %v410
        %v1416 = vunpack.c.h.b16 %v410
        %v1417 = vunpack.c.l.b16 %v411
        %v1418 = vunpack.c.h.b16 %v411
        %v1419 = vunpack.c.l.b16 %v412
        %v1420 = vunpack.c.h.b16 %v412
        %v1421 = vunpack.c.l.b16 %v413
        %v1422 = vunpack.c.h.b16 %v413
        %v1423 = vunpack.c.l.b16 %v414
        %v1424 = vunpack.c.h.b16 %v414
        %v1425 = vunpack.c.l.b16 %v415
        %v1426 = vunpack.c.h.b16 %v415
        %v1427 = vunpack.c.l.b16 %v416
        %v1428 = vunpack.c.h.b16 %v416
        %v1429 = vunpack.c.l.b16 %v417
        %v1430 = vunpack.c.h.b16 %v417
        %v1431 = vunpack.c.l.b16 %v418
        %v1432 = vunpack.c.h.b16 %v418
        %v1433 = vunpack.c.l.b16 %v419
        %v1434 = vunpack.c.h.b16 %v419
        %v1435 = vunpack.c.l.b16 %v420
        %v1436 = vunpack.c.h.b16 %v420
        %v1437 = vunpack.c.l.b16 %v421
        %v1438 = vunpack.c.h.b16 %v421
        %v1439 = vunpack.c.l.b16 %v422
        %v1440 = vunpack.c.h.b16 %v422
        %v1441 = vunpack.c.l.b16 %v423
        %v1442 = vunpack.c.h.b16 %v423
        %v1443 = vunpack.c.l.b16 %v424
        %v1444 = vunpack.c.h.b16 %v424
        %v1445 = vunpack.c.l.b16 %v425
        %v1446 = vunpack.c.h.b16 %v425
        %v1447 = vunpack.c.l.b16 %v426
        %v1448 = vunpack.c.h.b16 %v426
        %v1449 = vunpack.c.l.b16 %v427
        %v1450 = vunpack.c.h.b16 %v427
        %v1451 = vunpack.c.l.b16 %v428
        %v1452 = vunpack.c.h.b16 %v428
        %v1453 = vunpack.c.l.b16 %v429
        %v1454 = vunpack.c.h.b16 %v429
        %v1455 = vunpack.c.l.b16 %v430
        %v1456 = vunpack.c.h.b16 %v430
        %v1457 = vunpack.c.l.b16 %v431
        %v1458 = vunpack.c.h.b16 %v431
        %v1459 = vunpack.c.l.b16 %v432
        %v1460 = vunpack.c.h.b16 %v432
        %v1461 = vunpack.c.l.b16 %v433
        %v1462 = vunpack.c.h.b16 %v433
        %v1463 = vunpack.c.l.b16 %v434
        %v1464 = vunpack.c.h.b16 %v434
        %v1465 = vunpack.c.l.b16 %v435
        %v1466 = vunpack.c.h.b16 %v435
        %v1467 = vunpack.c.l.b16 %v436
        %v1468 = vunpack.c.h.b16 %v436
        %v1469 = vunpack.c.l.b16 %v437
        %v1470 = vunpack.c.h.b16 %v437
        %v1471 = vunpack.c.l.b16 %v438
        %v1472 = vunpack.c.h.b16 %v438
        %v1473 = vunpack.c.l.b16 %v439
        %v1474 = vunpack.c.h.b16 %v439
        %v1475 = vunpack.c.l.b16 %v440
        %v1476 = vunpack.c.h.b16 %v440
        %v1477 = vunpack.c.l.b16 %v441
        %v1478 = vunpack.c.h.b16 %v441
        %v1479 = vunpack.c.l.b16 %v442
        %v1480 = vunpack.c.h.b16 %v442
        %v1481 = vunpack.c.l.b16 %v443
        %v1482 = vunpack.c.h.b16 %v443
        %v1483 = vunpack.c.l.b16 %v444
        %v1484 = vunpack.c.h.b16 %v444
        %v1485 = vunpack.c.l.b16 %v445
        %v1486 = vunpack.c.h.b16 %v445
        %v1487 = vunpack.c.l.b16 %v446
        %v1488 = vunpack.c.h.b16 %v446
        %v1489 = vunpack.c.l.b16 %v447
        %v1490 = vunpack.c.h.b16 %v447
        %v1491 = vunpack.c.l.b16 %v448
        %v1492 = vunpack.c.h.b16 %v448
        %v1493 = vunpack.c.l.b16 %v449
        %v1494 = vunpack.c.h.b16 %v449
        %v1495 = vunpack.c.l.b16 %v450
        %v1496 = vunpack.c.h.b16 %v450
        %v1497 = vunpack.c.l.b16 %v451
        %v1498 = vunpack.c.h.b16 %v451
        %v1499 = vunpack.c.l.b16 %v452
        %v1500 = vunpack.c.h.b16 %v452
        %v1501 = vunpack.c.l.b16 %v453
        %v1502 = vunpack.c.h.b16 %v453
        %v1503 = vunpack.c.l.b16 %v454
        %v1504 = vunpack.c.h.b16 %v454
        %v1505 = vunpack.c.l.b16 %v455
        %v1506 = vunpack.c.h.b16 %v455
        %v1507 = vunpack.c.l.b16 %v456
        %v1508 = vunpack.c.h.b16 %v456
        %v1509 = vunpack.c.l.b16 %v457
        %v1510 = vunpack.c.h.b16 %v457
        %v1511 = vunpack.c.l.b16 %v458
        %v1512 = vunpack.c.h.b16 %v458
        %v1513 = vunpack.c.l.b16 %v459
        %v1514 = vunpack.c.h.b16 %v459
        %v1515 = vunpack.c.l.b16 %v460
        %v1516 = vunpack.c.h.b16 %v460
        %v1517 = vunpack.c.l.b16 %v461
        %v1518 = vunpack.c.h.b16 %v461
        %v1519 = vunpack.c.l.b16 %v462
        %v1520 = vunpack.c.h.b16 %v462
        %v1521 = vunpack.c.l.b16 %v463
        %v1522 = vunpack.c.h.b16 %v463
        %v1523 = vunpack.c.l.b16 %v464
        %v1524 = vunpack.c.h.b16 %v464
        %v1525 = vunpack.c.l.b16 %v465
        %v1526 = vunpack.c.h.b16 %v465
        %v1527 = vunpack.c.l.b16 %v466
        %v1528 = vunpack.c.h.b16 %v466
        %v1529 = vunpack.c.l.b16 %v467
        %v1530 = vunpack.c.h.b16 %v467
        %v1531 = vunpack.c.l.b16 %v468
        %v1532 = vunpack.c.h.b16 %v468
        %v1533 = vunpack.c.l.b16 %v469
        %v1534 = vunpack.c.h.b16 %v469
        %v1535 = vunpack.c.l.b16 %v470
        %v1536 = vunpack.c.h.b16 %v470
        %v1537 = vunpack.c.l.b16 %v471
        %v1538 = vunpack.c.h.b16 %v471
        %v1539 = vunpack.c.l.b16 %v472
        %v1540 = vunpack.c.h.b16 %v472
        %v1541 = vunpack.c.l.b16 %v473
        %v1542 = vunpack.c.h.b16 %v473
        %v1543 = vunpack.c.l.b16 %v474
        %v1544 = vunpack.c.h.b16 %v474
        %v1545 = vunpack.c.l.b16 %v475
        %v1546 = vunpack.c.h.b16 %v475
        %v1547 = vunpack.c.l.b16 %v476
        %v1548 = vunpack.c.h.b16 %v476
        %v1549 = vunpack.c.l.b16 %v477
        %v1550 = vunpack.c.h.b16 %v477
        %v1551 = vunpack.c.l.b16 %v478
        %v1552 = vunpack.c.h.b16 %v478
        %v1553 = vunpack.c.l.b16 %v479
        %v1554 = vunpack.c.h.b16 %v479
        %v1555 = vunpack.c.l.b16 %v480
        %v1556 = vunpack.c.h.b16 %v480
        %v1557 = vunpack.c.l.b16 %v481
        %v1558 = vunpack.c.h.b16 %v481
        %v1559 = vunpack.c.l.b16 %v482
        %v1560 = vunpack.c.h.b16 %v482
        %v1561 = vunpack.c.l.b16 %v483
        %v1562 = vunpack.c.h.b16 %v483
        %v1563 = vunpack.c.l.b16 %v484
        %v1564 = vunpack.c.h.b16 %v484
        %v1565 = vunpack.c.l.b16 %v485
        %v1566 = vunpack.c.h.b16 %v485
        %v1567 = vunpack.c.l.b16 %v486
        %v1568 = vunpack.c.h.b16 %v486
        %v1569 = vunpack.c.l.b16 %v487
        %v1570 = vunpack.c.h.b16 %v487
        %v1571 = vunpack.c.l.b16 %v488
        %v1572 = vunpack.c.h.b16 %v488
        %v1573 = vunpack.c.l.b16 %v489
        %v1574 = vunpack.c.h.b16 %v489
        %v1575 = vunpack.c.l.b16 %v490
        %v1576 = vunpack.c.h.b16 %v490
        %v1577 = vunpack.c.l.b16 %v491
        %v1578 = vunpack.c.h.b16 %v491
        %v1579 = vunpack.c.l.b16 %v492
        %v1580 = vunpack.c.h.b16 %v492
        %v1581 = vunpack.c.l.b16 %v493
        %v1582 = vunpack.c.h.b16 %v493
        %v1583 = vunpack.c.l.b16 %v494
        %v1584 = vunpack.c.h.b16 %v494
        %v1585 = vunpack.c.l.b16 %v495
        %v1586 = vunpack.c.h.b16 %v495
        %v1587 = vunpack.c.l.b16 %v496
        %v1588 = vunpack.c.h.b16 %v496
        %v1589 = vunpack.c.l.b16 %v497
        %v1590 = vunpack.c.h.b16 %v497
        %v1591 = vunpack.c.l.b16 %v498
        %v1592 = vunpack.c.h.b16 %v498
        %v1593 = vunpack.c.l.b16 %v499
        %v1594 = vunpack.c.h.b16 %v499
        %v1595 = vunpack.c.l.b16 %v500
        %v1596 = vunpack.c.h.b16 %v500
        %v1597 = vunpack.c.l.b16 %v501
        %v1598 = vunpack.c.h.b16 %v501
        %v1599 = vunpack.c.l.b16 %v502
        %v1600 = vunpack.c.h.b16 %v502
        %v1601 = vunpack.c.l.b16 %v503
        %v1602 = vunpack.c.h.b16 %v503
        %v1603 = vunpack.c.l.b16 %v504
        %v1604 = vunpack.c.h.b16 %v504
        %v1605 = vunpack.c.l.b16 %v505
        %v1606 = vunpack.c.h.b16 %v505
        %v1607 = vunpack.c.l.b16 %v506
        %v1608 = vunpack.c.h.b16 %v506
        %v1609 = vunpack.c.l.b16 %v507
        %v1610 = vunpack.c.h.b16 %v507
        %v1611 = vunpack.c.l.b16 %v508
        %v1612 = vunpack.c.h.b16 %v508
        %v1613 = vunpack.c.l.b16 %v509
        %v1614 = vunpack.c.h.b16 %v509
        %v1615 = vunpack.c.l.b16 %v510
        %v1616 = vunpack.c.h.b16 %v510
        %v1617 = vunpack.c.l.b16 %v511
        %v1618 = vunpack.c.h.b16 %v511
        %v1619 = vunpack.c.l.b16 %v512
        %v1620 = vunpack.c.h.b16 %v512
        %v1621 = vunpack.c.l.b16 %v513
        %v1622 = vunpack.c.h.b16 %v513
        %v1623 = vunpack.c.l.b16 %v514
        %v1624 = vunpack.c.h.b16 %v514
        %v1625 = vunpack.c.l.b16 %v515
        %v1626 = vunpack.c.h.b16 %v515
        %v1627 = vunpack.c.l.b16 %v516
        %v1628 = vunpack.c.h.b16 %v516
        %v1629 = vunpack.c.l.b16 %v517
        %v1630 = vunpack.c.h.b16 %v517
        %v1631 = vunpack.c.l.b16 %v518
        %v1632 = vunpack.c.h.b16 %v518
        %v1633 = vunpack.c.l.b16 %v519
        %v1634 = vunpack.c.h.b16 %v519
        %v1635 = vunpack.c.l.b16 %v520
        %v1636 = vunpack.c.h.b16 %v520
        %v1637 = vunpack.c.l.b16 %v521
        %v1638 = vunpack.c.h.b16 %v521
        %v1639 = vunpack.c.l.b16 %v522
        %v1640 = vunpack.c.h.b16 %v522
        %v1641 = vunpack.c.l.b16 %v523
        %v1642 = vunpack.c.h.b16 %v523
        %v1643 = vunpack.c.l.b16 %v524
        %v1644 = vunpack.c.h.b16 %v524
        %v1645 = vunpack.c.l.b16 %v525
        %v1646 = vunpack.c.h.b16 %v525
        %v1647 = vunpack.c.l.b16 %v526
        %v1648 = vunpack.c.h.b16 %v526
        %v1649 = vunpack.c.l.b16 %v527
        %v1650 = vunpack.c.h.b16 %v527
        %v1651 = vunpack.c.l.b16 %v528
        %v1652 = vunpack.c.h.b16 %v528
        %v1653 = vunpack.c.l.b16 %v529
        %v1654 = vunpack.c.h.b16 %v529
        %v1655 = vunpack.c.l.b16 %v530
        %v1656 = vunpack.c.h.b16 %v530
        %v1657 = vunpack.c.l.b16 %v531
        %v1658 = vunpack.c.h.b16 %v531
        %v1659 = vunpack.c.l.b16 %v532
        %v1660 = vunpack.c.h.b16 %v532
        %v1661 = vunpack.c.l.b16 %v533
        %v1662 = vunpack.c.h.b16 %v533
        %v1663 = vunpack.c.l.b16 %v534
        %v1664 = vunpack.c.h.b16 %v534
        %v1665 = vunpack.c.l.b16 %v535
        %v1666 = vunpack.c.h.b16 %v535
        %v1667 = vunpack.c.l.b16 %v536
        %v1668 = vunpack.c.h.b16 %v536
        %v1669 = vunpack.c.l.b16 %v537
        %v1670 = vunpack.c.h.b16 %v537
        %v1671 = vunpack.c.l.b16 %v538
        %v1672 = vunpack.c.h.b16 %v538
        %v1673 = vunpack.c.l.b16 %v539
        %v1674 = vunpack.c.h.b16 %v539
        %v1675 = vunpack.c.l.b16 %v540
        %v1676 = vunpack.c.h.b16 %v540
        %v1677 = vunpack.c.l.b16 %v541
        %v1678 = vunpack.c.h.b16 %v541
        %v1679 = vunpack.c.l.b16 %v542
        %v1680 = vunpack.c.h.b16 %v542
        %v1681 = vunpack.c.l.b16 %v543
        %v1682 = vunpack.c.h.b16 %v543
        %v1683 = vunpack.c.l.b16 %v544
        %v1684 = vunpack.c.h.b16 %v544
        %v1685 = vunpack.c.l.b16 %v545
        %v1686 = vunpack.c.h.b16 %v545
        %v1687 = vunpack.c.l.b16 %v546
        %v1688 = vunpack.c.h.b16 %v546
        %v1689 = vunpack.c.l.b16 %v547
        %v1690 = vunpack.c.h.b16 %v547
        %v1691 = vunpack.c.l.b16 %v548
        %v1692 = vunpack.c.h.b16 %v548
        %v1693 = vunpack.c.l.b16 %v549
        %v1694 = vunpack.c.h.b16 %v549
        %v1695 = vunpack.c.l.b16 %v550
        %v1696 = vunpack.c.h.b16 %v550
        %v1697 = vunpack.c.l.b16 %v551
        %v1698 = vunpack.c.h.b16 %v551
        %v1699 = vunpack.c.l.b16 %v552
        %v1700 = vunpack.c.h.b16 %v552
        %v1701 = vunpack.c.l.b16 %v553
        %v1702 = vunpack.c.h.b16 %v553
        %v1703 = vunpack.c.l.b16 %v554
        %v1704 = vunpack.c.h.b16 %v554
        %v1705 = vunpack.c.l.b16 %v555
        %v1706 = vunpack.c.h.b16 %v555
        %v1707 = vunpack.c.l.b16 %v556
        %v1708 = vunpack.c.h.b16 %v556
        %v1709 = vunpack.c.l.b16 %v557
        %v1710 = vunpack.c.h.b16 %v557
        %v1711 = vunpack.c.l.b16 %v558
        %v1712 = vunpack.c.h.b16 %v558
        %v1713 = vunpack.c.l.b16 %v559
        %v1714 = vunpack.c.h.b16 %v559
        %v1715 = vunpack.c.l.b16 %v560
        %v1716 = vunpack.c.h.b16 %v560
        %v1717 = vunpack.c.l.b16 %v561
        %v1718 = vunpack.c.h.b16 %v561
        %v1719 = vunpack.c.l.b16 %v562
        %v1720 = vunpack.c.h.b16 %v562
        %v1721 = vunpack.c.l.b16 %v563
        %v1722 = vunpack.c.h.b16 %v563
        %v1723 = vunpack.c.l.b16 %v564
        %v1724 = vunpack.c.h.b16 %v564
        %v1725 = vunpack.c.l.b16 %v565
        %v1726 = vunpack.c.h.b16 %v565
        %v1727 = vunpack.c.l.b16 %v566
        %v1728 = vunpack.c.h.b16 %v566
        %v1729 = vunpack.c.l.b16 %v567
        %v1730 = vunpack.c.h.b16 %v567
        %v1731 = vunpack.c.l.b16 %v568
        %v1732 = vunpack.c.h.b16 %v568
        %v1733 = vunpack.c.l.b16 %v569
        %v1734 = vunpack.c.h.b16 %v569
        %v1735 = vunpack.c.l.b16 %v570
        %v1736 = vunpack.c.h.b16 %v570
        %v1737 = vunpack.c.l.b16 %v571
        %v1738 = vunpack.c.h.b16 %v571
        %v1739 = vunpack.c.l.b16 %v572
        %v1740 = vunpack.c.h.b16 %v572
        %v1741 = vunpack.c.l.b16 %v573
        %v1742 = vunpack.c.h.b16 %v573
        %v1743 = vunpack.c.l.b16 %v574
        %v1744 = vunpack.c.h.b16 %v574
        %v1745 = vunpack.c.l.b16 %v575
        %v1746 = vunpack.c.h.b16 %v575
        %v1747 = vunpack.c.l.b16 %v576
        %v1748 = vunpack.c.h.b16 %v576
        %v1749 = vunpack.c.l.b16 %v577
        %v1750 = vunpack.c.h.b16 %v577
        %v1751 = vunpack.c.l.b16 %v578
        %v1752 = vunpack.c.h.b16 %v578
        %v1753 = vunpack.c.l.b16 %v579
        %v1754 = vunpack.c.h.b16 %v579
        %v1755 = vunpack.c.l.b16 %v580
        %v1756 = vunpack.c.h.b16 %v580
        %v1757 = vunpack.c.l.b16 %v581
        %v1758 = vunpack.c.h.b16 %v581
        %v1759 = vunpack.c.l.b16 %v582
        %v1760 = vunpack.c.h.b16 %v582
        %v1761 = vunpack.c.l.b16 %v583
        %v1762 = vunpack.c.h.b16 %v583
        %v1763 = vunpack.c.l.b16 %v584
        %v1764 = vunpack.c.h.b16 %v584
        %v1765 = vunpack.c.l.b16 %v585
        %v1766 = vunpack.c.h.b16 %v585
        %v1767 = vunpack.c.l.b16 %v586
        %v1768 = vunpack.c.h.b16 %v586
        %v1769 = vunpack.c.l.b16 %v587
        %v1770 = vunpack.c.h.b16 %v587
        %v1771 = vunpack.c.l.b16 %v588
        %v1772 = vunpack.c.h.b16 %v588
        %v1773 = vunpack.c.l.b16 %v589
        %v1774 = vunpack.c.h.b16 %v589
        %v1775 = vunpack.c.l.b16 %v590
        %v1776 = vunpack.c.h.b16 %v590
        %v1777 = vunpack.c.l.b16 %v591
        %v1778 = vunpack.c.h.b16 %v591
        %v1779 = vunpack.c.l.b16 %v592
        %v1780 = vunpack.c.h.b16 %v592
        %v1781 = vunpack.c.l.b16 %v593
        %v1782 = vunpack.c.h.b16 %v593
        %v1783 = vunpack.c.l.b16 %v594
        %v1784 = vunpack.c.h.b16 %v594
        %v1785 = vunpack.c.l.b16 %v595
        %v1786 = vunpack.c.h.b16 %v595
        %v1787 = vunpack.c.l.b16 %v596
        %v1788 = vunpack.c.h.b16 %v596
        %v1789 = vunpack.c.l.b16 %v597
        %v1790 = vunpack.c.h.b16 %v597
        %v1791 = vunpack.c.l.b16 %v598
        %v1792 = vunpack.c.h.b16 %v598
        %v1793 = vunpack.c.l.b16 %v599
        %v1794 = vunpack.c.h.b16 %v599
        %v1795 = vunpack.c.l.b16 %v600
        %v1796 = vunpack.c.h.b16 %v600
        %v1797 = vunpack.c.l.b16 %v601
        %v1798 = vunpack.c.h.b16 %v601
        %v1799 = vunpack.c.l.b16 %v602
        %v1800 = vunpack.c.h.b16 %v602
        %v1801 = vunpack.c.l.b16 %v603
        %v1802 = vunpack.c.h.b16 %v603
        %v1803 = vunpack.c.l.b16 %v604
        %v1804 = vunpack.c.h.b16 %v604
        %v1805 = vunpack.c.l.b16 %v605
        %v1806 = vunpack.c.h.b16 %v605
        %v1807 = vunpack.c.l.b16 %v606
        %v1808 = vunpack.c.h.b16 %v606
        %v1809 = vunpack.c.l.b16 %v607
        %v1810 = vunpack.c.h.b16 %v607
        %v1811 = vunpack.c.l.b16 %v608
        %v1812 = vunpack.c.h.b16 %v608
        %v1813 = vunpack.c.l.b16 %v609
        %v1814 = vunpack.c.h.b16 %v609
        %v1815 = vunpack.c.l.b16 %v610
        %v1816 = vunpack.c.h.b16 %v610
        %v1817 = vunpack.c.l.b16 %v611
        %v1818 = vunpack.c.h.b16 %v611
        %v1819 = vunpack.c.l.b16 %v612
        %v1820 = vunpack.c.h.b16 %v612
        %v1821 = vunpack.c.l.b16 %v613
        %v1822 = vunpack.c.h.b16 %v613
        %v1823 = vunpack.c.l.b16 %v614
        %v1824 = vunpack.c.h.b16 %v614
        %v1825 = vunpack.c.l.b16 %v615
        %v1826 = vunpack.c.h.b16 %v615
        %v1827 = vunpack.c.l.b16 %v616
        %v1828 = vunpack.c.h.b16 %v616
        %v1829 = vunpack.c.l.b16 %v617
        %v1830 = vunpack.c.h.b16 %v617
        %v1831 = vunpack.c.l.b16 %v618
        %v1832 = vunpack.c.h.b16 %v618
        %v1833 = vunpack.c.l.b16 %v619
        %v1834 = vunpack.c.h.b16 %v619
        %v1835 = vunpack.c.l.b16 %v620
        %v1836 = vunpack.c.h.b16 %v620
        %v1837 = vunpack.c.l.b16 %v621
        %v1838 = vunpack.c.h.b16 %v621
        %v1839 = vunpack.c.l.b16 %v622
        %v1840 = vunpack.c.h.b16 %v622
        %v1841 = vunpack.c.l.b16 %v623
        %v1842 = vunpack.c.h.b16 %v623
        %v1843 = vunpack.c.l.b16 %v624
        %v1844 = vunpack.c.h.b16 %v624
        %v1845 = vunpack.c.l.b16 %v625
        %v1846 = vunpack.c.h.b16 %v625
        %v1847 = vunpack.c.l.b16 %v626
        %v1848 = vunpack.c.h.b16 %v626
        %v1849 = vunpack.c.l.b16 %v627
        %v1850 = vunpack.c.h.b16 %v627
        %v1851 = vunpack.c.l.b16 %v628
        %v1852 = vunpack.c.h.b16 %v628
        %v1853 = vunpack.c.l.b16 %v629
        %v1854 = vunpack.c.h.b16 %v629
        %v1855 = vunpack.c.l.b16 %v630
        %v1856 = vunpack.c.h.b16 %v630
        %v1857 = vunpack.c.l.b16 %v631
        %v1858 = vunpack.c.h.b16 %v631
        %v1859 = vunpack.c.l.b16 %v632
        %v1860 = vunpack.c.h.b16 %v632
        %v1861 = vunpack.c.l.b16 %v633
        %v1862 = vunpack.c.h.b16 %v633
        %v1863 = vunpack.c.l.b16 %v634
        %v1864 = vunpack.c.h.b16 %v634
        %v1865 = vunpack.c.l.b16 %v635
        %v1866 = vunpack.c.h.b16 %v635
        %v1867 = vunpack.c.l.b16 %v636
        %v1868 = vunpack.c.h.b16 %v636
        %v1869 = vunpack.c.l.b16 %v637
        %v1870 = vunpack.c.h.b16 %v637
        %v1871 = vunpack.c.l.b16 %v638
        %v1872 = vunpack.c.h.b16 %v638
        %v1873 = vunpack.c.l.b16 %v639
        %v1874 = vunpack.c.h.b16 %v639
        %v1875 = vunpack.c.l.b16 %v640
        %v1876 = vunpack.c.h.b16 %v640
        %v1877 = vunpack.c.l.b16 %v641
        %v1878 = vunpack.c.h.b16 %v641
        %v1879 = vunpack.c.l.b16 %v642
        %v1880 = vunpack.c.h.b16 %v642
        %v1881 = vunpack.c.l.b16 %v643
        %v1882 = vunpack.c.h.b16 %v643
        %v1883 = vunpack.c.l.b16 %v644
        %v1884 = vunpack.c.h.b16 %v644
        %v1885 = vunpack.c.l.b16 %v645
        %v1886 = vunpack.c.h.b16 %v645
        %v1887 = vunpack.c.l.b16 %v646
        %v1888 = vunpack.c.h.b16 %v646
        %v1889 = vunpack.c.l.b16 %v647
        %v1890 = vunpack.c.h.b16 %v647
        %v1891 = vunpack.c.l.b16 %v648
        %v1892 = vunpack.c.h.b16 %v648
        %v1893 = vunpack.c.l.b16 %v649
        %v1894 = vunpack.c.h.b16 %v649
        %v1895 = vunpack.c.l.b16 %v650
        %v1896 = vunpack.c.h.b16 %v650
        %v1897 = vunpack.c.l.b16 %v651
        %v1898 = vunpack.c.h.b16 %v651
        %v1899 = vunpack.c.l.b16 %v652
        %v1900 = vunpack.c.h.b16 %v652
        %v1901 = vunpack.c.l.b16 %v653
        %v1902 = vunpack.c.h.b16 %v653
        %v1903 = vunpack.c.l.b16 %v654
        %v1904 = vunpack.c.h.b16 %v654
        %v1905 = vunpack.c.l.b16 %v655
        %v1906 = vunpack.c.h.b16 %v655
        %v1907 = vunpack.c.l.b16 %v656
        %v1908 = vunpack.c.h.b16 %v656
        %v1909 = vunpack.c.l.b16 %v657
        %v1910 = vunpack.c.h.b16 %v657
        %v1911 = vunpack.c.l.b16 %v658
        %v1912 = vunpack.c.h.b16 %v658
        %v1913 = vunpack.c.l.b16 %v659
        %v1914 = vunpack.c.h.b16 %v659
        %v1915 = vunpack.c.l.b16 %v660
        %v1916 = vunpack.c.h.b16 %v660
        %v1917 = vunpack.c.l.b16 %v661
        %v1918 = vunpack.c.h.b16 %v661
        %v1919 = vunpack.c.l.b16 %v662
        %v1920 = vunpack.c.h.b16 %v662
        %v1921 = vunpack.c.l.b16 %v663
        %v1922 = vunpack.c.h.b16 %v663
        %v1923 = vunpack.c.l.b16 %v664
        %v1924 = vunpack.c.h.b16 %v664
        %v1925 = vunpack.c.l.b16 %v665
        %v1926 = vunpack.c.h.b16 %v665
        %v1927 = vunpack.c.l.b16 %v666
        %v1928 = vunpack.c.h.b16 %v666
        %v1929 = vunpack.c.l.b16 %v667
        %v1930 = vunpack.c.h.b16 %v667
        %v1931 = vunpack.c.l.b16 %v668
        %v1932 = vunpack.c.h.b16 %v668
        %v1933 = vunpack.c.l.b16 %v669
        %v1934 = vunpack.c.h.b16 %v669
        %v1935 = vunpack.c.l.b16 %v670
        %v1936 = vunpack.c.h.b16 %v670
        %v1937 = vunpack.c.l.b16 %v671
        %v1938 = vunpack.c.h.b16 %v671
        %v1939 = vunpack.c.l.b16 %v672
        %v1940 = vunpack.c.h.b16 %v672
        %v1941 = vunpack.c.l.b16 %v673
        %v1942 = vunpack.c.h.b16 %v673
        %v1943 = vunpack.c.l.b16 %v674
        %v1944 = vunpack.c.h.b16 %v674
        %v1945 = vunpack.c.l.b16 %v675
        %v1946 = vunpack.c.h.b16 %v675
        %v1947 = vunpack.c.l.b16 %v676
        %v1948 = vunpack.c.h.b16 %v676
        %v1949 = vunpack.c.l.b16 %v677
        %v1950 = vunpack.c.h.b16 %v677
        %v1951 = vunpack.c.l.b16 %v678
        %v1952 = vunpack.c.h.b16 %v678
        %v1953 = vunpack.c.l.b16 %v679
        %v1954 = vunpack.c.h.b16 %v679
        %v1955 = vunpack.c.l.b16 %v680
        %v1956 = vunpack.c.h.b16 %v680
        %v1957 = vunpack.c.l.b16 %v681
        %v1958 = vunpack.c.h.b16 %v681
        %v1959 = vunpack.c.l.b16 %v682
        %v1960 = vunpack.c.h.b16 %v682
        %v1961 = vunpack.c.l.b16 %v683
        %v1962 = vunpack.c.h.b16 %v683
        %v1963 = vunpack.c.l.b16 %v684
        %v1964 = vunpack.c.h.b16 %v684
        %v1965 = vunpack.c.l.b16 %v685
        %v1966 = vunpack.c.h.b16 %v685
        %v1967 = vunpack.c.l.b16 %v686
        %v1968 = vunpack.c.h.b16 %v686
        %v1969 = vunpack.c.l.b16 %v687
        %v1970 = vunpack.c.h.b16 %v687
        %v1971 = vunpack.c.l.b16 %v688
        %v1972 = vunpack.c.h.b16 %v688
        %v1973 = vunpack.c.l.b16 %v689
        %v1974 = vunpack.c.h.b16 %v689
        %v1975 = vunpack.c.l.b16 %v690
        %v1976 = vunpack.c.h.b16 %v690
        %v1977 = vunpack.c.l.b16 %v691
        %v1978 = vunpack.c.h.b16 %v691
        %v1979 = vunpack.c.l.b16 %v692
        %v1980 = vunpack.c.h.b16 %v692
        %v1981 = vunpack.c.l.b16 %v693
        %v1982 = vunpack.c.h.b16 %v693
        %v1983 = vunpack.c.l.b16 %v694
        %v1984 = vunpack.c.h.b16 %v694
        %v1985 = vunpack.c.l.b16 %v695
        %v1986 = vunpack.c.h.b16 %v695
        %v1987 = vunpack.c.l.b16 %v696
        %v1988 = vunpack.c.h.b16 %v696
        %v1989 = vunpack.c.l.b16 %v697
        %v1990 = vunpack.c.h.b16 %v697
        %v1991 = vunpack.c.l.b16 %v698
        %v1992 = vunpack.c.h.b16 %v698
        %v1993 = vunpack.c.l.b16 %v699
        %v1994 = vunpack.c.h.b16 %v699
        %v1995 = vunpack.c.l.b16 %v700
        %v1996 = vunpack.c.h.b16 %v700
        %v1997 = vunpack.c.l.b16 %v701
        %v1998 = vunpack.c.h.b16 %v701
        %v1999 = vunpack.c.l.b16 %v702
        %v2000 = vunpack.c.h.b16 %v702
        %v2001 = vunpack.c.l.b16 %v703
        %v2002 = vunpack.c.h.b16 %v703
        %v2003 = vunpack.c.l.b16 %v704
        %v2004 = vunpack.c.h.b16 %v704
        %v2005 = vunpack.c.l.b16 %v705
        %v2006 = vunpack.c.h.b16 %v705
        %v2007 = vunpack.c.l.b16 %v706
        %v2008 = vunpack.c.h.b16 %v706
        %v2009 = vunpack.c.l.b16 %v707
        %v2010 = vunpack.c.h.b16 %v707
        %v2011 = vunpack.c.l.b16 %v708
        %v2012 = vunpack.c.h.b16 %v708
        %v2013 = vunpack.c.l.b16 %v709
        %v2014 = vunpack.c.h.b16 %v709
        %v2015 = vunpack.c.l.b16 %v710
        %v2016 = vunpack.c.h.b16 %v710
        %v2017 = vunpack.c.l.b16 %v711
        %v2018 = vunpack.c.h.b16 %v711
        %v2019 = vunpack.c.l.b16 %v712
        %v2020 = vunpack.c.h.b16 %v712
        %v2021 = vunpack.c.l.b16 %v713
        %v2022 = vunpack.c.h.b16 %v713
        %v2023 = vunpack.c.l.b16 %v714
        %v2024 = vunpack.c.h.b16 %v714
        %v2025 = vunpack.c.l.b16 %v715
        %v2026 = vunpack.c.h.b16 %v715
        %v2027 = vunpack.c.l.b16 %v716
        %v2028 = vunpack.c.h.b16 %v716
        %v2029 = vunpack.c.l.b16 %v717
        %v2030 = vunpack.c.h.b16 %v717
        %v2031 = vunpack.c.l.b16 %v718
        %v2032 = vunpack.c.h.b16 %v718
        %v2033 = vunpack.c.l.b16 %v719
        %v2034 = vunpack.c.h.b16 %v719
        %v2035 = vunpack.c.l.b16 %v720
        %v2036 = vunpack.c.h.b16 %v720
        %v2037 = vunpack.c.l.b16 %v721
        %v2038 = vunpack.c.h.b16 %v721
        %v2039 = vunpack.c.l.b16 %v722
        %v2040 = vunpack.c.h.b16 %v722
        %v2041 = vunpack.c.l.b16 %v723
        %v2042 = vunpack.c.h.b16 %v723
        %v2043 = vunpack.c.l.b16 %v724
        %v2044 = vunpack.c.h.b16 %v724
        %v2045 = vunpack.c.l.b16 %v725
        %v2046 = vunpack.c.h.b16 %v725
        %v2047 = vunpack.c.l.b16 %v726
        %v2048 = vunpack.c.h.b16 %v726
        %v2049 = vunpack.c.l.b16 %v727
        %v2050 = vunpack.c.h.b16 %v727
        %v2051 = vunpack.c.l.b16 %v728
        %v2052 = vunpack.c.h.b16 %v728
        %v2053 = vunpack.c.l.b16 %v729
        %v2054 = vunpack.c.h.b16 %v729
        %v2055 = vunpack.c.l.b16 %v730
        %v2056 = vunpack.c.h.b16 %v730
        %v2057 = vunpack.c.l.b16 %v731
        %v2058 = vunpack.c.h.b16 %v731
        %v2059 = vunpack.c.l.b16 %v732
        %v2060 = vunpack.c.h.b16 %v732
        %v2061 = vunpack.c.l.b16 %v733
        %v2062 = vunpack.c.h.b16 %v733
        %v2063 = vunpack.c.l.b16 %v734
        %v2064 = vunpack.c.h.b16 %v734
        %v2065 = vunpack.c.l.b16 %v735
        %v2066 = vunpack.c.h.b16 %v735
        %v2067 = vunpack.c.l.b16 %v736
        %v2068 = vunpack.c.h.b16 %v736
        %v2069 = vunpack.c.l.b16 %v737
        %v2070 = vunpack.c.h.b16 %v737
        %v2071 = vunpack.c.l.b16 %v738
        %v2072 = vunpack.c.h.b16 %v738
        %v2073 = vunpack.c.l.b16 %v739
        %v2074 = vunpack.c.h.b16 %v739
        %v2075 = vunpack.c.l.b16 %v740
        %v2076 = vunpack.c.h.b16 %v740
        %v2077 = vunpack.c.l.b16 %v741
        %v2078 = vunpack.c.h.b16 %v741
        %v2079 = vunpack.c.l.b16 %v742
        %v2080 = vunpack.c.h.b16 %v742
        %v2081 = vunpack.c.l.b16 %v743
        %v2082 = vunpack.c.h.b16 %v743
        %v2083 = vunpack.c.l.b16 %v744
        %v2084 = vunpack.c.h.b16 %v744
        %v2085 = vunpack.c.l.b16 %v745
        %v2086 = vunpack.c.h.b16 %v745
        %v2087 = vunpack.c.l.b16 %v746
        %v2088 = vunpack.c.h.b16 %v746
        %v2089 = vunpack.c.l.b16 %v747
        %v2090 = vunpack.c.h.b16 %v747
        %v2091 = vunpack.c.l.b16 %v748
        %v2092 = vunpack.c.h.b16 %v748
        %v2093 = vunpack.c.l.b16 %v749
        %v2094 = vunpack.c.h.b16 %v749
        %v2095 = vunpack.c.l.b16 %v750
        %v2096 = vunpack.c.h.b16 %v750
        %v2097 = vunpack.c.l.b16 %v751
        %v2098 = vunpack.c.h.b16 %v751
        %v2099 = vunpack.c.l.b16 %v752
        %v2100 = vunpack.c.h.b16 %v752
        %v2101 = vunpack.c.l.b16 %v753
        %v2102 = vunpack.c.h.b16 %v753
        %v2103 = vunpack.c.l.b16 %v754
        %v2104 = vunpack.c.h.b16 %v754
        %v2105 = vunpack.c.l.b16 %v755
        %v2106 = vunpack.c.h.b16 %v755
        %v2107 = vunpack.c.l.b16 %v756
        %v2108 = vunpack.c.h.b16 %v756
        %v2109 = vunpack.c.l.b16 %v757
        %v2110 = vunpack.c.h.b16 %v757
        %v2111 = vunpack.c.l.b16 %v758
        %v2112 = vunpack.c.h.b16 %v758
        %v2113 = vunpack.c.l.b16 %v759
        %v2114 = vunpack.c.h.b16 %v759
        %v2115 = vunpack.c.l.b16 %v760
        %v2116 = vunpack.c.h.b16 %v760
        %v2117 = vunpack.c.l.b16 %v761
        %v2118 = vunpack.c.h.b16 %v761
        %v2119 = vunpack.c.l.b16 %v762
        %v2120 = vunpack.c.h.b16 %v762
        %v2121 = vunpack.c.l.b16 %v763
        %v2122 = vunpack.c.h.b16 %v763
        %v2123 = vunpack.c.l.b16 %v764
        %v2124 = vunpack.c.h.b16 %v764
        %v2125 = vunpack.c.l.b16 %v765
        %v2126 = vunpack.c.h.b16 %v765
        %v2127 = vunpack.c.l.b16 %v766
        %v2128 = vunpack.c.h.b16 %v766
        %v2129 = vunpack.c.l.b16 %v767
        %v2130 = vunpack.c.h.b16 %v767
        %v2131 = vunpack.c.l.b16 %v768
        %v2132 = vunpack.c.h.b16 %v768
        %v2133 = vunpack.c.l.b16 %v769
        %v2134 = vunpack.c.h.b16 %v769
        %v2135 = vunpack.c.l.b16 %v770
        %v2136 = vunpack.c.h.b16 %v770
        %v2137 = vunpack.c.l.b16 %v771
        %v2138 = vunpack.c.h.b16 %v771
        %v2139 = vunpack.c.l.b16 %v772
        %v2140 = vunpack.c.h.b16 %v772
        %v2141 = vunpack.c.l.b16 %v773
        %v2142 = vunpack.c.h.b16 %v773
        %v2143 = vunpack.c.l.b16 %v774
        %v2144 = vunpack.c.h.b16 %v774
        %v2145 = vunpack.c.l.b16 %v775
        %v2146 = vunpack.c.h.b16 %v775
        %v2147 = vunpack.c.l.b16 %v776
        %v2148 = vunpack.c.h.b16 %v776
        %v2149 = vunpack.c.l.b16 %v777
        %v2150 = vunpack.c.h.b16 %v777
        %v2151 = vunpack.c.l.b16 %v778
        %v2152 = vunpack.c.h.b16 %v778
        %v2153 = vunpack.c.l.b16 %v779
        %v2154 = vunpack.c.h.b16 %v779
        %v2155 = vunpack.c.l.b16 %v780
        %v2156 = vunpack.c.h.b16 %v780
        %v2157 = vunpack.c.l.b16 %v781
        %v2158 = vunpack.c.h.b16 %v781
        %v2159 = vunpack.c.l.b16 %v782
        %v2160 = vunpack.c.h.b16 %v782
        %v2161 = vunpack.c.l.b16 %v783
        %v2162 = vunpack.c.h.b16 %v783
        %v2163 = vunpack.c.l.b16 %v784
        %v2164 = vunpack.c.h.b16 %v784
        %v2165 = vunpack.c.l.b16 %v785
        %v2166 = vunpack.c.h.b16 %v785
        %v2167 = vunpack.c.l.b16 %v786
        %v2168 = vunpack.c.h.b16 %v786
        %v2169 = vunpack.c.l.b16 %v787
        %v2170 = vunpack.c.h.b16 %v787
        %v2171 = vunpack.c.l.b16 %v788
        %v2172 = vunpack.c.h.b16 %v788
        %v2173 = vunpack.c.l.b16 %v789
        %v2174 = vunpack.c.h.b16 %v789
        %v2175 = vunpack.c.l.b16 %v790
        %v2176 = vunpack.c.h.b16 %v790
        %v2177 = vunpack.c.l.b16 %v791
        %v2178 = vunpack.c.h.b16 %v791
        %v2179 = vunpack.c.l.b16 %v792
        %v2180 = vunpack.c.h.b16 %v792
        %v2181 = vunpack.c.l.b16 %v793
        %v2182 = vunpack.c.h.b16 %v793
        %v2183 = vunpack.c.l.b16 %v794
        %v2184 = vunpack.c.h.b16 %v794
        %v2185 = vunpack.c.l.b16 %v795
        %v2186 = vunpack.c.h.b16 %v795
        %v2187 = vunpack.c.l.b16 %v796
        %v2188 = vunpack.c.h.b16 %v796
        %v2189 = vunpack.c.l.b16 %v797
        %v2190 = vunpack.c.h.b16 %v797
        %v2191 = vunpack.c.l.b16 %v798
        %v2192 = vunpack.c.h.b16 %v798
        %v2193 = vunpack.c.l.b16 %v799
        %v2194 = vunpack.c.h.b16 %v799
        %v2195 = vunpack.c.l.b16 %v800
        %v2196 = vunpack.c.h.b16 %v800
        %v2197 = vunpack.c.l.b16 %v801
        %v2198 = vunpack.c.h.b16 %v801
        %v2199 = vunpack.c.l.b16 %v802
        %v2200 = vunpack.c.h.b16 %v802
        %v2201 = vunpack.c.l.b16 %v803
        %v2202 = vunpack.c.h.b16 %v803
        %v2203 = vunpack.c.l.b16 %v804
        %v2204 = vunpack.c.h.b16 %v804
        %v2205 = vunpack.c.l.b16 %v805
        %v2206 = vunpack.c.h.b16 %v805
        %v2207 = vunpack.c.l.b16 %v806
        %v2208 = vunpack.c.h.b16 %v806
        %v2209 = vunpack.c.l.b16 %v807
        %v2210 = vunpack.c.h.b16 %v807
        %v2211 = vunpack.c.l.b16 %v808
        %v2212 = vunpack.c.h.b16 %v808
        %v2213 = vunpack.c.l.b16 %v809
        %v2214 = vunpack.c.h.b16 %v809
        %v2215 = vunpack.c.l.b16 %v810
        %v2216 = vunpack.c.h.b16 %v810
        %v2217 = vunpack.c.l.b16 %v811
        %v2218 = vunpack.c.h.b16 %v811
        %v2219 = vunpack.c.l.b16 %v812
        %v2220 = vunpack.c.h.b16 %v812
        %v2221 = vunpack.c.l.b16 %v813
        %v2222 = vunpack.c.h.b16 %v813
        %v2223 = vunpack.c.l.b16 %v814
        %v2224 = vunpack.c.h.b16 %v814
        %v2225 = vunpack.c.l.b16 %v815
        %v2226 = vunpack.c.h.b16 %v815
        %v2227 = vunpack.c.l.b16 %v816
        %v2228 = vunpack.c.h.b16 %v816
        %v2229 = vunpack.c.l.b16 %v817
        %v2230 = vunpack.c.h.b16 %v817
        %v2231 = vunpack.c.l.b16 %v818
        %v2232 = vunpack.c.h.b16 %v818
        %v2233 = vunpack.c.l.b16 %v819
        %v2234 = vunpack.c.h.b16 %v819
        %v2235 = vunpack.c.l.b16 %v820
        %v2236 = vunpack.c.h.b16 %v820
        %v2237 = vunpack.c.l.b16 %v821
        %v2238 = vunpack.c.h.b16 %v821
        %v2239 = vunpack.c.l.b16 %v822
        %v2240 = vunpack.c.h.b16 %v822
        %v2241 = vunpack.c.l.b16 %v823
        %v2242 = vunpack.c.h.b16 %v823
        %v2243 = vunpack.c.l.b16 %v824
        %v2244 = vunpack.c.h.b16 %v824
        %v2245 = vunpack.c.l.b16 %v825
        %v2246 = vunpack.c.h.b16 %v825
        %v2247 = vunpack.c.l.b16 %v826
        %v2248 = vunpack.c.h.b16 %v826
        %v2249 = vpack.c.b16 %v1361, %v1353
        %v2250 = vpack.c.b16 %v1362, %v1354
        %v2251 = vpack.c.b16 %v1363, %v1355
        %v2252 = vpack.c.b16 %v1364, %v1356
        %v2253 = vpack.c.b16 %v1365, %v1357
        %v2254 = vpack.c.b16 %v1366, %v1358
        %v2255 = vpack.c.b16 %v1367, %v1359
        %v2256 = vpack.c.b16 %v1368, %v1360
        %v2257 = vpack.c.b16 %v1377, %v1369
        %v2258 = vpack.c.b16 %v1378, %v1370
        %v2259 = vpack.c.b16 %v1379, %v1371
        %v2260 = vpack.c.b16 %v1380, %v1372
        %v2261 = vpack.c.b16 %v1381, %v1373
        %v2262 = vpack.c.b16 %v1382, %v1374
        %v2263 = vpack.c.b16 %v1383, %v1375
        %v2264 = vpack.c.b16 %v1384, %v1376
        %v2265 = vpack.c.b16 %v1393, %v1385
        %v2266 = vpack.c.b16 %v1394, %v1386
        %v2267 = vpack.c.b16 %v1395, %v1387
        %v2268 = vpack.c.b16 %v1396, %v1388
        %v2269 = vpack.c.b16 %v1397, %v1389
        %v2270 = vpack.c.b16 %v1398, %v1390
        %v2271 = vpack.c.b16 %v1399, %v1391
        %v2272 = vpack.c.b16 %v1400, %v1392
        %v2273 = vpack.c.b16 %v1409, %v1401
        %v2274 = vpack.c.b16 %v1410, %v1402
        %v2275 = vpack.c.b16 %v1411, %v1403
        %v2276 = vpack.c.b16 %v1412, %v1404
        %v2277 = vpack.c.b16 %v1413, %v1405
        %v2278 = vpack.c.b16 %v1414, %v1406
        %v2279 = vpack.c.b16 %v1415, %v1407
        %v2280 = vpack.c.b16 %v1416, %v1408
        %v2281 = vpack.c.b16 %v1425, %v1417
        %v2282 = vpack.c.b16 %v1426, %v1418
        %v2283 = vpack.c.b16 %v1427, %v1419
        %v2284 = vpack.c.b16 %v1428, %v1420
        %v2285 = vpack.c.b16 %v1429, %v1421
        %v2286 = vpack.c.b16 %v1430, %v1422
        %v2287 = vpack.c.b16 %v1431, %v1423
        %v2288 = vpack.c.b16 %v1432, %v1424
        %v2289 = vpack.c.b16 %v1441, %v1433
        %v2290 = vpack.c.b16 %v1442, %v1434
        %v2291 = vpack.c.b16 %v1443, %v1435
        %v2292 = vpack.c.b16 %v1444, %v1436
        %v2293 = vpack.c.b16 %v1445, %v1437
        %v2294 = vpack.c.b16 %v1446, %v1438
        %v2295 = vpack.c.b16 %v1447, %v1439
        %v2296 = vpack.c.b16 %v1448, %v1440
        %v2297 = vpack.c.b16 %v1457, %v1449
        %v2298 = vpack.c.b16 %v1458, %v1450
        %v2299 = vpack.c.b16 %v1459, %v1451
        %v2300 = vpack.c.b16 %v1460, %v1452
        %v2301 = vpack.c.b16 %v1461, %v1453
        %v2302 = vpack.c.b16 %v1462, %v1454
        %v2303 = vpack.c.b16 %v1463, %v1455
        %v2304 = vpack.c.b16 %v1464, %v1456
        %v2305 = vpack.c.b16 %v1473, %v1465
        %v2306 = vpack.c.b16 %v1474, %v1466
        %v2307 = vpack.c.b16 %v1475, %v1467
        %v2308 = vpack.c.b16 %v1476, %v1468
        %v2309 = vpack.c.b16 %v1477, %v1469
        %v2310 = vpack.c.b16 %v1478, %v1470
        %v2311 = vpack.c.b16 %v1479, %v1471
        %v2312 = vpack.c.b16 %v1480, %v1472
        %v2313 = vpack.c.b16 %v1489, %v1481
        %v2314 = vpack.c.b16 %v1490, %v1482
        %v2315 = vpack.c.b16 %v1491, %v1483
        %v2316 = vpack.c.b16 %v1492, %v1484
        %v2317 = vpack.c.b16 %v1493, %v1485
        %v2318 = vpack.c.b16 %v1494, %v1486
        %v2319 = vpack.c.b16 %v1495, %v1487
        %v2320 = vpack.c.b16 %v1496, %v1488
        %v2321 = vpack.c.b16 %v1505, %v1497
        %v2322 = vpack.c.b16 %v1506, %v1498
        %v2323 = vpack.c.b16 %v1507, %v1499
        %v2324 = vpack.c.b16 %v1508, %v1500
        %v2325 = vpack.c.b16 %v1509, %v1501
        %v2326 = vpack.c.b16 %v1510, %v1502
        %v2327 = vpack.c.b16 %v1511, %v1503
        %v2328 = vpack.c.b16 %v1512, %v1504
        %v2329 = vpack.c.b16 %v1521, %v1513
        %v2330 = vpack.c.b16 %v1522, %v1514
        %v2331 = vpack.c.b16 %v1523, %v1515
        %v2332 = vpack.c.b16 %v1524, %v1516
        %v2333 = vpack.c.b16 %v1525, %v1517
        %v2334 = vpack.c.b16 %v1526, %v1518
        %v2335 = vpack.c.b16 %v1527, %v1519
        %v2336 = vpack.c.b16 %v1528, %v1520
        %v2337 = vpack.c.b16 %v1537, %v1529
        %v2338 = vpack.c.b16 %v1538, %v1530
        %v2339 = vpack.c.b16 %v1539, %v1531
        %v2340 = vpack.c.b16 %v1540, %v1532
        %v2341 = vpack.c.b16 %v1541, %v1533
        %v2342 = vpack.c.b16 %v1542, %v1534
        %v2343 = vpack.c.b16 %v1543, %v1535
        %v2344 = vpack.c.b16 %v1544, %v1536
        %v2345 = vpack.c.b16 %v1553, %v1545
        %v2346 = vpack.c.b16 %v1554, %v1546
        %v2347 = vpack.c.b16 %v1555, %v1547
        %v2348 = vpack.c.b16 %v1556, %v1548
        %v2349 = vpack.c.b16 %v1557, %v1549
        %v2350 = vpack.c.b16 %v1558, %v1550
        %v2351 = vpack.c.b16 %v1559, %v1551
        %v2352 = vpack.c.b16 %v1560, %v1552
        %v2353 = vpack.c.b16 %v1569, %v1561
        %v2354 = vpack.c.b16 %v1570, %v1562
        %v2355 = vpack.c.b16 %v1571, %v1563
        %v2356 = vpack.c.b16 %v1572, %v1564
        %v2357 = vpack.c.b16 %v1573, %v1565
        %v2358 = vpack.c.b16 %v1574, %v1566
        %v2359 = vpack.c.b16 %v1575, %v1567
        %v2360 = vpack.c.b16 %v1576, %v1568
        %v2361 = vpack.c.b16 %v1585, %v1577
        %v2362 = vpack.c.b16 %v1586, %v1578
        %v2363 = vpack.c.b16 %v1587, %v1579
        %v2364 = vpack.c.b16 %v1588, %v1580
        %v2365 = vpack.c.b16 %v1589, %v1581
        %v2366 = vpack.c.b16 %v1590, %v1582
        %v2367 = vpack.c.b16 %v1591, %v1583
        %v2368 = vpack.c.b16 %v1592, %v1584
        %v2369 = vpack.c.b16 %v1601, %v1593
        %v2370 = vpack.c.b16 %v1602, %v1594
        %v2371 = vpack.c.b16 %v1603, %v1595
        %v2372 = vpack.c.b16 %v1604, %v1596
        %v2373 = vpack.c.b16 %v1605, %v1597
        %v2374 = vpack.c.b16 %v1606, %v1598
        %v2375 = vpack.c.b16 %v1607, %v1599
        %v2376 = vpack.c.b16 %v1608, %v1600
        %v2377 = vpack.c.b16 %v1617, %v1609
        %v2378 = vpack.c.b16 %v1618, %v1610
        %v2379 = vpack.c.b16 %v1619, %v1611
        %v2380 = vpack.c.b16 %v1620, %v1612
        %v2381 = vpack.c.b16 %v1621, %v1613
        %v2382 = vpack.c.b16 %v1622, %v1614
        %v2383 = vpack.c.b16 %v1623, %v1615
        %v2384 = vpack.c.b16 %v1624, %v1616
        %v2385 = vpack.c.b16 %v1633, %v1625
        %v2386 = vpack.c.b16 %v1634, %v1626
        %v2387 = vpack.c.b16 %v1635, %v1627
        %v2388 = vpack.c.b16 %v1636, %v1628
        %v2389 = vpack.c.b16 %v1637, %v1629
        %v2390 = vpack.c.b16 %v1638, %v1630
        %v2391 = vpack.c.b16 %v1639, %v1631
        %v2392 = vpack.c.b16 %v1640, %v1632
        %v2393 = vpack.c.b16 %v1649, %v1641
        %v2394 = vpack.c.b16 %v1650, %v1642
        %v2395 = vpack.c.b16 %v1651, %v1643
        %v2396 = vpack.c.b16 %v1652, %v1644
        %v2397 = vpack.c.b16 %v1653, %v1645
        %v2398 = vpack.c.b16 %v1654, %v1646
        %v2399 = vpack.c.b16 %v1655, %v1647
        %v2400 = vpack.c.b16 %v1656, %v1648
        %v2401 = vpack.c.b16 %v1665, %v1657
        %v2402 = vpack.c.b16 %v1666, %v1658
        %v2403 = vpack.c.b16 %v1667, %v1659
        %v2404 = vpack.c.b16 %v1668, %v1660
        %v2405 = vpack.c.b16 %v1669, %v1661
        %v2406 = vpack.c.b16 %v1670, %v1662
        %v2407 = vpack.c.b16 %v1671, %v1663
        %v2408 = vpack.c.b16 %v1672, %v1664
        %v2409 = vpack.c.b16 %v1681, %v1673
        %v2410 = vpack.c.b16 %v1682, %v1674
        %v2411 = vpack.c.b16 %v1683, %v1675
        %v2412 = vpack.c.b16 %v1684, %v1676
        %v2413 = vpack.c.b16 %v1685, %v1677
        %v2414 = vpack.c.b16 %v1686, %v1678
        %v2415 = vpack.c.b16 %v1687, %v1679
        %v2416 = vpack.c.b16 %v1688, %v1680
        %v2417 = vpack.c.b16 %v1697, %v1689
        %v2418 = vpack.c.b16 %v1698, %v1690
        %v2419 = vpack.c.b16 %v1699, %v1691
        %v2420 = vpack.c.b16 %v1700, %v1692
        %v2421 = vpack.c.b16 %v1701, %v1693
        %v2422 = vpack.c.b16 %v1702, %v1694
        %v2423 = vpack.c.b16 %v1703, %v1695
        %v2424 = vpack.c.b16 %v1704, %v1696
        %v2425 = vpack.c.b16 %v1713, %v1705
        %v2426 = vpack.c.b16 %v1714, %v1706
        %v2427 = vpack.c.b16 %v1715, %v1707
        %v2428 = vpack.c.b16 %v1716, %v1708
        %v2429 = vpack.c.b16 %v1717, %v1709
        %v2430 = vpack.c.b16 %v1718, %v1710
        %v2431 = vpack.c.b16 %v1719, %v1711
        %v2432 = vpack.c.b16 %v1720, %v1712
        %v2433 = vpack.c.b16 %v1729, %v1721
        %v2434 = vpack.c.b16 %v1730, %v1722
        %v2435 = vpack.c.b16 %v1731, %v1723
        %v2436 = vpack.c.b16 %v1732, %v1724
        %v2437 = vpack.c.b16 %v1733, %v1725
        %v2438 = vpack.c.b16 %v1734, %v1726
        %v2439 = vpack.c.b16 %v1735, %v1727
        %v2440 = vpack.c.b16 %v1736, %v1728
        %v2441 = vpack.c.b16 %v1745, %v1737
        %v2442 = vpack.c.b16 %v1746, %v1738
        %v2443 = vpack.c.b16 %v1747, %v1739
        %v2444 = vpack.c.b16 %v1748, %v1740
        %v2445 = vpack.c.b16 %v1749, %v1741
        %v2446 = vpack.c.b16 %v1750, %v1742
        %v2447 = vpack.c.b16 %v1751, %v1743
        %v2448 = vpack.c.b16 %v1752, %v1744
        %v2449 = vpack.c.b16 %v1761, %v1753
        %v2450 = vpack.c.b16 %v1762, %v1754
        %v2451 = vpack.c.b16 %v1763, %v1755
        %v2452 = vpack.c.b16 %v1764, %v1756
        %v2453 = vpack.c.b16 %v1765, %v1757
        %v2454 = vpack.c.b16 %v1766, %v1758
        %v2455 = vpack.c.b16 %v1767, %v1759
        %v2456 = vpack.c.b16 %v1768, %v1760
        %v2457 = vpack.c.b16 %v1777, %v1769
        %v2458 = vpack.c.b16 %v1778, %v1770
        %v2459 = vpack.c.b16 %v1779, %v1771
        %v2460 = vpack.c.b16 %v1780, %v1772
        %v2461 = vpack.c.b16 %v1781, %v1773
        %v2462 = vpack.c.b16 %v1782, %v1774
        %v2463 = vpack.c.b16 %v1783, %v1775
        %v2464 = vpack.c.b16 %v1784, %v1776
        %v2465 = vpack.c.b16 %v1793, %v1785
        %v2466 = vpack.c.b16 %v1794, %v1786
        %v2467 = vpack.c.b16 %v1795, %v1787
        %v2468 = vpack.c.b16 %v1796, %v1788
        %v2469 = vpack.c.b16 %v1797, %v1789
        %v2470 = vpack.c.b16 %v1798, %v1790
        %v2471 = vpack.c.b16 %v1799, %v1791
        %v2472 = vpack.c.b16 %v1800, %v1792
        %v2473 = vpack.c.b16 %v1809, %v1801
        %v2474 = vpack.c.b16 %v1810, %v1802
        %v2475 = vpack.c.b16 %v1811, %v1803
        %v2476 = vpack.c.b16 %v1812, %v1804
        %v2477 = vpack.c.b16 %v1813, %v1805
        %v2478 = vpack.c.b16 %v1814, %v1806
        %v2479 = vpack.c.b16 %v1815, %v1807
        %v2480 = vpack.c.b16 %v1816, %v1808
        %v2481 = vpack.c.b16 %v1825, %v1817
        %v2482 = vpack.c.b16 %v1826, %v1818
        %v2483 = vpack.c.b16 %v1827, %v1819
        %v2484 = vpack.c.b16 %v1828, %v1820
        %v2485 = vpack.c.b16 %v1829, %v1821
        %v2486 = vpack.c.b16 %v1830, %v1822
        %v2487 = vpack.c.b16 %v1831, %v1823
        %v2488 = vpack.c.b16 %v1832, %v1824
        %v2489 = vpack.c.b16 %v1841, %v1833
        %v2490 = vpack.c.b16 %v1842, %v1834
        %v2491 = vpack.c.b16 %v1843, %v1835
        %v2492 = vpack.c.b16 %v1844, %v1836
        %v2493 = vpack.c.b16 %v1845, %v1837
        %v2494 = vpack.c.b16 %v1846, %v1838
        %v2495 = vpack.c.b16 %v1847, %v1839
        %v2496 = vpack.c.b16 %v1848, %v1840
        %v2497 = vpack.c.b16 %v1857, %v1849
        %v2498 = vpack.c.b16 %v1858, %v1850
        %v2499 = vpack.c.b16 %v1859, %v1851
        %v2500 = vpack.c.b16 %v1860, %v1852
        %v2501 = vpack.c.b16 %v1861, %v1853
        %v2502 = vpack.c.b16 %v1862, %v1854
        %v2503 = vpack.c.b16 %v1863, %v1855
        %v2504 = vpack.c.b16 %v1864, %v1856
        %v2505 = vpack.c.b16 %v1873, %v1865
        %v2506 = vpack.c.b16 %v1874, %v1866
        %v2507 = vpack.c.b16 %v1875, %v1867
        %v2508 = vpack.c.b16 %v1876, %v1868
        %v2509 = vpack.c.b16 %v1877, %v1869
        %v2510 = vpack.c.b16 %v1878, %v1870
        %v2511 = vpack.c.b16 %v1879, %v1871
        %v2512 = vpack.c.b16 %v1880, %v1872
        %v2513 = vpack.c.b16 %v1889, %v1881
        %v2514 = vpack.c.b16 %v1890, %v1882
        %v2515 = vpack.c.b16 %v1891, %v1883
        %v2516 = vpack.c.b16 %v1892, %v1884
        %v2517 = vpack.c.b16 %v1893, %v1885
        %v2518 = vpack.c.b16 %v1894, %v1886
        %v2519 = vpack.c.b16 %v1895, %v1887
        %v2520 = vpack.c.b16 %v1896, %v1888
        %v2521 = vpack.c.b16 %v1905, %v1897
        %v2522 = vpack.c.b16 %v1906, %v1898
        %v2523 = vpack.c.b16 %v1907, %v1899
        %v2524 = vpack.c.b16 %v1908, %v1900
        %v2525 = vpack.c.b16 %v1909, %v1901
        %v2526 = vpack.c.b16 %v1910, %v1902
        %v2527 = vpack.c.b16 %v1911, %v1903
        %v2528 = vpack.c.b16 %v1912, %v1904
        %v2529 = vpack.c.b16 %v1921, %v1913
        %v2530 = vpack.c.b16 %v1922, %v1914
        %v2531 = vpack.c.b16 %v1923, %v1915
        %v2532 = vpack.c.b16 %v1924, %v1916
        %v2533 = vpack.c.b16 %v1925, %v1917
        %v2534 = vpack.c.b16 %v1926, %v1918
        %v2535 = vpack.c.b16 %v1927, %v1919
        %v2536 = vpack.c.b16 %v1928, %v1920
        %v2537 = vpack.c.b16 %v1937, %v1929
        %v2538 = vpack.c.b16 %v1938, %v1930
        %v2539 = vpack.c.b16 %v1939, %v1931
        %v2540 = vpack.c.b16 %v1940, %v1932
        %v2541 = vpack.c.b16 %v1941, %v1933
        %v2542 = vpack.c.b16 %v1942, %v1934
        %v2543 = vpack.c.b16 %v1943, %v1935
        %v2544 = vpack.c.b16 %v1944, %v1936
        %v2545 = vpack.c.b16 %v1953, %v1945
        %v2546 = vpack.c.b16 %v1954, %v1946
        %v2547 = vpack.c.b16 %v1955, %v1947
        %v2548 = vpack.c.b16 %v1956, %v1948
        %v2549 = vpack.c.b16 %v1957, %v1949
        %v2550 = vpack.c.b16 %v1958, %v1950
        %v2551 = vpack.c.b16 %v1959, %v1951
        %v2552 = vpack.c.b16 %v1960, %v1952
        %v2553 = vpack.c.b16 %v1969, %v1961
        %v2554 = vpack.c.b16 %v1970, %v1962
        %v2555 = vpack.c.b16 %v1971, %v1963
        %v2556 = vpack.c.b16 %v1972, %v1964
        %v2557 = vpack.c.b16 %v1973, %v1965
        %v2558 = vpack.c.b16 %v1974, %v1966
        %v2559 = vpack.c.b16 %v1975, %v1967
        %v2560 = vpack.c.b16 %v1976, %v1968
        %v2561 = vpack.c.b16 %v1985, %v1977
        %v2562 = vpack.c.b16 %v1986, %v1978
        %v2563 = vpack.c.b16 %v1987, %v1979
        %v2564 = vpack.c.b16 %v1988, %v1980
        %v2565 = vpack.c.b16 %v1989, %v1981
        %v2566 = vpack.c.b16 %v1990, %v1982
        %v2567 = vpack.c.b16 %v1991, %v1983
        %v2568 = vpack.c.b16 %v1992, %v1984
        %v2569 = vpack.c.b16 %v2001, %v1993
        %v2570 = vpack.c.b16 %v2002, %v1994
        %v2571 = vpack.c.b16 %v2003, %v1995
        %v2572 = vpack.c.b16 %v2004, %v1996
        %v2573 = vpack.c.b16 %v2005, %v1997
        %v2574 = vpack.c.b16 %v2006, %v1998
        %v2575 = vpack.c.b16 %v2007, %v1999
        %v2576 = vpack.c.b16 %v2008, %v2000
        %v2577 = vpack.c.b16 %v2017, %v2009
        %v2578 = vpack.c.b16 %v2018, %v2010
        %v2579 = vpack.c.b16 %v2019, %v2011
        %v2580 = vpack.c.b16 %v2020, %v2012
        %v2581 = vpack.c.b16 %v2021, %v2013
        %v2582 = vpack.c.b16 %v2022, %v2014
        %v2583 = vpack.c.b16 %v2023, %v2015
        %v2584 = vpack.c.b16 %v2024, %v2016
        %v2585 = vpack.c.b16 %v2033, %v2025
        %v2586 = vpack.c.b16 %v2034, %v2026
        %v2587 = vpack.c.b16 %v2035, %v2027
        %v2588 = vpack.c.b16 %v2036, %v2028
        %v2589 = vpack.c.b16 %v2037, %v2029
        %v2590 = vpack.c.b16 %v2038, %v2030
        %v2591 = vpack.c.b16 %v2039, %v2031
        %v2592 = vpack.c.b16 %v2040, %v2032
        %v2593 = vpack.c.b16 %v2049, %v2041
        %v2594 = vpack.c.b16 %v2050, %v2042
        %v2595 = vpack.c.b16 %v2051, %v2043
        %v2596 = vpack.c.b16 %v2052, %v2044
        %v2597 = vpack.c.b16 %v2053, %v2045
        %v2598 = vpack.c.b16 %v2054, %v2046
        %v2599 = vpack.c.b16 %v2055, %v2047
        %v2600 = vpack.c.b16 %v2056, %v2048
        %v2601 = vpack.c.b16 %v2065, %v2057
        %v2602 = vpack.c.b16 %v2066, %v2058
        %v2603 = vpack.c.b16 %v2067, %v2059
        %v2604 = vpack.c.b16 %v2068, %v2060
        %v2605 = vpack.c.b16 %v2069, %v2061
        %v2606 = vpack.c.b16 %v2070, %v2062
        %v2607 = vpack.c.b16 %v2071, %v2063
        %v2608 = vpack.c.b16 %v2072, %v2064
        %v2609 = vpack.c.b16 %v2081, %v2073
        %v2610 = vpack.c.b16 %v2082, %v2074
        %v2611 = vpack.c.b16 %v2083, %v2075
        %v2612 = vpack.c.b16 %v2084, %v2076
        %v2613 = vpack.c.b16 %v2085, %v2077
        %v2614 = vpack.c.b16 %v2086, %v2078
        %v2615 = vpack.c.b16 %v2087, %v2079
        %v2616 = vpack.c.b16 %v2088, %v2080
        %v2617 = vpack.c.b16 %v2097, %v2089
        %v2618 = vpack.c.b16 %v2098, %v2090
        %v2619 = vpack.c.b16 %v2099, %v2091
        %v2620 = vpack.c.b16 %v2100, %v2092
        %v2621 = vpack.c.b16 %v2101, %v2093
        %v2622 = vpack.c.b16 %v2102, %v2094
        %v2623 = vpack.c.b16 %v2103, %v2095
        %v2624 = vpack.c.b16 %v2104, %v2096
        %v2625 = vpack.c.b16 %v2113, %v2105
        %v2626 = vpack.c.b16 %v2114, %v2106
        %v2627 = vpack.c.b16 %v2115, %v2107
        %v2628 = vpack.c.b16 %v2116, %v2108
        %v2629 = vpack.c.b16 %v2117, %v2109
        %v2630 = vpack.c.b16 %v2118, %v2110
        %v2631 = vpack.c.b16 %v2119, %v2111
        %v2632 = vpack.c.b16 %v2120, %v2112
        %v2633 = vpack.c.b16 %v2129, %v2121
        %v2634 = vpack.c.b16 %v2130, %v2122
        %v2635 = vpack.c.b16 %v2131, %v2123
        %v2636 = vpack.c.b16 %v2132, %v2124
        %v2637 = vpack.c.b16 %v2133, %v2125
        %v2638 = vpack.c.b16 %v2134, %v2126
        %v2639 = vpack.c.b16 %v2135, %v2127
        %v2640 = vpack.c.b16 %v2136, %v2128
        %v2641 = vpack.c.b16 %v2145, %v2137
        %v2642 = vpack.c.b16 %v2146, %v2138
        %v2643 = vpack.c.b16 %v2147, %v2139
        %v2644 = vpack.c.b16 %v2148, %v2140
        %v2645 = vpack.c.b16 %v2149, %v2141
        %v2646 = vpack.c.b16 %v2150, %v2142
        %v2647 = vpack.c.b16 %v2151, %v2143
        %v2648 = vpack.c.b16 %v2152, %v2144
        %v2649 = vpack.c.b16 %v2161, %v2153
        %v2650 = vpack.c.b16 %v2162, %v2154
        %v2651 = vpack.c.b16 %v2163, %v2155
        %v2652 = vpack.c.b16 %v2164, %v2156
        %v2653 = vpack.c.b16 %v2165, %v2157
        %v2654 = vpack.c.b16 %v2166, %v2158
        %v2655 = vpack.c.b16 %v2167, %v2159
        %v2656 = vpack.c.b16 %v2168, %v2160
        %v2657 = vpack.c.b16 %v2177, %v2169
        %v2658 = vpack.c.b16 %v2178, %v2170
        %v2659 = vpack.c.b16 %v2179, %v2171
        %v2660 = vpack.c.b16 %v2180, %v2172
        %v2661 = vpack.c.b16 %v2181, %v2173
        %v2662 = vpack.c.b16 %v2182, %v2174
        %v2663 = vpack.c.b16 %v2183, %v2175
        %v2664 = vpack.c.b16 %v2184, %v2176
        %v2665 = vpack.c.b16 %v2193, %v2185
        %v2666 = vpack.c.b16 %v2194, %v2186
        %v2667 = vpack.c.b16 %v2195, %v2187
        %v2668 = vpack.c.b16 %v2196, %v2188
        %v2669 = vpack.c.b16 %v2197, %v2189
        %v2670 = vpack.c.b16 %v2198, %v2190
        %v2671 = vpack.c.b16 %v2199, %v2191
        %v2672 = vpack.c.b16 %v2200, %v2192
        %v2673 = vpack.c.b16 %v2209, %v2201
        %v2674 = vpack.c.b16 %v2210, %v2202
        %v2675 = vpack.c.b16 %v2211, %v2203
        %v2676 = vpack.c.b16 %v2212, %v2204
        %v2677 = vpack.c.b16 %v2213, %v2205
        %v2678 = vpack.c.b16 %v2214, %v2206
        %v2679 = vpack.c.b16 %v2215, %v2207
        %v2680 = vpack.c.b16 %v2216, %v2208
        %v2681 = vpack.c.b16 %v2225, %v2217
        %v2682 = vpack.c.b16 %v2226, %v2218
        %v2683 = vpack.c.b16 %v2227, %v2219
        %v2684 = vpack.c.b16 %v2228, %v2220
        %v2685 = vpack.c.b16 %v2229, %v2221
        %v2686 = vpack.c.b16 %v2230, %v2222
        %v2687 = vpack.c.b16 %v2231, %v2223
        %v2688 = vpack.c.b16 %v2232, %v2224
        %v2689 = vpack.c.b16 %v2241, %v2233
        %v2690 = vpack.c.b16 %v2242, %v2234
        %v2691 = vpack.c.b16 %v2243, %v2235
        %v2692 = vpack.c.b16 %v2244, %v2236
        %v2693 = vpack.c.b16 %v2245, %v2237
        %v2694 = vpack.c.b16 %v2246, %v2238
        %v2695 = vpack.c.b16 %v2247, %v2239
        %v2696 = vpack.c.b16 %v2248, %v2240
        %3145 = vmatprep.subr.bf16.mxu0 %v2306
        %3146 = vmatpush1.bf16.msra.mxu0 %v2305
        %3147 = vmatprep.subr.bf16.mxu0 %v2298
        %3148 = vmatpush1.bf16.msra.mxu0 %v2297
        %3149 = vmatprep.subr.bf16.mxu0 %v2290
        %3150 = vmatpush1.bf16.msra.mxu0 %v2289
        %3151 = vmatprep.subr.bf16.mxu0 %v2282
        %3152 = vmatpush1.bf16.msra.mxu0 %v2281
        %3153 = vmatprep.subr.bf16.mxu0 %v2274
        %3154 = vmatpush1.bf16.msra.mxu0 %v2273
        %3155 = vmatprep.subr.bf16.mxu0 %v2266
        %3156 = vmatpush1.bf16.msra.mxu0 %v2265
        %3157 = vmatprep.subr.bf16.mxu0 %v2258
        %3158 = vmatpush1.bf16.msra.mxu0 %v2257
        %3159 = vmatprep.subr.bf16.mxu0 %v2250
        %3160 = vmatpush1.bf16.msra.mxu0 %v2249
        %3161 = vmatprep.subr.bf16.mxu0 %v2370
        %3162 = vmatpush2.bf16.msra.mxu0 %v2369
        %3163 = vmatprep.subr.bf16.mxu0 %v2362
        %3164 = vmatpush2.bf16.msra.mxu0 %v2361
        %3165 = vmatprep.subr.bf16.mxu0 %v2354
        %3166 = vmatpush2.bf16.msra.mxu0 %v2353
        %3167 = vmatprep.subr.bf16.mxu0 %v2346
        %3168 = vmatpush2.bf16.msra.mxu0 %v2345
        %3169 = vmatprep.subr.bf16.mxu0 %v2338
        %3170 = vmatpush2.bf16.msra.mxu0 %v2337
        %3171 = vmatprep.subr.bf16.mxu0 %v2330
        %3172 = vmatpush2.bf16.msra.mxu0 %v2329
        %3173 = vmatprep.subr.bf16.mxu0 %v2322
        %3174 = vmatpush2.bf16.msra.mxu0 %v2321
        %3175 = vmatprep.subr.bf16.mxu0 %v2314
        %3176 = vmatpush2.bf16.msra.mxu0 %v2313
        %3177 = vmatprep.mubr.bf16.mxu0 %v892
        %3178 = vmatmul.mubr.bf16.gmra.mxu0 %v891
        %v3179 = vpop.f32.mrf.mxu0
        %v3180 = vadd.f32 %v832, %v3179
        %v3181 = vpop.f32.mrf.mxu0
        %v3182 = vadd.f32 %v836, %v3181
        %v3183 = vpop.f32.mrf.mxu0
        %v3184 = vadd.f32 %v832, %v3183
        %v3185 = vpop.f32.mrf.mxu0
        %v3186 = vadd.f32 %v836, %v3185
        %3187 = vdwg.mxu0
        %3188 = vmatprep.subr.bf16.mxu0 %v2434
        %3189 = vmatpush1.bf16.msra.mxu0 %v2433
        %3190 = vmatprep.subr.bf16.mxu0 %v2426
        %3191 = vmatpush1.bf16.msra.mxu0 %v2425
        %3192 = vmatprep.subr.bf16.mxu0 %v2418
        %3193 = vmatpush1.bf16.msra.mxu0 %v2417
        %3194 = vmatprep.subr.bf16.mxu0 %v2410
        %3195 = vmatpush1.bf16.msra.mxu0 %v2409
        %3196 = vmatprep.subr.bf16.mxu0 %v2402
        %3197 = vmatpush1.bf16.msra.mxu0 %v2401
        %3198 = vmatprep.subr.bf16.mxu0 %v2394
        %3199 = vmatpush1.bf16.msra.mxu0 %v2393
        %3200 = vmatprep.subr.bf16.mxu0 %v2386
        %3201 = vmatpush1.bf16.msra.mxu0 %v2385
        %3202 = vmatprep.subr.bf16.mxu0 %v2378
        %3203 = vmatpush1.bf16.msra.mxu0 %v2377
        %3204 = vmatprep.subr.bf16.mxu0 %v2498
        %3205 = vmatpush2.bf16.msra.mxu0 %v2497
        %3206 = vmatprep.subr.bf16.mxu0 %v2490
        %3207 = vmatpush2.bf16.msra.mxu0 %v2489
        %3208 = vmatprep.subr.bf16.mxu0 %v2482
        %3209 = vmatpush2.bf16.msra.mxu0 %v2481
        %3210 = vmatprep.subr.bf16.mxu0 %v2474
        %3211 = vmatpush2.bf16.msra.mxu0 %v2473
        %3212 = vmatprep.subr.bf16.mxu0 %v2466
        %3213 = vmatpush2.bf16.msra.mxu0 %v2465
        %3214 = vmatprep.subr.bf16.mxu0 %v2458
        %3215 = vmatpush2.bf16.msra.mxu0 %v2457
        %3216 = vmatprep.subr.bf16.mxu0 %v2450
        %3217 = vmatpush2.bf16.msra.mxu0 %v2449
        %3218 = vmatprep.subr.bf16.mxu0 %v2442
        %3219 = vmatpush2.bf16.msra.mxu0 %v2441
        %3220 = vmatprep.mubr.bf16.mxu0 %v894
        %3221 = vmatmul.mubr.bf16.gmra.mxu0 %v893
        %v3222 = vpop.f32.mrf.mxu0
        %v3223 = vadd.f32 %v3180, %v3222
        %v3224 = vpop.f32.mrf.mxu0
        %v3225 = vadd.f32 %v3182, %v3224
        %v3226 = vpop.f32.mrf.mxu0
        %v3227 = vadd.f32 %v3184, %v3226
        %v3228 = vpop.f32.mrf.mxu0
        %v3229 = vadd.f32 %v3186, %v3228
        %3230 = vdwg.mxu0
        %3231 = vmatprep.subr.bf16.mxu0 %v2562
        %3232 = vmatpush1.bf16.msra.mxu0 %v2561
        %3233 = vmatprep.subr.bf16.mxu0 %v2554
        %3234 = vmatpush1.bf16.msra.mxu0 %v2553
        %3235 = vmatprep.subr.bf16.mxu0 %v2546
        %3236 = vmatpush1.bf16.msra.mxu0 %v2545
        %3237 = vmatprep.subr.bf16.mxu0 %v2538
        %3238 = vmatpush1.bf16.msra.mxu0 %v2537
        %3239 = vmatprep.subr.bf16.mxu0 %v2530
        %3240 = vmatpush1.bf16.msra.mxu0 %v2529
        %3241 = vmatprep.subr.bf16.mxu0 %v2522
        %3242 = vmatpush1.bf16.msra.mxu0 %v2521
        %3243 = vmatprep.subr.bf16.mxu0 %v2514
        %3244 = vmatpush1.bf16.msra.mxu0 %v2513
        %3245 = vmatprep.subr.bf16.mxu0 %v2506
        %3246 = vmatpush1.bf16.msra.mxu0 %v2505
        %3247 = vmatprep.subr.bf16.mxu0 %v2626
        %3248 = vmatpush2.bf16.msra.mxu0 %v2625
        %3249 = vmatprep.subr.bf16.mxu0 %v2618
        %3250 = vmatpush2.bf16.msra.mxu0 %v2617
        %3251 = vmatprep.subr.bf16.mxu0 %v2610
        %3252 = vmatpush2.bf16.msra.mxu0 %v2609
        %3253 = vmatprep.subr.bf16.mxu0 %v2602
        %3254 = vmatpush2.bf16.msra.mxu0 %v2601
        %3255 = vmatprep.subr.bf16.mxu0 %v2594
        %3256 = vmatpush2.bf16.msra.mxu0 %v2593
        %3257 = vmatprep.subr.bf16.mxu0 %v2586
        %3258 = vmatpush2.bf16.msra.mxu0 %v2585
        %3259 = vmatprep.subr.bf16.mxu0 %v2578
        %3260 = vmatpush2.bf16.msra.mxu0 %v2577
        %3261 = vmatprep.subr.bf16.mxu0 %v2570
        %3262 = vmatpush2.bf16.msra.mxu0 %v2569
        %3263 = vmatprep.mubr.bf16.mxu0 %v896
        %3264 = vmatmul.mubr.bf16.gmra.mxu0 %v895
        %v3265 = vpop.f32.mrf.mxu0
        %v3266 = vadd.f32 %v3223, %v3265
        %v3267 = vpop.f32.mrf.mxu0
        %v3268 = vadd.f32 %v3225, %v3267
        %v3269 = vpop.f32.mrf.mxu0
        %v3270 = vadd.f32 %v3227, %v3269
        %v3271 = vpop.f32.mrf.mxu0
        %v3272 = vadd.f32 %v3229, %v3271
        %3273 = vdwg.mxu0
        %3274 = vmatprep.subr.bf16.mxu0 %v2690
        %3275 = vmatpush1.bf16.msra.mxu0 %v2689
        %3276 = vmatprep.subr.bf16.mxu0 %v2682
        %3277 = vmatpush1.bf16.msra.mxu0 %v2681
        %3278 = vmatprep.subr.bf16.mxu0 %v2674
        %3279 = vmatpush1.bf16.msra.mxu0 %v2673
        %3280 = vmatprep.subr.bf16.mxu0 %v2666
        %3281 = vmatpush1.bf16.msra.mxu0 %v2665
        %3282 = vmatprep.subr.bf16.mxu0 %v2658
        %3283 = vmatpush1.bf16.msra.mxu0 %v2657
        %3284 = vmatprep.subr.bf16.mxu0 %v2650
        %3285 = vmatpush1.bf16.msra.mxu0 %v2649
        %3286 = vmatprep.subr.bf16.mxu0 %v2642
        %3287 = vmatpush1.bf16.msra.mxu0 %v2641
        %3288 = vmatprep.subr.bf16.mxu0 %v2634
        %3289 = vmatpush1.bf16.msra.mxu0 %v2633
        %3290 = vmatprep.subr.bf16.mxu0 0
        %3291 = vmatpush2.bf16.msra.mxu0 0
        %3292 = vmatprep.subr.bf16.mxu0 0
        %3293 = vmatpush2.bf16.msra.mxu0 0
        %3294 = vmatprep.subr.bf16.mxu0 0
        %3295 = vmatpush2.bf16.msra.mxu0 0
        %3296 = vmatprep.subr.bf16.mxu0 0
        %3297 = vmatpush2.bf16.msra.mxu0 0
        %3298 = vmatprep.subr.bf16.mxu0 0
        %3299 = vmatpush2.bf16.msra.mxu0 0
        %3300 = vmatprep.subr.bf16.mxu0 0
        %3301 = vmatpush2.bf16.msra.mxu0 0
        %3302 = vmatprep.subr.bf16.mxu0 0
        %3303 = vmatpush2.bf16.msra.mxu0 0
        %3304 = vmatprep.subr.bf16.mxu0 0
        %3305 = vmatpush2.bf16.msra.mxu0 0
        %3306 = vmatprep.mubr.bf16.mxu0 0
        %3307 = vmatmul.mubr.bf16.gmra.mxu0 %v897
        %v3308 = vpop.f32.mrf.mxu0
        %v3309 = vadd.f32 %v3266, %v3308
        %v3310 = vpop.f32.mrf.mxu0
        %v3311 = vadd.f32 %v3268, %v3310
        %v3312 = vpop.f32.mrf.mxu0
        %v3313 = vadd.f32 %v3270, %v3312
        %v3314 = vpop.f32.mrf.mxu0
        %v3315 = vadd.f32 %v3272, %v3314
        %3316 = vdwg.mxu0
        %3317 = vmatprep.subr.bf16.mxu0 %v2308
        %3318 = vmatpush1.bf16.msra.mxu0 %v2307
        %3319 = vmatprep.subr.bf16.mxu0 %v2300
        %3320 = vmatpush1.bf16.msra.mxu0 %v2299
        %3321 = vmatprep.subr.bf16.mxu0 %v2292
        %3322 = vmatpush1.bf16.msra.mxu0 %v2291
        %3323 = vmatprep.subr.bf16.mxu0 %v2284
        %3324 = vmatpush1.bf16.msra.mxu0 %v2283
        %3325 = vmatprep.subr.bf16.mxu0 %v2276
        %3326 = vmatpush1.bf16.msra.mxu0 %v2275
        %3327 = vmatprep.subr.bf16.mxu0 %v2268
        %3328 = vmatpush1.bf16.msra.mxu0 %v2267
        %3329 = vmatprep.subr.bf16.mxu0 %v2260
        %3330 = vmatpush1.bf16.msra.mxu0 %v2259
        %3331 = vmatprep.subr.bf16.mxu0 %v2252
        %3332 = vmatpush1.bf16.msra.mxu0 %v2251
        %3333 = vmatprep.subr.bf16.mxu0 %v2372
        %3334 = vmatpush2.bf16.msra.mxu0 %v2371
        %3335 = vmatprep.subr.bf16.mxu0 %v2364
        %3336 = vmatpush2.bf16.msra.mxu0 %v2363
        %3337 = vmatprep.subr.bf16.mxu0 %v2356
        %3338 = vmatpush2.bf16.msra.mxu0 %v2355
        %3339 = vmatprep.subr.bf16.mxu0 %v2348
        %3340 = vmatpush2.bf16.msra.mxu0 %v2347
        %3341 = vmatprep.subr.bf16.mxu0 %v2340
        %3342 = vmatpush2.bf16.msra.mxu0 %v2339
        %3343 = vmatprep.subr.bf16.mxu0 %v2332
        %3344 = vmatpush2.bf16.msra.mxu0 %v2331
        %3345 = vmatprep.subr.bf16.mxu0 %v2324
        %3346 = vmatpush2.bf16.msra.mxu0 %v2323
        %3347 = vmatprep.subr.bf16.mxu0 %v2316
        %3348 = vmatpush2.bf16.msra.mxu0 %v2315
        %3349 = vmatprep.mubr.bf16.mxu0 %v892
        %3350 = vmatmul.mubr.bf16.gmra.mxu0 %v891
        %v3351 = vpop.f32.mrf.mxu0
        %v3352 = vadd.f32 %v840, %v3351
        %v3353 = vpop.f32.mrf.mxu0
        %v3354 = vadd.f32 %v844, %v3353
        %v3355 = vpop.f32.mrf.mxu0
        %v3356 = vadd.f32 %v840, %v3355
        %v3357 = vpop.f32.mrf.mxu0
        %v3358 = vadd.f32 %v844, %v3357
        %3359 = vdwg.mxu0
        %3360 = vmatprep.subr.bf16.mxu0 %v2436
        %3361 = vmatpush1.bf16.msra.mxu0 %v2435
        %3362 = vmatprep.subr.bf16.mxu0 %v2428
        %3363 = vmatpush1.bf16.msra.mxu0 %v2427
        %3364 = vmatprep.subr.bf16.mxu0 %v2420
        %3365 = vmatpush1.bf16.msra.mxu0 %v2419
        %3366 = vmatprep.subr.bf16.mxu0 %v2412
        %3367 = vmatpush1.bf16.msra.mxu0 %v2411
        %3368 = vmatprep.subr.bf16.mxu0 %v2404
        %3369 = vmatpush1.bf16.msra.mxu0 %v2403
        %3370 = vmatprep.subr.bf16.mxu0 %v2396
        %3371 = vmatpush1.bf16.msra.mxu0 %v2395
        %3372 = vmatprep.subr.bf16.mxu0 %v2388
        %3373 = vmatpush1.bf16.msra.mxu0 %v2387
        %3374 = vmatprep.subr.bf16.mxu0 %v2380
        %3375 = vmatpush1.bf16.msra.mxu0 %v2379
        %3376 = vmatprep.subr.bf16.mxu0 %v2500
        %3377 = vmatpush2.bf16.msra.mxu0 %v2499
        %3378 = vmatprep.subr.bf16.mxu0 %v2492
        %3379 = vmatpush2.bf16.msra.mxu0 %v2491
        %3380 = vmatprep.subr.bf16.mxu0 %v2484
        %3381 = vmatpush2.bf16.msra.mxu0 %v2483
        %3382 = vmatprep.subr.bf16.mxu0 %v2476
        %3383 = vmatpush2.bf16.msra.mxu0 %v2475
        %3384 = vmatprep.subr.bf16.mxu0 %v2468
        %3385 = vmatpush2.bf16.msra.mxu0 %v2467
        %3386 = vmatprep.subr.bf16.mxu0 %v2460
        %3387 = vmatpush2.bf16.msra.mxu0 %v2459
        %3388 = vmatprep.subr.bf16.mxu0 %v2452
        %3389 = vmatpush2.bf16.msra.mxu0 %v2451
        %3390 = vmatprep.subr.bf16.mxu0 %v2444
        %3391 = vmatpush2.bf16.msra.mxu0 %v2443
        %3392 = vmatprep.mubr.bf16.mxu0 %v894
        %3393 = vmatmul.mubr.bf16.gmra.mxu0 %v893
        %v3394 = vpop.f32.mrf.mxu0
        %v3395 = vadd.f32 %v3352, %v3394
        %v3396 = vpop.f32.mrf.mxu0
        %v3397 = vadd.f32 %v3354, %v3396
        %v3398 = vpop.f32.mrf.mxu0
        %v3399 = vadd.f32 %v3356, %v3398
        %v3400 = vpop.f32.mrf.mxu0
        %v3401 = vadd.f32 %v3358, %v3400
        %3402 = vdwg.mxu0
        %3403 = vmatprep.subr.bf16.mxu0 %v2564
        %3404 = vmatpush1.bf16.msra.mxu0 %v2563
        %3405 = vmatprep.subr.bf16.mxu0 %v2556
        %3406 = vmatpush1.bf16.msra.mxu0 %v2555
        %3407 = vmatprep.subr.bf16.mxu0 %v2548
        %3408 = vmatpush1.bf16.msra.mxu0 %v2547
        %3409 = vmatprep.subr.bf16.mxu0 %v2540
        %3410 = vmatpush1.bf16.msra.mxu0 %v2539
        %3411 = vmatprep.subr.bf16.mxu0 %v2532
        %3412 = vmatpush1.bf16.msra.mxu0 %v2531
        %3413 = vmatprep.subr.bf16.mxu0 %v2524
        %3414 = vmatpush1.bf16.msra.mxu0 %v2523
        %3415 = vmatprep.subr.bf16.mxu0 %v2516
        %3416 = vmatpush1.bf16.msra.mxu0 %v2515
        %3417 = vmatprep.subr.bf16.mxu0 %v2508
        %3418 = vmatpush1.bf16.msra.mxu0 %v2507
        %3419 = vmatprep.subr.bf16.mxu0 %v2628
        %3420 = vmatpush2.bf16.msra.mxu0 %v2627
        %3421 = vmatprep.subr.bf16.mxu0 %v2620
        %3422 = vmatpush2.bf16.msra.mxu0 %v2619
        %3423 = vmatprep.subr.bf16.mxu0 %v2612
        %3424 = vmatpush2.bf16.msra.mxu0 %v2611
        %3425 = vmatprep.subr.bf16.mxu0 %v2604
        %3426 = vmatpush2.bf16.msra.mxu0 %v2603
        %3427 = vmatprep.subr.bf16.mxu0 %v2596
        %3428 = vmatpush2.bf16.msra.mxu0 %v2595
        %3429 = vmatprep.subr.bf16.mxu0 %v2588
        %3430 = vmatpush2.bf16.msra.mxu0 %v2587
        %3431 = vmatprep.subr.bf16.mxu0 %v2580
        %3432 = vmatpush2.bf16.msra.mxu0 %v2579
        %3433 = vmatprep.subr.bf16.mxu0 %v2572
        %3434 = vmatpush2.bf16.msra.mxu0 %v2571
        %3435 = vmatprep.mubr.bf16.mxu0 %v896
        %3436 = vmatmul.mubr.bf16.gmra.mxu0 %v895
        %v3437 = vpop.f32.mrf.mxu0
        %v3438 = vadd.f32 %v3395, %v3437
        %v3439 = vpop.f32.mrf.mxu0
        %v3440 = vadd.f32 %v3397, %v3439
        %v3441 = vpop.f32.mrf.mxu0
        %v3442 = vadd.f32 %v3399, %v3441
        %v3443 = vpop.f32.mrf.mxu0
        %v3444 = vadd.f32 %v3401, %v3443
        %3445 = vdwg.mxu0
        %3446 = vmatprep.subr.bf16.mxu0 %v2692
        %3447 = vmatpush1.bf16.msra.mxu0 %v2691
        %3448 = vmatprep.subr.bf16.mxu0 %v2684
        %3449 = vmatpush1.bf16.msra.mxu0 %v2683
        %3450 = vmatprep.subr.bf16.mxu0 %v2676
        %3451 = vmatpush1.bf16.msra.mxu0 %v2675
        %3452 = vmatprep.subr.bf16.mxu0 %v2668
        %3453 = vmatpush1.bf16.msra.mxu0 %v2667
        %3454 = vmatprep.subr.bf16.mxu0 %v2660
        %3455 = vmatpush1.bf16.msra.mxu0 %v2659
        %3456 = vmatprep.subr.bf16.mxu0 %v2652
        %3457 = vmatpush1.bf16.msra.mxu0 %v2651
        %3458 = vmatprep.subr.bf16.mxu0 %v2644
        %3459 = vmatpush1.bf16.msra.mxu0 %v2643
        %3460 = vmatprep.subr.bf16.mxu0 %v2636
        %3461 = vmatpush1.bf16.msra.mxu0 %v2635
        %3462 = vmatprep.subr.bf16.mxu0 0
        %3463 = vmatpush2.bf16.msra.mxu0 0
        %3464 = vmatprep.subr.bf16.mxu0 0
        %3465 = vmatpush2.bf16.msra.mxu0 0
        %3466 = vmatprep.subr.bf16.mxu0 0
        %3467 = vmatpush2.bf16.msra.mxu0 0
        %3468 = vmatprep.subr.bf16.mxu0 0
        %3469 = vmatpush2.bf16.msra.mxu0 0
        %3470 = vmatprep.subr.bf16.mxu0 0
        %3471 = vmatpush2.bf16.msra.mxu0 0
        %3472 = vmatprep.subr.bf16.mxu0 0
        %3473 = vmatpush2.bf16.msra.mxu0 0
        %3474 = vmatprep.subr.bf16.mxu0 0
        %3475 = vmatpush2.bf16.msra.mxu0 0
        %3476 = vmatprep.subr.bf16.mxu0 0
        %3477 = vmatpush2.bf16.msra.mxu0 0
        %3478 = vmatprep.mubr.bf16.mxu0 0
        %3479 = vmatmul.mubr.bf16.gmra.mxu0 %v897
        %v3480 = vpop.f32.mrf.mxu0
        %v3481 = vadd.f32 %v3438, %v3480
        %v3482 = vpop.f32.mrf.mxu0
        %v3483 = vadd.f32 %v3440, %v3482
        %v3484 = vpop.f32.mrf.mxu0
        %v3485 = vadd.f32 %v3442, %v3484
        %v3486 = vpop.f32.mrf.mxu0
        %v3487 = vadd.f32 %v3444, %v3486
        %3488 = vdwg.mxu0
        %3489 = vmatprep.subr.bf16.mxu0 %v2310
        %3490 = vmatpush1.bf16.msra.mxu0 %v2309
        %3491 = vmatprep.subr.bf16.mxu0 %v2302
        %3492 = vmatpush1.bf16.msra.mxu0 %v2301
        %3493 = vmatprep.subr.bf16.mxu0 %v2294
        %3494 = vmatpush1.bf16.msra.mxu0 %v2293
        %3495 = vmatprep.subr.bf16.mxu0 %v2286
        %3496 = vmatpush1.bf16.msra.mxu0 %v2285
        %3497 = vmatprep.subr.bf16.mxu0 %v2278
        %3498 = vmatpush1.bf16.msra.mxu0 %v2277
        %3499 = vmatprep.subr.bf16.mxu0 %v2270
        %3500 = vmatpush1.bf16.msra.mxu0 %v2269
        %3501 = vmatprep.subr.bf16.mxu0 %v2262
        %3502 = vmatpush1.bf16.msra.mxu0 %v2261
        %3503 = vmatprep.subr.bf16.mxu0 %v2254
        %3504 = vmatpush1.bf16.msra.mxu0 %v2253
        %3505 = vmatprep.subr.bf16.mxu0 %v2374
        %3506 = vmatpush2.bf16.msra.mxu0 %v2373
        %3507 = vmatprep.subr.bf16.mxu0 %v2366
        %3508 = vmatpush2.bf16.msra.mxu0 %v2365
        %3509 = vmatprep.subr.bf16.mxu0 %v2358
        %3510 = vmatpush2.bf16.msra.mxu0 %v2357
        %3511 = vmatprep.subr.bf16.mxu0 %v2350
        %3512 = vmatpush2.bf16.msra.mxu0 %v2349
        %3513 = vmatprep.subr.bf16.mxu0 %v2342
        %3514 = vmatpush2.bf16.msra.mxu0 %v2341
        %3515 = vmatprep.subr.bf16.mxu0 %v2334
        %3516 = vmatpush2.bf16.msra.mxu0 %v2333
        %3517 = vmatprep.subr.bf16.mxu0 %v2326
        %3518 = vmatpush2.bf16.msra.mxu0 %v2325
        %3519 = vmatprep.subr.bf16.mxu0 %v2318
        %3520 = vmatpush2.bf16.msra.mxu0 %v2317
        %3521 = vmatprep.mubr.bf16.mxu0 %v892
        %3522 = vmatmul.mubr.bf16.gmra.mxu0 %v891
        %v3523 = vpop.f32.mrf.mxu0
        %v3524 = vadd.f32 %v848, %v3523
        %v3525 = vpop.f32.mrf.mxu0
        %v3526 = vadd.f32 %v852, %v3525
        %v3527 = vpop.f32.mrf.mxu0
        %v3528 = vadd.f32 %v848, %v3527
        %v3529 = vpop.f32.mrf.mxu0
        %v3530 = vadd.f32 %v852, %v3529
        %3531 = vdwg.mxu0
        %3532 = vmatprep.subr.bf16.mxu0 %v2438
        %3533 = vmatpush1.bf16.msra.mxu0 %v2437
        %3534 = vmatprep.subr.bf16.mxu0 %v2430
        %3535 = vmatpush1.bf16.msra.mxu0 %v2429
        %3536 = vmatprep.subr.bf16.mxu0 %v2422
        %3537 = vmatpush1.bf16.msra.mxu0 %v2421
        %3538 = vmatprep.subr.bf16.mxu0 %v2414
        %3539 = vmatpush1.bf16.msra.mxu0 %v2413
        %3540 = vmatprep.subr.bf16.mxu0 %v2406
        %3541 = vmatpush1.bf16.msra.mxu0 %v2405
        %3542 = vmatprep.subr.bf16.mxu0 %v2398
        %3543 = vmatpush1.bf16.msra.mxu0 %v2397
        %3544 = vmatprep.subr.bf16.mxu0 %v2390
        %3545 = vmatpush1.bf16.msra.mxu0 %v2389
        %3546 = vmatprep.subr.bf16.mxu0 %v2382
        %3547 = vmatpush1.bf16.msra.mxu0 %v2381
        %3548 = vmatprep.subr.bf16.mxu0 %v2502
        %3549 = vmatpush2.bf16.msra.mxu0 %v2501
        %3550 = vmatprep.subr.bf16.mxu0 %v2494
        %3551 = vmatpush2.bf16.msra.mxu0 %v2493
        %3552 = vmatprep.subr.bf16.mxu0 %v2486
        %3553 = vmatpush2.bf16.msra.mxu0 %v2485
        %3554 = vmatprep.subr.bf16.mxu0 %v2478
        %3555 = vmatpush2.bf16.msra.mxu0 %v2477
        %3556 = vmatprep.subr.bf16.mxu0 %v2470
        %3557 = vmatpush2.bf16.msra.mxu0 %v2469
        %3558 = vmatprep.subr.bf16.mxu0 %v2462
        %3559 = vmatpush2.bf16.msra.mxu0 %v2461
        %3560 = vmatprep.subr.bf16.mxu0 %v2454
        %3561 = vmatpush2.bf16.msra.mxu0 %v2453
        %3562 = vmatprep.subr.bf16.mxu0 %v2446
        %3563 = vmatpush2.bf16.msra.mxu0 %v2445
        %3564 = vmatprep.mubr.bf16.mxu0 %v894
        %3565 = vmatmul.mubr.bf16.gmra.mxu0 %v893
        %v3566 = vpop.f32.mrf.mxu0
        %v3567 = vadd.f32 %v3524, %v3566
        %v3568 = vpop.f32.mrf.mxu0
        %v3569 = vadd.f32 %v3526, %v3568
        %v3570 = vpop.f32.mrf.mxu0
        %v3571 = vadd.f32 %v3528, %v3570
        %v3572 = vpop.f32.mrf.mxu0
        %v3573 = vadd.f32 %v3530, %v3572
        %3574 = vdwg.mxu0
        %3575 = vmatprep.subr.bf16.mxu0 %v2566
        %3576 = vmatpush1.bf16.msra.mxu0 %v2565
        %3577 = vmatprep.subr.bf16.mxu0 %v2558
        %3578 = vmatpush1.bf16.msra.mxu0 %v2557
        %3579 = vmatprep.subr.bf16.mxu0 %v2550
        %3580 = vmatpush1.bf16.msra.mxu0 %v2549
        %3581 = vmatprep.subr.bf16.mxu0 %v2542
        %3582 = vmatpush1.bf16.msra.mxu0 %v2541
        %3583 = vmatprep.subr.bf16.mxu0 %v2534
        %3584 = vmatpush1.bf16.msra.mxu0 %v2533
        %3585 = vmatprep.subr.bf16.mxu0 %v2526
        %3586 = vmatpush1.bf16.msra.mxu0 %v2525
        %3587 = vmatprep.subr.bf16.mxu0 %v2518
        %3588 = vmatpush1.bf16.msra.mxu0 %v2517
        %3589 = vmatprep.subr.bf16.mxu0 %v2510
        %3590 = vmatpush1.bf16.msra.mxu0 %v2509
        %3591 = vmatprep.subr.bf16.mxu0 %v2630
        %3592 = vmatpush2.bf16.msra.mxu0 %v2629
        %3593 = vmatprep.subr.bf16.mxu0 %v2622
        %3594 = vmatpush2.bf16.msra.mxu0 %v2621
        %3595 = vmatprep.subr.bf16.mxu0 %v2614
        %3596 = vmatpush2.bf16.msra.mxu0 %v2613
        %3597 = vmatprep.subr.bf16.mxu0 %v2606
        %3598 = vmatpush2.bf16.msra.mxu0 %v2605
        %3599 = vmatprep.subr.bf16.mxu0 %v2598
        %3600 = vmatpush2.bf16.msra.mxu0 %v2597
        %3601 = vmatprep.subr.bf16.mxu0 %v2590
        %3602 = vmatpush2.bf16.msra.mxu0 %v2589
        %3603 = vmatprep.subr.bf16.mxu0 %v2582
        %3604 = vmatpush2.bf16.msra.mxu0 %v2581
        %3605 = vmatprep.subr.bf16.mxu0 %v2574
        %3606 = vmatpush2.bf16.msra.mxu0 %v2573
        %3607 = vmatprep.mubr.bf16.mxu0 %v896
        %3608 = vmatmul.mubr.bf16.gmra.mxu0 %v895
        %v3609 = vpop.f32.mrf.mxu0
        %v3610 = vadd.f32 %v3567, %v3609
        %v3611 = vpop.f32.mrf.mxu0
        %v3612 = vadd.f32 %v3569, %v3611
        %v3613 = vpop.f32.mrf.mxu0
        %v3614 = vadd.f32 %v3571, %v3613
        %v3615 = vpop.f32.mrf.mxu0
        %v3616 = vadd.f32 %v3573, %v3615
        %3617 = vdwg.mxu0
        %3618 = vmatprep.subr.bf16.mxu0 %v2694
        %3619 = vmatpush1.bf16.msra.mxu0 %v2693
        %3620 = vmatprep.subr.bf16.mxu0 %v2686
        %3621 = vmatpush1.bf16.msra.mxu0 %v2685
        %3622 = vmatprep.subr.bf16.mxu0 %v2678
        %3623 = vmatpush1.bf16.msra.mxu0 %v2677
        %3624 = vmatprep.subr.bf16.mxu0 %v2670
        %3625 = vmatpush1.bf16.msra.mxu0 %v2669
        %3626 = vmatprep.subr.bf16.mxu0 %v2662
        %3627 = vmatpush1.bf16.msra.mxu0 %v2661
        %3628 = vmatprep.subr.bf16.mxu0 %v2654
        %3629 = vmatpush1.bf16.msra.mxu0 %v2653
        %3630 = vmatprep.subr.bf16.mxu0 %v2646
        %3631 = vmatpush1.bf16.msra.mxu0 %v2645
        %3632 = vmatprep.subr.bf16.mxu0 %v2638
        %3633 = vmatpush1.bf16.msra.mxu0 %v2637
        %3634 = vmatprep.subr.bf16.mxu0 0
        %3635 = vmatpush2.bf16.msra.mxu0 0
        %3636 = vmatprep.subr.bf16.mxu0 0
        %3637 = vmatpush2.bf16.msra.mxu0 0
        %3638 = vmatprep.subr.bf16.mxu0 0
        %3639 = vmatpush2.bf16.msra.mxu0 0
        %3640 = vmatprep.subr.bf16.mxu0 0
        %3641 = vmatpush2.bf16.msra.mxu0 0
        %3642 = vmatprep.subr.bf16.mxu0 0
        %3643 = vmatpush2.bf16.msra.mxu0 0
        %3644 = vmatprep.subr.bf16.mxu0 0
        %3645 = vmatpush2.bf16.msra.mxu0 0
        %3646 = vmatprep.subr.bf16.mxu0 0
        %3647 = vmatpush2.bf16.msra.mxu0 0
        %3648 = vmatprep.subr.bf16.mxu0 0
        %3649 = vmatpush2.bf16.msra.mxu0 0
        %3650 = vmatprep.mubr.bf16.mxu0 0
        %3651 = vmatmul.mubr.bf16.gmra.mxu0 %v897
        %v3652 = vpop.f32.mrf.mxu0
        %v3653 = vadd.f32 %v3610, %v3652
        %v3654 = vpop.f32.mrf.mxu0
        %v3655 = vadd.f32 %v3612, %v3654
        %v3656 = vpop.f32.mrf.mxu0
        %v3657 = vadd.f32 %v3614, %v3656
        %v3658 = vpop.f32.mrf.mxu0
        %v3659 = vadd.f32 %v3616, %v3658
        %3660 = vdwg.mxu0
        %3661 = vmatprep.subr.bf16.mxu0 %v2312
        %3662 = vmatpush1.bf16.msra.mxu0 %v2311
        %3663 = vmatprep.subr.bf16.mxu0 %v2304
        %3664 = vmatpush1.bf16.msra.mxu0 %v2303
        %3665 = vmatprep.subr.bf16.mxu0 %v2296
        %3666 = vmatpush1.bf16.msra.mxu0 %v2295
        %3667 = vmatprep.subr.bf16.mxu0 %v2288
        %3668 = vmatpush1.bf16.msra.mxu0 %v2287
        %3669 = vmatprep.subr.bf16.mxu0 %v2280
        %3670 = vmatpush1.bf16.msra.mxu0 %v2279
        %3671 = vmatprep.subr.bf16.mxu0 %v2272
        %3672 = vmatpush1.bf16.msra.mxu0 %v2271
        %3673 = vmatprep.subr.bf16.mxu0 %v2264
        %3674 = vmatpush1.bf16.msra.mxu0 %v2263
        %3675 = vmatprep.subr.bf16.mxu0 %v2256
        %3676 = vmatpush1.bf16.msra.mxu0 %v2255
        %3677 = vmatprep.subr.bf16.mxu0 %v2376
        %3678 = vmatpush2.bf16.msra.mxu0 %v2375
        %3679 = vmatprep.subr.bf16.mxu0 %v2368
        %3680 = vmatpush2.bf16.msra.mxu0 %v2367
        %3681 = vmatprep.subr.bf16.mxu0 %v2360
        %3682 = vmatpush2.bf16.msra.mxu0 %v2359
        %3683 = vmatprep.subr.bf16.mxu0 %v2352
        %3684 = vmatpush2.bf16.msra.mxu0 %v2351
        %3685 = vmatprep.subr.bf16.mxu0 %v2344
        %3686 = vmatpush2.bf16.msra.mxu0 %v2343
        %3687 = vmatprep.subr.bf16.mxu0 %v2336
        %3688 = vmatpush2.bf16.msra.mxu0 %v2335
        %3689 = vmatprep.subr.bf16.mxu0 %v2328
        %3690 = vmatpush2.bf16.msra.mxu0 %v2327
        %3691 = vmatprep.subr.bf16.mxu0 %v2320
        %3692 = vmatpush2.bf16.msra.mxu0 %v2319
        %3693 = vmatprep.mubr.bf16.mxu0 %v892
        %3694 = vmatmul.mubr.bf16.gmra.mxu0 %v891
        %v3695 = vpop.f32.mrf.mxu0
        %v3696 = vadd.f32 %v856, %v3695
        %v3697 = vpop.f32.mrf.mxu0
        %v3698 = vadd.f32 %v860, %v3697
        %v3699 = vpop.f32.mrf.mxu0
        %v3700 = vadd.f32 %v856, %v3699
        %v3701 = vpop.f32.mrf.mxu0
        %v3702 = vadd.f32 %v860, %v3701
        %3703 = vdwg.mxu0
        %3704 = vmatprep.subr.bf16.mxu0 %v2440
        %3705 = vmatpush1.bf16.msra.mxu0 %v2439
        %3706 = vmatprep.subr.bf16.mxu0 %v2432
        %3707 = vmatpush1.bf16.msra.mxu0 %v2431
        %3708 = vmatprep.subr.bf16.mxu0 %v2424
        %3709 = vmatpush1.bf16.msra.mxu0 %v2423
        %3710 = vmatprep.subr.bf16.mxu0 %v2416
        %3711 = vmatpush1.bf16.msra.mxu0 %v2415
        %3712 = vmatprep.subr.bf16.mxu0 %v2408
        %3713 = vmatpush1.bf16.msra.mxu0 %v2407
        %3714 = vmatprep.subr.bf16.mxu0 %v2400
        %3715 = vmatpush1.bf16.msra.mxu0 %v2399
        %3716 = vmatprep.subr.bf16.mxu0 %v2392
        %3717 = vmatpush1.bf16.msra.mxu0 %v2391
        %3718 = vmatprep.subr.bf16.mxu0 %v2384
        %3719 = vmatpush1.bf16.msra.mxu0 %v2383
        %3720 = vmatprep.subr.bf16.mxu0 %v2504
        %3721 = vmatpush2.bf16.msra.mxu0 %v2503
        %3722 = vmatprep.subr.bf16.mxu0 %v2496
        %3723 = vmatpush2.bf16.msra.mxu0 %v2495
        %3724 = vmatprep.subr.bf16.mxu0 %v2488
        %3725 = vmatpush2.bf16.msra.mxu0 %v2487
        %3726 = vmatprep.subr.bf16.mxu0 %v2480
        %3727 = vmatpush2.bf16.msra.mxu0 %v2479
        %3728 = vmatprep.subr.bf16.mxu0 %v2472
        %3729 = vmatpush2.bf16.msra.mxu0 %v2471
        %3730 = vmatprep.subr.bf16.mxu0 %v2464
        %3731 = vmatpush2.bf16.msra.mxu0 %v2463
        %3732 = vmatprep.subr.bf16.mxu0 %v2456
        %3733 = vmatpush2.bf16.msra.mxu0 %v2455
        %3734 = vmatprep.subr.bf16.mxu0 %v2448
        %3735 = vmatpush2.bf16.msra.mxu0 %v2447
        %3736 = vmatprep.mubr.bf16.mxu0 %v894
        %3737 = vmatmul.mubr.bf16.gmra.mxu0 %v893
        %v3738 = vpop.f32.mrf.mxu0
        %v3739 = vadd.f32 %v3696, %v3738
        %v3740 = vpop.f32.mrf.mxu0
        %v3741 = vadd.f32 %v3698, %v3740
        %v3742 = vpop.f32.mrf.mxu0
        %v3743 = vadd.f32 %v3700, %v3742
        %v3744 = vpop.f32.mrf.mxu0
        %v3745 = vadd.f32 %v3702, %v3744
        %3746 = vdwg.mxu0
        %3747 = vmatprep.subr.bf16.mxu0 %v2568
        %3748 = vmatpush1.bf16.msra.mxu0 %v2567
        %3749 = vmatprep.subr.bf16.mxu0 %v2560
        %3750 = vmatpush1.bf16.msra.mxu0 %v2559
        %3751 = vmatprep.subr.bf16.mxu0 %v2552
        %3752 = vmatpush1.bf16.msra.mxu0 %v2551
        %3753 = vmatprep.subr.bf16.mxu0 %v2544
        %3754 = vmatpush1.bf16.msra.mxu0 %v2543
        %3755 = vmatprep.subr.bf16.mxu0 %v2536
        %3756 = vmatpush1.bf16.msra.mxu0 %v2535
        %3757 = vmatprep.subr.bf16.mxu0 %v2528
        %3758 = vmatpush1.bf16.msra.mxu0 %v2527
        %3759 = vmatprep.subr.bf16.mxu0 %v2520
        %3760 = vmatpush1.bf16.msra.mxu0 %v2519
        %3761 = vmatprep.subr.bf16.mxu0 %v2512
        %3762 = vmatpush1.bf16.msra.mxu0 %v2511
        %3763 = vmatprep.subr.bf16.mxu0 %v2632
        %3764 = vmatpush2.bf16.msra.mxu0 %v2631
        %3765 = vmatprep.subr.bf16.mxu0 %v2624
        %3766 = vmatpush2.bf16.msra.mxu0 %v2623
        %3767 = vmatprep.subr.bf16.mxu0 %v2616
        %3768 = vmatpush2.bf16.msra.mxu0 %v2615
        %3769 = vmatprep.subr.bf16.mxu0 %v2608
        %3770 = vmatpush2.bf16.msra.mxu0 %v2607
        %3771 = vmatprep.subr.bf16.mxu0 %v2600
        %3772 = vmatpush2.bf16.msra.mxu0 %v2599
        %3773 = vmatprep.subr.bf16.mxu0 %v2592
        %3774 = vmatpush2.bf16.msra.mxu0 %v2591
        %3775 = vmatprep.subr.bf16.mxu0 %v2584
        %3776 = vmatpush2.bf16.msra.mxu0 %v2583
        %3777 = vmatprep.subr.bf16.mxu0 %v2576
        %3778 = vmatpush2.bf16.msra.mxu0 %v2575
        %3779 = vmatprep.mubr.bf16.mxu0 %v896
        %3780 = vmatmul.mubr.bf16.gmra.mxu0 %v895
        %v3781 = vpop.f32.mrf.mxu0
        %v3782 = vadd.f32 %v3739, %v3781
        %v3783 = vpop.f32.mrf.mxu0
        %v3784 = vadd.f32 %v3741, %v3783
        %v3785 = vpop.f32.mrf.mxu0
        %v3786 = vadd.f32 %v3743, %v3785
        %v3787 = vpop.f32.mrf.mxu0
        %v3788 = vadd.f32 %v3745, %v3787
        %3789 = vdwg.mxu0
        %3790 = vmatprep.subr.bf16.mxu0 %v2696
        %3791 = vmatpush1.bf16.msra.mxu0 %v2695
        %3792 = vmatprep.subr.bf16.mxu0 %v2688
        %3793 = vmatpush1.bf16.msra.mxu0 %v2687
        %3794 = vmatprep.subr.bf16.mxu0 %v2680
        %3795 = vmatpush1.bf16.msra.mxu0 %v2679
        %3796 = vmatprep.subr.bf16.mxu0 %v2672
        %3797 = vmatpush1.bf16.msra.mxu0 %v2671
        %3798 = vmatprep.subr.bf16.mxu0 %v2664
        %3799 = vmatpush1.bf16.msra.mxu0 %v2663
        %3800 = vmatprep.subr.bf16.mxu0 %v2656
        %3801 = vmatpush1.bf16.msra.mxu0 %v2655
        %3802 = vmatprep.subr.bf16.mxu0 %v2648
        %3803 = vmatpush1.bf16.msra.mxu0 %v2647
        %3804 = vmatprep.subr.bf16.mxu0 %v2640
        %3805 = vmatpush1.bf16.msra.mxu0 %v2639
        %3806 = vmatprep.subr.bf16.mxu0 0
        %3807 = vmatpush2.bf16.msra.mxu0 0
        %3808 = vmatprep.subr.bf16.mxu0 0
        %3809 = vmatpush2.bf16.msra.mxu0 0
        %3810 = vmatprep.subr.bf16.mxu0 0
        %3811 = vmatpush2.bf16.msra.mxu0 0
        %3812 = vmatprep.subr.bf16.mxu0 0
        %3813 = vmatpush2.bf16.msra.mxu0 0
        %3814 = vmatprep.subr.bf16.mxu0 0
        %3815 = vmatpush2.bf16.msra.mxu0 0
        %3816 = vmatprep.subr.bf16.mxu0 0
        %3817 = vmatpush2.bf16.msra.mxu0 0
        %3818 = vmatprep.subr.bf16.mxu0 0
        %3819 = vmatpush2.bf16.msra.mxu0 0
        %3820 = vmatprep.subr.bf16.mxu0 0
        %3821 = vmatpush2.bf16.msra.mxu0 0
        %3822 = vmatprep.mubr.bf16.mxu0 0
        %3823 = vmatmul.mubr.bf16.gmra.mxu0 %v897
        %v3824 = vpop.f32.mrf.mxu0
        %v3825 = vadd.f32 %v3782, %v3824
        %v3826 = vpop.f32.mrf.mxu0
        %v3827 = vadd.f32 %v3784, %v3826
        %v3828 = vpop.f32.mrf.mxu0
        %v3829 = vadd.f32 %v3786, %v3828
        %v3830 = vpop.f32.mrf.mxu0
        %v3831 = vadd.f32 %v3788, %v3830
        %3832 = vdwg.mxu0
        %v3833 = vmax.f32 %v3309, 0.0
        %v3834 = vmax.f32 %v3311, 0.0
        %v3835 = vmax.f32 %v3481, 0.0
        %v3836 = vmax.f32 %v3483, 0.0
        %v3837 = vmax.f32 %v3653, 0.0
        %v3838 = vmax.f32 %v3655, 0.0
        %v3839 = vmax.f32 %v3825, 0.0
        %v3840 = vmax.f32 %v3827, 0.0
        %v3841 = vmax.f32 %v3313, 0.0
        %v3842 = vmax.f32 %v3315, 0.0
        %v3843 = vmax.f32 %v3485, 0.0
        %v3844 = vmax.f32 %v3487, 0.0
        %v3845 = vmax.f32 %v3657, 0.0
        %v3846 = vmax.f32 %v3659, 0.0
        %v3847 = vmax.f32 %v3829, 0.0
        %v3848 = vmax.f32 %v3831, 0.0
        %v3849 = vld [vmem:[#allocation2] sm:$0xff]
        %v3850 = vld [vmem:[#allocation2 + $0x8] sm:$0xff]
        %v3851 = vpack.c.bf16 %v3841, %v3833
        %v3852 = vpack.c.bf16 %v3842, %v3834
        %v3853 = vpack.c.bf16 %v3843, %v3835
        %v3854 = vpack.c.bf16 %v3844, %v3836
        %v3855 = vpack.c.bf16 %v3845, %v3837
        %v3856 = vpack.c.bf16 %v3846, %v3838
        %v3857 = vpack.c.bf16 %v3847, %v3839
        %v3858 = vpack.c.bf16 %v3848, %v3840
        %v3859 = vld [vmem:[%s323] sm:$0xf]
        %v3860 = vld [vmem:[%s323 + $0x4] sm:$0xf]
        %v3861 = vld [vmem:[%s323 + $0x8] sm:$0xf]
        %v3862 = vld [vmem:[%s323 + $0xc] sm:$0xf]
        %v3863 = vld [vmem:[%s323 + $0x10] sm:$0xf]
        %v3864 = vld [vmem:[%s323 + $0x14] sm:$0xf]
        %v3865 = vld [vmem:[%s323 + $0x18] sm:$0xf]
        %v3866 = vld [vmem:[%s323 + $0x1c] sm:$0xf]
        %v3867 = vld [vmem:[%s323 + $0x20] sm:$0xf]
        %v3868 = vld [vmem:[%s323 + $0x24] sm:$0xf]
        %v3869 = vld [vmem:[%s323 + $0x28] sm:$0xf]
        %v3870 = vld [vmem:[%s323 + $0x2c] sm:$0xf]
        %v3871 = vld [vmem:[%s323 + $0x30] sm:$0xf]
        %v3872 = vld [vmem:[%s323 + $0x34] sm:$0xf]
        %v3873 = vld [vmem:[%s323 + $0x38] sm:$0xf]
        %v3874 = vld [vmem:[%s323 + $0x3c] sm:$0xf]
        %v3875 = vld [vmem:[%s323 + $0x40] sm:$0xf]
        %v3876 = vld [vmem:[%s323 + $0x44] sm:$0xf]
        %v3877 = vld [vmem:[%s323 + $0x48] sm:$0xf]
        %v3878 = vld [vmem:[%s323 + $0x4c] sm:$0xf]
        %v3879 = vld [vmem:[%s323 + $0x50] sm:$0xf]
        %v3880 = vld [vmem:[%s323 + $0x54] sm:$0xf]
        %v3881 = vld [vmem:[%s323 + $0x58] sm:$0xf]
        %v3882 = vld [vmem:[%s323 + $0x5c] sm:$0xf]
        %v3883 = vld [vmem:[%s323 + $0x60] sm:$0xf]
        %v3884 = vld [vmem:[%s323 + $0x64] sm:$0xf]
        %v3885 = vld [vmem:[%s323 + $0x68] sm:$0xf]
        %v3886 = vld [vmem:[%s323 + $0x6c] sm:$0xf]
        %v3887 = vld [vmem:[%s323 + $0x70] sm:$0xf]
        %v3888 = vld [vmem:[%s323 + $0x74] sm:$0xf]
        %v3889 = vld [vmem:[%s323 + $0x78] sm:$0xf]
        %v3890 = vld [vmem:[%s323 + $0x7c] sm:$0xf]
        %v3891 = vld [vmem:[%s323 + $0x80] sm:$0xf]
        %v3892 = vld [vmem:[%s323 + $0x84] sm:$0xf]
        %v3893 = vld [vmem:[%s323 + $0x88] sm:$0xf]
        %v3894 = vld [vmem:[%s323 + $0x8c] sm:$0xf]
        %v3895 = vld [vmem:[%s323 + $0x90] sm:$0xf]
        %v3896 = vld [vmem:[%s323 + $0x94] sm:$0xf]
        %v3897 = vld [vmem:[%s323 + $0x98] sm:$0xf]
        %v3898 = vld [vmem:[%s323 + $0x9c] sm:$0xf]
        %v3899 = vld [vmem:[%s323 + $0xa0] sm:$0xf]
        %v3900 = vld [vmem:[%s323 + $0xa4] sm:$0xf]
        %v3901 = vld [vmem:[%s323 + $0xa8] sm:$0xf]
        %v3902 = vld [vmem:[%s323 + $0xac] sm:$0xf]
        %v3903 = vld [vmem:[%s323 + $0xb0] sm:$0xf]
        %v3904 = vld [vmem:[%s323 + $0xb4] sm:$0xf]
        %v3905 = vld [vmem:[%s323 + $0xb8] sm:$0xf]
        %v3906 = vld [vmem:[%s323 + $0xbc] sm:$0xf]
        %v3907 = vld [vmem:[%s323 + $0xc0] sm:$0xf]
        %v3908 = vld [vmem:[%s323 + $0xc4] sm:$0xf]
        %v3909 = vld [vmem:[%s323 + $0xc8] sm:$0xf]
        %v3910 = vld [vmem:[%s323 + $0xcc] sm:$0xf]
        %v3911 = vld [vmem:[%s323 + $0xd0] sm:$0xf]
        %v3912 = vld [vmem:[%s323 + $0xd4] sm:$0xf]
        %v3913 = vld [vmem:[%s323 + $0xd8] sm:$0xf]
        %v3914 = vld [vmem:[%s323 + $0xdc] sm:$0xf]
        %v3915 = vld [vmem:[%s323 + $0xe0] sm:$0xf]
        %v3916 = vld [vmem:[%s323 + $0xe4] sm:$0xf]
        %v3917 = vld [vmem:[%s323 + $0xe8] sm:$0xf]
        %v3918 = vld [vmem:[%s323 + $0xec] sm:$0xf]
        %v3919 = vld [vmem:[%s323 + $0xf0] sm:$0xf]
        %v3920 = vld [vmem:[%s323 + $0xf4] sm:$0xf]
        %v3921 = vld [vmem:[%s323 + $0xf8] sm:$0xf]
        %v3922 = vld [vmem:[%s323 + $0xfc] sm:$0xf]
        %v3923 = vld [vmem:[%s323 + $0x100] sm:$0xf]
        %v3924 = vld [vmem:[%s323 + $0x104] sm:$0xf]
        %v3925 = vld [vmem:[%s323 + $0x108] sm:$0xf]
        %v3926 = vld [vmem:[%s323 + $0x10c] sm:$0xf]
        %v3927 = vld [vmem:[%s323 + $0x110] sm:$0xf]
        %v3928 = vld [vmem:[%s323 + $0x114] sm:$0xf]
        %v3929 = vld [vmem:[%s323 + $0x118] sm:$0xf]
        %v3930 = vld [vmem:[%s323 + $0x11c] sm:$0xf]
        %v3931 = vld [vmem:[%s323 + $0x120] sm:$0xf]
        %v3932 = vld [vmem:[%s323 + $0x124] sm:$0xf]
        %v3933 = vld [vmem:[%s323 + $0x128] sm:$0xf]
        %v3934 = vld [vmem:[%s323 + $0x12c] sm:$0xf]
        %v3935 = vld [vmem:[%s323 + $0x130] sm:$0xf]
        %v3936 = vld [vmem:[%s323 + $0x134] sm:$0xf]
        %v3937 = vld [vmem:[%s323 + $0x138] sm:$0xf]
        %v3938 = vld [vmem:[%s323 + $0x13c] sm:$0xf]
        %v3939 = vld [vmem:[%s323 + $0x140] sm:$0xf]
        %v3940 = vld [vmem:[%s323 + $0x144] sm:$0xf]
        %v3941 = vld [vmem:[%s323 + $0x148] sm:$0xf]
        %v3942 = vld [vmem:[%s323 + $0x14c] sm:$0xf]
        %v3943 = vld [vmem:[%s323 + $0x150] sm:$0xf]
        %v3944 = vld [vmem:[%s323 + $0x154] sm:$0xf]
        %v3945 = vld [vmem:[%s323 + $0x158] sm:$0xf]
        %v3946 = vld [vmem:[%s323 + $0x15c] sm:$0xf]
        %v3947 = vld [vmem:[%s323 + $0x160] sm:$0xf]
        %v3948 = vld [vmem:[%s323 + $0x164] sm:$0xf]
        %v3949 = vld [vmem:[%s323 + $0x168] sm:$0xf]
        %v3950 = vld [vmem:[%s323 + $0x16c] sm:$0xf]
        %v3951 = vld [vmem:[%s323 + $0x170] sm:$0xf]
        %v3952 = vld [vmem:[%s323 + $0x174] sm:$0xf]
        %v3953 = vld [vmem:[%s323 + $0x178] sm:$0xf]
        %v3954 = vld [vmem:[%s323 + $0x17c] sm:$0xf]
        %v3955 = vld [vmem:[%s323 + $0x180] sm:$0xf]
        %v3956 = vld [vmem:[%s323 + $0x184] sm:$0xf]
        %v3957 = vld [vmem:[%s323 + $0x188] sm:$0xf]
        %v3958 = vld [vmem:[%s323 + $0x18c] sm:$0xf]
        %v3959 = vld [vmem:[%s323 + $0x190] sm:$0xf]
        %v3960 = vld [vmem:[%s323 + $0x194] sm:$0xf]
        %v3961 = vld [vmem:[%s323 + $0x198] sm:$0xf]
        %v3962 = vld [vmem:[%s323 + $0x19c] sm:$0xf]
        %v3963 = vld [vmem:[%s323 + $0x1a0] sm:$0xf]
        %v3964 = vld [vmem:[%s323 + $0x1a4] sm:$0xf]
        %v3965 = vld [vmem:[%s323 + $0x1a8] sm:$0xf]
        %v3966 = vld [vmem:[%s323 + $0x1ac] sm:$0xf]
        %v3967 = vld [vmem:[%s323 + $0x1b0] sm:$0xf]
        %v3968 = vld [vmem:[%s323 + $0x1b4] sm:$0xf]
        %v3969 = vld [vmem:[%s323 + $0x1b8] sm:$0xf]
        %v3970 = vld [vmem:[%s323 + $0x1bc] sm:$0xf]
        %v3971 = vld [vmem:[%s323 + $0x1c0] sm:$0xf]
        %v3972 = vld [vmem:[%s323 + $0x1c4] sm:$0xf]
        %v3973 = vld [vmem:[%s323 + $0x1c8] sm:$0xf]
        %v3974 = vld [vmem:[%s323 + $0x1cc] sm:$0xf]
        %v3975 = vld [vmem:[%s323 + $0x1d0] sm:$0xf]
        %v3976 = vld [vmem:[%s323 + $0x1d4] sm:$0xf]
        %v3977 = vld [vmem:[%s323 + $0x1d8] sm:$0xf]
        %v3978 = vld [vmem:[%s323 + $0x1dc] sm:$0xf]
        %v3979 = vld [vmem:[%s323 + $0x1e0] sm:$0xf]
        %v3980 = vld [vmem:[%s323 + $0x1e4] sm:$0xf]
        %v3981 = vld [vmem:[%s323 + $0x1e8] sm:$0xf]
        %v3982 = vld [vmem:[%s323 + $0x1ec] sm:$0xf]
        %v3983 = vld [vmem:[%s323 + $0x1f0] sm:$0xf]
        %v3984 = vld [vmem:[%s323 + $0x1f4] sm:$0xf]
        %v3985 = vld [vmem:[%s323 + $0x1f8] sm:$0xf]
        %v3986 = vld [vmem:[%s323 + $0x1fc] sm:$0xf]
        %v4115 = vunpack.c.l.b16 %v3859
        %v4116 = vunpack.c.l.b16 %v3860
        %v4117 = vunpack.c.l.b16 %v3861
        %v4118 = vunpack.c.l.b16 %v3862
        %v4119 = vunpack.c.l.b16 %v3863
        %v4120 = vunpack.c.l.b16 %v3864
        %v4121 = vunpack.c.l.b16 %v3865
        %v4122 = vunpack.c.l.b16 %v3866
        %v4123 = vunpack.c.l.b16 %v3867
        %v4124 = vunpack.c.l.b16 %v3868
        %v4125 = vunpack.c.l.b16 %v3869
        %v4126 = vunpack.c.l.b16 %v3870
        %v4127 = vunpack.c.l.b16 %v3871
        %v4128 = vunpack.c.l.b16 %v3872
        %v4129 = vunpack.c.l.b16 %v3873
        %v4130 = vunpack.c.l.b16 %v3874
        %v4131 = vunpack.c.l.b16 %v3875
        %v4132 = vunpack.c.l.b16 %v3876
        %v4133 = vunpack.c.l.b16 %v3877
        %v4134 = vunpack.c.l.b16 %v3878
        %v4135 = vunpack.c.l.b16 %v3879
        %v4136 = vunpack.c.l.b16 %v3880
        %v4137 = vunpack.c.l.b16 %v3881
        %v4138 = vunpack.c.l.b16 %v3882
        %v4139 = vunpack.c.l.b16 %v3883
        %v4140 = vunpack.c.l.b16 %v3884
        %v4141 = vunpack.c.l.b16 %v3885
        %v4142 = vunpack.c.l.b16 %v3886
        %v4143 = vunpack.c.l.b16 %v3887
        %v4144 = vunpack.c.l.b16 %v3888
        %v4145 = vunpack.c.l.b16 %v3889
        %v4146 = vunpack.c.l.b16 %v3890
        %v4147 = vunpack.c.l.b16 %v3891
        %v4148 = vunpack.c.l.b16 %v3892
        %v4149 = vunpack.c.l.b16 %v3893
        %v4150 = vunpack.c.l.b16 %v3894
        %v4151 = vunpack.c.l.b16 %v3895
        %v4152 = vunpack.c.l.b16 %v3896
        %v4153 = vunpack.c.l.b16 %v3897
        %v4154 = vunpack.c.l.b16 %v3898
        %v4155 = vunpack.c.l.b16 %v3899
        %v4156 = vunpack.c.l.b16 %v3900
        %v4157 = vunpack.c.l.b16 %v3901
        %v4158 = vunpack.c.l.b16 %v3902
        %v4159 = vunpack.c.l.b16 %v3903
        %v4160 = vunpack.c.l.b16 %v3904
        %v4161 = vunpack.c.l.b16 %v3905
        %v4162 = vunpack.c.l.b16 %v3906
        %v4163 = vunpack.c.l.b16 %v3907
        %v4164 = vunpack.c.l.b16 %v3908
        %v4165 = vunpack.c.l.b16 %v3909
        %v4166 = vunpack.c.l.b16 %v3910
        %v4167 = vunpack.c.l.b16 %v3911
        %v4168 = vunpack.c.l.b16 %v3912
        %v4169 = vunpack.c.l.b16 %v3913
        %v4170 = vunpack.c.l.b16 %v3914
        %v4171 = vunpack.c.l.b16 %v3915
        %v4172 = vunpack.c.l.b16 %v3916
        %v4173 = vunpack.c.l.b16 %v3917
        %v4174 = vunpack.c.l.b16 %v3918
        %v4175 = vunpack.c.l.b16 %v3919
        %v4176 = vunpack.c.l.b16 %v3920
        %v4177 = vunpack.c.l.b16 %v3921
        %v4178 = vunpack.c.l.b16 %v3922
        %v4179 = vunpack.c.l.b16 %v3923
        %v4180 = vunpack.c.l.b16 %v3924
        %v4181 = vunpack.c.l.b16 %v3925
        %v4182 = vunpack.c.l.b16 %v3926
        %v4183 = vunpack.c.l.b16 %v3927
        %v4184 = vunpack.c.l.b16 %v3928
        %v4185 = vunpack.c.l.b16 %v3929
        %v4186 = vunpack.c.l.b16 %v3930
        %v4187 = vunpack.c.l.b16 %v3931
        %v4188 = vunpack.c.l.b16 %v3932
        %v4189 = vunpack.c.l.b16 %v3933
        %v4190 = vunpack.c.l.b16 %v3934
        %v4191 = vunpack.c.l.b16 %v3935
        %v4192 = vunpack.c.l.b16 %v3936
        %v4193 = vunpack.c.l.b16 %v3937
        %v4194 = vunpack.c.l.b16 %v3938
        %v4195 = vunpack.c.l.b16 %v3939
        %v4196 = vunpack.c.l.b16 %v3940
        %v4197 = vunpack.c.l.b16 %v3941
        %v4198 = vunpack.c.l.b16 %v3942
        %v4199 = vunpack.c.l.b16 %v3943
        %v4200 = vunpack.c.l.b16 %v3944
        %v4201 = vunpack.c.l.b16 %v3945
        %v4202 = vunpack.c.l.b16 %v3946
        %v4203 = vunpack.c.l.b16 %v3947
        %v4204 = vunpack.c.l.b16 %v3948
        %v4205 = vunpack.c.l.b16 %v3949
        %v4206 = vunpack.c.l.b16 %v3950
        %v4207 = vunpack.c.l.b16 %v3951
        %v4208 = vunpack.c.l.b16 %v3952
        %v4209 = vunpack.c.l.b16 %v3953
        %v4210 = vunpack.c.l.b16 %v3954
        %v4211 = vunpack.c.l.b16 %v3955
        %v4212 = vunpack.c.l.b16 %v3956
        %v4213 = vunpack.c.l.b16 %v3957
        %v4214 = vunpack.c.l.b16 %v3958
        %v4215 = vunpack.c.l.b16 %v3959
        %v4216 = vunpack.c.l.b16 %v3960
        %v4217 = vunpack.c.l.b16 %v3961
        %v4218 = vunpack.c.l.b16 %v3962
        %v4219 = vunpack.c.l.b16 %v3963
        %v4220 = vunpack.c.l.b16 %v3964
        %v4221 = vunpack.c.l.b16 %v3965
        %v4222 = vunpack.c.l.b16 %v3966
        %v4223 = vunpack.c.l.b16 %v3967
        %v4224 = vunpack.c.l.b16 %v3968
        %v4225 = vunpack.c.l.b16 %v3969
        %v4226 = vunpack.c.l.b16 %v3970
        %v4227 = vunpack.c.l.b16 %v3971
        %v4228 = vunpack.c.l.b16 %v3972
        %v4229 = vunpack.c.l.b16 %v3973
        %v4230 = vunpack.c.l.b16 %v3974
        %v4231 = vunpack.c.l.b16 %v3975
        %v4232 = vunpack.c.l.b16 %v3976
        %v4233 = vunpack.c.l.b16 %v3977
        %v4234 = vunpack.c.l.b16 %v3978
        %v4235 = vunpack.c.l.b16 %v3979
        %v4236 = vunpack.c.l.b16 %v3980
        %v4237 = vunpack.c.l.b16 %v3981
        %v4238 = vunpack.c.l.b16 %v3982
        %v4239 = vunpack.c.l.b16 %v3983
        %v4240 = vunpack.c.l.b16 %v3984
        %v4241 = vunpack.c.l.b16 %v3985
        %v4242 = vunpack.c.l.b16 %v3986
        %v4243 = vpack.c.b16 %v4116, %v4115
        %v4244 = vpack.c.b16 %v4118, %v4117
        %v4245 = vpack.c.b16 %v4120, %v4119
        %v4246 = vpack.c.b16 %v4122, %v4121
        %v4247 = vpack.c.b16 %v4124, %v4123
        %v4248 = vpack.c.b16 %v4126, %v4125
        %v4249 = vpack.c.b16 %v4128, %v4127
        %v4250 = vpack.c.b16 %v4130, %v4129
        %v4251 = vpack.c.b16 %v4132, %v4131
        %v4252 = vpack.c.b16 %v4134, %v4133
        %v4253 = vpack.c.b16 %v4136, %v4135
        %v4254 = vpack.c.b16 %v4138, %v4137
        %v4255 = vpack.c.b16 %v4140, %v4139
        %v4256 = vpack.c.b16 %v4142, %v4141
        %v4257 = vpack.c.b16 %v4144, %v4143
        %v4258 = vpack.c.b16 %v4146, %v4145
        %v4259 = vpack.c.b16 %v4148, %v4147
        %v4260 = vpack.c.b16 %v4150, %v4149
        %v4261 = vpack.c.b16 %v4152, %v4151
        %v4262 = vpack.c.b16 %v4154, %v4153
        %v4263 = vpack.c.b16 %v4156, %v4155
        %v4264 = vpack.c.b16 %v4158, %v4157
        %v4265 = vpack.c.b16 %v4160, %v4159
        %v4266 = vpack.c.b16 %v4162, %v4161
        %v4267 = vpack.c.b16 %v4164, %v4163
        %v4268 = vpack.c.b16 %v4166, %v4165
        %v4269 = vpack.c.b16 %v4168, %v4167
        %v4270 = vpack.c.b16 %v4170, %v4169
        %v4271 = vpack.c.b16 %v4172, %v4171
        %v4272 = vpack.c.b16 %v4174, %v4173
        %v4273 = vpack.c.b16 %v4176, %v4175
        %v4274 = vpack.c.b16 %v4178, %v4177
        %v4275 = vpack.c.b16 %v4180, %v4179
        %v4276 = vpack.c.b16 %v4182, %v4181
        %v4277 = vpack.c.b16 %v4184, %v4183
        %v4278 = vpack.c.b16 %v4186, %v4185
        %v4279 = vpack.c.b16 %v4188, %v4187
        %v4280 = vpack.c.b16 %v4190, %v4189
        %v4281 = vpack.c.b16 %v4192, %v4191
        %v4282 = vpack.c.b16 %v4194, %v4193
        %v4283 = vpack.c.b16 %v4196, %v4195
        %v4284 = vpack.c.b16 %v4198, %v4197
        %v4285 = vpack.c.b16 %v4200, %v4199
        %v4286 = vpack.c.b16 %v4202, %v4201
        %v4287 = vpack.c.b16 %v4204, %v4203
        %v4288 = vpack.c.b16 %v4206, %v4205
        %v4289 = vpack.c.b16 %v4208, %v4207
        %v4290 = vpack.c.b16 %v4210, %v4209
        %v4291 = vpack.c.b16 %v4212, %v4211
        %v4292 = vpack.c.b16 %v4214, %v4213
        %v4293 = vpack.c.b16 %v4216, %v4215
        %v4294 = vpack.c.b16 %v4218, %v4217
        %v4295 = vpack.c.b16 %v4220, %v4219
        %v4296 = vpack.c.b16 %v4222, %v4221
        %v4297 = vpack.c.b16 %v4224, %v4223
        %v4298 = vpack.c.b16 %v4226, %v4225
        %v4299 = vpack.c.b16 %v4228, %v4227
        %v4300 = vpack.c.b16 %v4230, %v4229
        %v4301 = vpack.c.b16 %v4232, %v4231
        %v4302 = vpack.c.b16 %v4234, %v4233
        %v4303 = vpack.c.b16 %v4236, %v4235
        %v4304 = vpack.c.b16 %v4238, %v4237
        %v4305 = vpack.c.b16 %v4240, %v4239
        %v4306 = vpack.c.b16 %v4242, %v4241
        %4371 = vmatprep.subr.bf16.mxu0 0
        %4372 = vmatpush1.bf16.msra.mxu0 %v4250
        %4373 = vmatprep.subr.bf16.mxu0 0
        %4374 = vmatpush1.bf16.msra.mxu0 %v4249
        %4375 = vmatprep.subr.bf16.mxu0 0
        %4376 = vmatpush1.bf16.msra.mxu0 %v4248
        %4377 = vmatprep.subr.bf16.mxu0 0
        %4378 = vmatpush1.bf16.msra.mxu0 %v4247
        %4379 = vmatprep.subr.bf16.mxu0 0
        %4380 = vmatpush1.bf16.msra.mxu0 %v4246
        %4381 = vmatprep.subr.bf16.mxu0 0
        %4382 = vmatpush1.bf16.msra.mxu0 %v4245
        %4383 = vmatprep.subr.bf16.mxu0 0
        %4384 = vmatpush1.bf16.msra.mxu0 %v4244
        %4385 = vmatprep.subr.bf16.mxu0 0
        %4386 = vmatpush1.bf16.msra.mxu0 %v4243
        %4387 = vmatprep.subr.bf16.mxu0 0
        %4388 = vmatpush2.bf16.msra.mxu0 %v4258
        %4389 = vmatprep.subr.bf16.mxu0 0
        %4390 = vmatpush2.bf16.msra.mxu0 %v4257
        %4391 = vmatprep.subr.bf16.mxu0 0
        %4392 = vmatpush2.bf16.msra.mxu0 %v4256
        %4393 = vmatprep.subr.bf16.mxu0 0
        %4394 = vmatpush2.bf16.msra.mxu0 %v4255
        %4395 = vmatprep.subr.bf16.mxu0 0
        %4396 = vmatpush2.bf16.msra.mxu0 %v4254
        %4397 = vmatprep.subr.bf16.mxu0 0
        %4398 = vmatpush2.bf16.msra.mxu0 %v4253
        %4399 = vmatprep.subr.bf16.mxu0 0
        %4400 = vmatpush2.bf16.msra.mxu0 %v4252
        %4401 = vmatprep.subr.bf16.mxu0 0
        %4402 = vmatpush2.bf16.msra.mxu0 %v4251
        %4403 = vmatprep.mubr.bf16.mxu0 %v3852
        %4404 = vmatmul.mubr.bf16.gmra.mxu0 %v3851
        %v4405 = vpop.f32.mrf.mxu0
        %v4406 = vadd.f32 0.0, %v4405
        %v4407 = vpop.f32.mrf.mxu0
        %v4408 = vpop.f32.mrf.mxu0
        %v4409 = vadd.f32 0.0, %v4408
        %v4410 = vpop.f32.mrf.mxu0
        %4411 = vdwg.mxu0
        %4412 = vmatprep.subr.bf16.mxu0 0
        %4413 = vmatpush1.bf16.msra.mxu0 %v4266
        %4414 = vmatprep.subr.bf16.mxu0 0
        %4415 = vmatpush1.bf16.msra.mxu0 %v4265
        %4416 = vmatprep.subr.bf16.mxu0 0
        %4417 = vmatpush1.bf16.msra.mxu0 %v4264
        %4418 = vmatprep.subr.bf16.mxu0 0
        %4419 = vmatpush1.bf16.msra.mxu0 %v4263
        %4420 = vmatprep.subr.bf16.mxu0 0
        %4421 = vmatpush1.bf16.msra.mxu0 %v4262
        %4422 = vmatprep.subr.bf16.mxu0 0
        %4423 = vmatpush1.bf16.msra.mxu0 %v4261
        %4424 = vmatprep.subr.bf16.mxu0 0
        %4425 = vmatpush1.bf16.msra.mxu0 %v4260
        %4426 = vmatprep.subr.bf16.mxu0 0
        %4427 = vmatpush1.bf16.msra.mxu0 %v4259
        %4428 = vmatprep.subr.bf16.mxu0 0
        %4429 = vmatpush2.bf16.msra.mxu0 %v4274
        %4430 = vmatprep.subr.bf16.mxu0 0
        %4431 = vmatpush2.bf16.msra.mxu0 %v4273
        %4432 = vmatprep.subr.bf16.mxu0 0
        %4433 = vmatpush2.bf16.msra.mxu0 %v4272
        %4434 = vmatprep.subr.bf16.mxu0 0
        %4435 = vmatpush2.bf16.msra.mxu0 %v4271
        %4436 = vmatprep.subr.bf16.mxu0 0
        %4437 = vmatpush2.bf16.msra.mxu0 %v4270
        %4438 = vmatprep.subr.bf16.mxu0 0
        %4439 = vmatpush2.bf16.msra.mxu0 %v4269
        %4440 = vmatprep.subr.bf16.mxu0 0
        %4441 = vmatpush2.bf16.msra.mxu0 %v4268
        %4442 = vmatprep.subr.bf16.mxu0 0
        %4443 = vmatpush2.bf16.msra.mxu0 %v4267
        %4444 = vmatprep.mubr.bf16.mxu0 %v3854
        %4445 = vmatmul.mubr.bf16.gmra.mxu0 %v3853
        %v4446 = vpop.f32.mrf.mxu0
        %v4447 = vadd.f32 %v4406, %v4446
        %v4448 = vpop.f32.mrf.mxu0
        %v4449 = vpop.f32.mrf.mxu0
        %v4450 = vadd.f32 %v4409, %v4449
        %v4451 = vpop.f32.mrf.mxu0
        %4452 = vdwg.mxu0
        %4453 = vmatprep.subr.bf16.mxu0 0
        %4454 = vmatpush1.bf16.msra.mxu0 %v4282
        %4455 = vmatprep.subr.bf16.mxu0 0
        %4456 = vmatpush1.bf16.msra.mxu0 %v4281
        %4457 = vmatprep.subr.bf16.mxu0 0
        %4458 = vmatpush1.bf16.msra.mxu0 %v4280
        %4459 = vmatprep.subr.bf16.mxu0 0
        %4460 = vmatpush1.bf16.msra.mxu0 %v4279
        %4461 = vmatprep.subr.bf16.mxu0 0
        %4462 = vmatpush1.bf16.msra.mxu0 %v4278
        %4463 = vmatprep.subr.bf16.mxu0 0
        %4464 = vmatpush1.bf16.msra.mxu0 %v4277
        %4465 = vmatprep.subr.bf16.mxu0 0
        %4466 = vmatpush1.bf16.msra.mxu0 %v4276
        %4467 = vmatprep.subr.bf16.mxu0 0
        %4468 = vmatpush1.bf16.msra.mxu0 %v4275
        %4469 = vmatprep.subr.bf16.mxu0 0
        %4470 = vmatpush2.bf16.msra.mxu0 %v4290
        %4471 = vmatprep.subr.bf16.mxu0 0
        %4472 = vmatpush2.bf16.msra.mxu0 %v4289
        %4473 = vmatprep.subr.bf16.mxu0 0
        %4474 = vmatpush2.bf16.msra.mxu0 %v4288
        %4475 = vmatprep.subr.bf16.mxu0 0
        %4476 = vmatpush2.bf16.msra.mxu0 %v4287
        %4477 = vmatprep.subr.bf16.mxu0 0
        %4478 = vmatpush2.bf16.msra.mxu0 %v4286
        %4479 = vmatprep.subr.bf16.mxu0 0
        %4480 = vmatpush2.bf16.msra.mxu0 %v4285
        %4481 = vmatprep.subr.bf16.mxu0 0
        %4482 = vmatpush2.bf16.msra.mxu0 %v4284
        %4483 = vmatprep.subr.bf16.mxu0 0
        %4484 = vmatpush2.bf16.msra.mxu0 %v4283
        %4485 = vmatprep.mubr.bf16.mxu0 %v3856
        %4486 = vmatmul.mubr.bf16.gmra.mxu0 %v3855
        %v4487 = vpop.f32.mrf.mxu0
        %v4488 = vadd.f32 %v4447, %v4487
        %v4489 = vpop.f32.mrf.mxu0
        %v4490 = vpop.f32.mrf.mxu0
        %v4491 = vadd.f32 %v4450, %v4490
        %v4492 = vpop.f32.mrf.mxu0
        %4493 = vdwg.mxu0
        %4494 = vmatprep.subr.bf16.mxu0 0
        %4495 = vmatpush1.bf16.msra.mxu0 %v4298
        %4496 = vmatprep.subr.bf16.mxu0 0
        %4497 = vmatpush1.bf16.msra.mxu0 %v4297
        %4498 = vmatprep.subr.bf16.mxu0 0
        %4499 = vmatpush1.bf16.msra.mxu0 %v4296
        %4500 = vmatprep.subr.bf16.mxu0 0
        %4501 = vmatpush1.bf16.msra.mxu0 %v4295
        %4502 = vmatprep.subr.bf16.mxu0 0
        %4503 = vmatpush1.bf16.msra.mxu0 %v4294
        %4504 = vmatprep.subr.bf16.mxu0 0
        %4505 = vmatpush1.bf16.msra.mxu0 %v4293
        %4506 = vmatprep.subr.bf16.mxu0 0
        %4507 = vmatpush1.bf16.msra.mxu0 %v4292
        %4508 = vmatprep.subr.bf16.mxu0 0
        %4509 = vmatpush1.bf16.msra.mxu0 %v4291
        %4510 = vmatprep.subr.bf16.mxu0 0
        %4511 = vmatpush2.bf16.msra.mxu0 %v4306
        %4512 = vmatprep.subr.bf16.mxu0 0
        %4513 = vmatpush2.bf16.msra.mxu0 %v4305
        %4514 = vmatprep.subr.bf16.mxu0 0
        %4515 = vmatpush2.bf16.msra.mxu0 %v4304
        %4516 = vmatprep.subr.bf16.mxu0 0
        %4517 = vmatpush2.bf16.msra.mxu0 %v4303
        %4518 = vmatprep.subr.bf16.mxu0 0
        %4519 = vmatpush2.bf16.msra.mxu0 %v4302
        %4520 = vmatprep.subr.bf16.mxu0 0
        %4521 = vmatpush2.bf16.msra.mxu0 %v4301
        %4522 = vmatprep.subr.bf16.mxu0 0
        %4523 = vmatpush2.bf16.msra.mxu0 %v4300
        %4524 = vmatprep.subr.bf16.mxu0 0
        %4525 = vmatpush2.bf16.msra.mxu0 %v4299
        %4526 = vmatprep.mubr.bf16.mxu0 %v3858
        %4527 = vmatmul.mubr.bf16.gmra.mxu0 %v3857
        %v4528 = vpop.f32.mrf.mxu0
        %v4529 = vadd.f32 %v4488, %v4528
        %v4530 = vpop.f32.mrf.mxu0
        %v4531 = vpop.f32.mrf.mxu0
        %v4532 = vadd.f32 %v4491, %v4531
        %v4533 = vpop.f32.mrf.mxu0
        %4534 = vdwg.mxu0
        %v4535 = vadd.f32 %v3849, %v4529
        %v4536 = vadd.f32 %v3850, %v4532
        %4537 = vst [vmem:[#allocation2] sm:$0xff] %v4535
        %4538 = vst [vmem:[#allocation2 + $0x8] sm:$0xff] %v4536
        %p4539 = scmp.eq.s32.totalorder %s29, 3
        // Predicated region
        $region65: #{tpu_custom_call.1} parent=39 // pred_check
          %p4540 = pneg %p4539
        $region66: #{tpu_custom_call.1} parent=39 // pred_check_branch
          %4542 = sbr.rel (%p4540) target = $region68
        $region67: #{tpu_custom_call.1} parent=39 // pred_region
          %v4543 = vld [vmem:[#allocation2] sm:$0xff]
          %v4544 = vld [vmem:[#allocation2 + $0x8] sm:$0xff]
          %v4545 = vld [vmem:[#allocation11] sm:$0x1]
          %v4547 = vlaneseq
          %v4548 = vshrl.u32 %v4547, 7
          %v4549 = vsub.s32 0, %v4548
          %v4550 = vrot.slane %v4545, %v4549
          %v4552 = vadd.f32 %v4543, %v4550
          %v4553 = vadd.f32 %v4544, %v4550
          %4554 = vst [vmem:[#allocation12] sm:$0xff] %v4552
          %4555 = vst [vmem:[#allocation12 + $0x8] sm:$0xff] %v4553
        $region68: #{tpu_custom_call.1} parent=39 // pred_fallthru
          _
        // Predicated region
        $region69: #{tpu_custom_call.1} parent=39 // pred_check
          %p4556 = pneg %p179
        $region70: #{tpu_custom_call.1} parent=39 // pred_check_branch
          %4558 = sbr.rel (%p4556) target = $region72
        $region71: #{tpu_custom_call.1} parent=39 // pred_region
          %s4559 = smul.u32 2, %s28
          %s4561 = ssub.s32 256, 256
          %4562 = vsyncadd [#allocation5], %s4561
          %s4563 = smul.addr %s4559, 128
          %s4564 = scalar_lea.hbm %s5, %s4563
          %s4565 = sshll.u32 [#allocation12], 4
          %s4566 = int_to_ptr.vmem [resolvable:$true] %s4565
          %4571 = dma.vmem_to_hbm [thread:$0]  %s4566, 256, %s4564, [#allocation5], 128, 128, 8
        $region72: #{tpu_custom_call.1} parent=39 // pred_fallthru
          _
        // Predicated region
        $region73: #{tpu_custom_call.1} parent=39 // pred_check
          %p4572 = pneg %p179
        $region74: #{tpu_custom_call.1} parent=39 // pred_check_branch
          %4574 = sbr.rel (%p4572) target = $region76
        $region75: #{tpu_custom_call.1} parent=39 // pred_region
          %4575 = dma.done [#allocation5], 256
        $region76: #{tpu_custom_call.1} parent=39 // pred_fallthru
          _
      $region40: #{tpu_custom_call.1} parent=5 // pred_fallthru
        _
      %p4576 = scmp.le.s32.totalorder 2, %s19
      // Predicated region
      $region77: #{tpu_custom_call.1} parent=5 // pred_check
        %p4577 = pneg %p4576
      $region78: #{tpu_custom_call.1} parent=5 // pred_check_branch
        %4579 = sbr.rel (%p4577) target = $region80
      $region79: #{tpu_custom_call.1} parent=5 // pred_region
        %s4580 = ssub.s32 %s19, 2
      $region80: #{tpu_custom_call.1} parent=5 // pred_fallthru
        _
    $region6: #{tpu_custom_call.1} parent=1 // loop_footer
      %s23 = sadd.s32 1, %s19
    $region7: #{tpu_custom_call.1} parent=1 // loop_footer_branch
      %18 = sbr.rel target = $region3
    $region8: #{tpu_custom_call.1} parent=1 // loop_exit
      _
    %4581 = vsyncpa [#allocation4], 1
    %s4582 = scalar_lea.sflag [#allocation4], 1
    %4583 = vsyncpa %s4582, 1
    %4584 = vsyncpa [#allocation7], 1
    %s4585 = scalar_lea.sflag [#allocation7], 1
    %4586 = vsyncpa %s4585, 1
    %4587 = vsyncpa [#allocation10], 1
    %s4588 = scalar_lea.sflag [#allocation10], 1
    %4589 = vsyncpa %s4588, 1
    %4590 = vsyncpa [#allocation5], 1
    %s4591 = scalar_lea.sflag [#allocation5], 1
    %4592 = vsyncpa %s4591, 1

</llo_original>
